<compile_context>
chip_gen: v7x
topology: tpu7x:2x2x1
jax: 0.10.0
libtpu: 0.0.40
codegen_flags: <defaults>
</compile_context>

<pallas_src>
import functools
import math

import jax
import jax.numpy as jnp
from jax.experimental import pallas as pl
from jax.experimental.pallas import tpu as pltpu

# --------------------------------------------------------------------------------------
# Scaled-down configuration (graph structure identical to the PyTorch module)
# --------------------------------------------------------------------------------------
B = 2                       # batch
H_IN = W_IN = 32            # input spatial
INPUT_NC = 3
OUTPUT_NC = 3
NGF = 32
N_DOWN = 2
DIM = NGF * (2 ** N_DOWN)   # 128 (lane-dense; == 256 in the original)
N_BLOCKS = 9

MIX_DIM = 64                # mixer hidden dim
MIX_PATCH = 2               # patch size
MIX_IMAGE = H_IN // (2 ** N_DOWN)        # 8 (feature-map spatial size)
MIX_DEPTH = 2
MIX_TOKEN_DIM = 32
MIX_CHANNEL_DIM = 128
MIX_NP = (MIX_IMAGE // MIX_PATCH) ** 2   # 16 tokens
MIX_KP = MIX_PATCH * MIX_PATCH * DIM     # 512 per-patch features

ACT_NONE, ACT_RELU, ACT_TANH = 0, 1, 2

_PAR = pltpu.CompilerParams(dimension_semantics=("parallel",))


# --------------------------------------------------------------------------------------
# In-kernel helpers
# --------------------------------------------------------------------------------------
def _apply_act(x, act):
    if act == ACT_RELU:
        return jnp.maximum(x, 0.0)
    if act == ACT_TANH:
        return jnp.tanh(x)
    return x


def _gelu(x):
    # TODO(synk): tanh approximation; PyTorch nn.GELU defaults to the exact erf form.
    c = 0.7978845608028654
    return 0.5 * x * (1.0 + jnp.tanh(c * (x + 0.044715 * x * x * x)))


def _ln(x, g, b, eps=1e-5):
    m = jnp.mean(x, axis=-1, keepdims=True)
    v = jnp.mean(jnp.square(x - m), axis=-1, keepdims=True)
    return (x - m) * jax.lax.rsqrt(v + eps) * g + b


def _const_spec(arr):
    nd = arr.ndim
    return pl.BlockSpec(arr.shape, lambda bb, _nd=nd: (0,) * _nd)


def _pick_bm(M, target=256):
    upper = min(target, M)
    upper -= upper % 8
    bm = M
    for cand in range(upper, 7, -8):
        if M % cand == 0:
            bm = cand
            break
    if bm == M and M % 16 == 0:
        bm = M // 2            # guarantee >=2 grid steps (pipelining / 2nd TensorCore)
    return bm


# --------------------------------------------------------------------------------------
# Kernel 1: fully fused cascade conv block
#           conv3x3 -> BN -> ReLU -> reflect-pad -> conv3x3 -> BN, whole batch per step.
#           Each conv: in-kernel im2col slab (M=B*64, K=1152) -> single MXU matmul.
#           Grid over the 2 streams.
# --------------------------------------------------------------------------------------
def _convblock_kernel(x_ref, w1_ref, b1_ref, g1_ref, be1_ref,
                      w2_ref, b2_ref, g2_ref, be2_ref, o_ref, pad_ref, *, eps=1e-5):
    f32, bf16 = jnp.float32, jnp.bfloat16
    _, Bn, Hp, Wp, C = x_ref.shape
    oh, ow = Hp - 2, Wp - 2
    M = Bn * oh * ow

    def im2col_from(slicer):
        cols = []
        for di in range(3):
            for dj in range(3):
                cols.append(slicer(di, dj))              # (Bn, oh, ow, C) bf16
        slab = jnp.concatenate(cols, axis=-1)            # (Bn, oh, ow, 9C)  K=1152
        return slab.reshape(M, 9 * C)

    def batchnorm(acc, gamma, beta):
        mean = jnp.mean(acc, axis=0, keepdims=True)
        var = jnp.maximum(jnp.mean(acc * acc, axis=0, keepdims=True) - mean * mean, 0.0)
        scale = gamma * jax.lax.rsqrt(var + eps)
        return acc * scale + (beta - mean * scale)

    # ---- conv1 + BN1 + ReLU (input already reflect-padded by the host glue) ----
    a1 = im2col_from(lambda di, dj: x_ref[0, :, di:di + oh, dj:dj + ow, :])
    acc1 = jnp.dot(a1, w1_ref[0], preferred_element_type=f32) + b1_ref[0]
    h1 = jnp.maximum(batchnorm(acc1, g1_ref[0], be1_ref[0]), 0.0)

    # ---- in-kernel reflect pad (1 px) of h1 into a VMEM scratch ----
    pad_ref[:, 1:oh + 1, 1:ow + 1, :] = h1.astype(bf16).reshape(Bn, oh, ow, C)
    pad_ref[:, 0:1, 1:ow + 1, :] = pad_ref[:, 2:3, 1:ow + 1, :]
    pad_ref[:, oh + 1:oh + 2, 1:ow + 1, :] = pad_ref[:, oh - 1:oh, 1:ow + 1, :]
    pad_ref[:, :, 0:1, :] = pad_ref[:, :, 2:3, :]
    pad_ref[:, :, ow + 1:ow + 2, :] = pad_ref[:, :, ow - 1:ow, :]

    # ---- conv2 + BN2 (no ReLU) ----
    a2 = im2col_from(lambda di, dj: pad_ref[:, di:di + oh, dj:dj + ow, :])
    acc2 = jnp.dot(a2, w2_ref[0], preferred_element_type=f32) + b2_ref[0]
    out = batchnorm(acc2, g2_ref[0], be2_ref[0])
    o_ref[0] = out.astype(o_ref.dtype)


def conv_block_pair(blkp, xs):
    """xs: (2, B, Hp, Wp, C) bf16, reflect-padded conv-block inputs for both streams.
    Returns (2, B, H, W, C) bf16 block outputs (BN2 applied, raster order)."""
    _, Bn, Hp, Wp, C = xs.shape
    oh, ow = Hp - 2, Wp - 2
    M = Bn * oh * ow
    vec_spec = pl.BlockSpec((1, 1, C), lambda s: (s, 0, 0))
    w_spec = pl.BlockSpec((1, 9 * C, C), lambda s: (s, 0, 0))
    in_specs = [pl.BlockSpec((1, Bn, Hp, Wp, C), lambda s: (s, 0, 0, 0, 0)),
                w_spec, vec_spec, vec_spec, vec_spec,
                w_spec, vec_spec, vec_spec, vec_spec]
    out = pl.pallas_call(
        _convblock_kernel,
        grid=(2,),
        in_specs=in_specs,
        out_specs=pl.BlockSpec((1, M, C), lambda s: (s, 0, 0)),
        out_shape=jax.ShapeDtypeStruct((2, M, C), jnp.bfloat16),
        scratch_shapes=[pltpu.VMEM((Bn, Hp, Wp, C), jnp.bfloat16)],
        compiler_params=_PAR,
    )(xs, blkp['w1'], blkp['b1'], blkp['g1'], blkp['be1'],
      blkp['w2'], blkp['b2'], blkp['g2'], blkp['be2'])
    return out.reshape(2, Bn, oh, ow, C)


# --------------------------------------------------------------------------------------
# Kernel 2: fused MLP-Mixer + block tail
#           embed -> depth x (token mix, channel mix) -> head -> gated residual ->
#           1x1 fusion conv (single K=256 matmul per pixel group).  Grid over batch.
# --------------------------------------------------------------------------------------
def _mixer_tail_kernel(p1_ref, p2_ref, prev_ref,
                       ew1_ref, ew2_ref, eb_ref,
                       ln1g_ref, ln1b_ref, tw1_ref, tb1_ref, tw2_ref, tb2_ref,
                       ln2g_ref, ln2b_ref, cw1_ref, cb1_ref, cw2_ref, cb2_ref,
                       lnog_ref, lnob_ref, ow_ref, ob_ref,
                       w1x1_ref, b1x1_ref,
                       out1_ref, out2_ref, *, depth, C):
    f32, bf16 = jnp.float32, jnp.bfloat16
    p1 = p1_ref[0]                                   # (np, Kp) bf16
    p2 = p2_ref[0]
    prev = prev_ref[0]

    tok = (jnp.dot(p1, ew1_ref[...], preferred_element_type=f32)
           + jnp.dot(p2, ew2_ref[...], preferred_element_type=f32)
           + eb_ref[...])                            # (np, dim) f32
    for l in range(depth):
        # ---- token mixing (contract the patch axis; no transposes) ----
        y = _ln(tok, ln1g_ref[l], ln1b_ref[l])
        h = jax.lax.dot_general(y.astype(bf16), tw1_ref[l],
                                (((0,), (0,)), ((), ())),
                                preferred_element_type=f32) + tb1_ref[l]   # (dim, td)
        h = _gelu(h)
        z = jax.lax.dot_general(tw2_ref[l], h.astype(bf16),
                                (((0,), (1,)), ((), ())),
                                preferred_element_type=f32) + tb2_ref[l]   # (np, dim)
        tok = tok + z
        # ---- channel mixing ----
        y = _ln(tok, ln2g_ref[l], ln2b_ref[l])
        h = _gelu(jnp.dot(y.astype(bf16), cw1_ref[l],
                          preferred_element_type=f32) + cb1_ref[l])
        tok = tok + jnp.dot(h.astype(bf16), cw2_ref[l],
                            preferred_element_type=f32) + cb2_ref[l]
    y = _ln(tok, lnog_ref[...], lnob_ref[...])
    mix = jnp.dot(y.astype(bf16), ow_ref[...], preferred_element_type=f32) + ob_ref[...]

    # ---- block tail: gated residual + 1x1 fusion conv (no concat-weight split) ----
    out2 = prev.astype(f32) + jax.nn.sigmoid(mix) * p2.astype(f32)         # (np, Kp)
    Kp = out2.shape[-1]
    npat = Kp // C                                    # pixels per patch
    w1x1 = w1x1_ref[...]                              # (2C, C) bf16
    b1x1 = b1x1_ref[...]                              # (1, C)  f32
    groups = []
    for g in range(npat):
        mg = mix[:, g * C:(g + 1) * C].astype(bf16)
        og = out2[:, g * C:(g + 1) * C].astype(bf16)
        cat = jnp.concatenate([mg, og], axis=-1)      # (np, 2C) -> K=256 matmul
        groups.append(jnp.dot(cat, w1x1, preferred_element_type=f32) + b1x1)
    out1 = jnp.concatenate(groups, axis=-1)           # (np, Kp)
    out1_ref[0] = out1.astype(out1_ref.dtype)
    out2_ref[0] = out2.astype(out2_ref.dtype)


def mixer_tail_apply(mp, conv1x1_p, p1, p2, prev):
    Bx, np_, Kp = p1.shape
    C = DIM
    w1x1, b1x1 = conv1x1_p
    weights = [mp['embed_w1'], mp['embed_w2'], mp['embed_b'],
               mp['ln1_g'], mp['ln1_b'], mp['tok_w1'], mp['tok_b1'],
               mp['tok_w2'], mp['tok_b2'],
               mp['ln2_g'], mp['ln2_b'], mp['ch_w1'], mp['ch_b1'],
               mp['ch_w2'], mp['ch_b2'],
               mp['lno_g'], mp['lno_b'], mp['out_w'], mp['out_b'],
               w1x1, b1x1.reshape(1, C)]
    act_spec = pl.BlockSpec((1, np_, Kp), lambda bb: (bb, 0, 0))
    in_specs = [act_spec] * 3 + [_const_spec(w) for w in weights]
    out1, out2 = pl.pallas_call(
        functools.partial(_mixer_tail_kernel, depth=MIX_DEPTH, C=C),
        grid=(Bx,),
        in_specs=in_specs,
        out_specs=[act_spec, act_spec],
        out_shape=(jax.ShapeDtypeStruct((Bx, np_, Kp), jnp.bfloat16),
                   jax.ShapeDtypeStruct((Bx, np_, Kp), jnp.bfloat16)),
        compiler_params=_PAR,
    )(p1, p2, prev, *weights)
    return out1, out2


# --------------------------------------------------------------------------------------
# Kernel 3: tiled matmul + bias (+ optional BN stats / output activation)
#           Used for stem 7x7, stride-2 downsamples, transposed convs, bothFea.
#           Grid over M row-tiles (target 256).
# --------------------------------------------------------------------------------------
def _matmul_kernel(a_ref, w_ref, b_ref, *out_refs, act, with_stats):
    o_ref = out_refs[0]
    acc = jnp.dot(a_ref[...], w_ref[...], preferred_element_type=jnp.float32)
    acc = acc + b_ref[...]
    if with_stats:
        st_ref = out_refs[1]
        s = jnp.sum(acc, axis=0, keepdims=True)
        ss = jnp.sum(acc * acc, axis=0, keepdims=True)
        st_ref[0] = jnp.concatenate([s, ss], axis=0)        # single (2, N) store
    o_ref[...] = _apply_act(acc, act).astype(o_ref.dtype)


def matmul_apply(a, w, b, *, act=ACT_NONE, with_stats=False):
    M, K = a.shape
    _, N = w.shape
    bm = _pick_bm(M, 256)
    assert M % bm == 0, "bm must divide M (stats correctness: no padded rows)"
    gm = M // bm
    kern = functools.partial(_matmul_kernel, act=act, with_stats=with_stats)
    in_specs = [pl.BlockSpec((bm, K), lambda i: (i, 0)),
                pl.BlockSpec((K, N), lambda i: (0, 0)),
                pl.BlockSpec((1, N), lambda i: (0, 0))]
    out_spec_main = pl.BlockSpec((bm, N), lambda i: (i, 0))
    out_shape_main = jax.ShapeDtypeStruct((M, N), jnp.bfloat16)
    if with_stats:
        out_specs = [out_spec_main, pl.BlockSpec((1, 2, N), lambda i: (i, 0, 0))]
        out_shape = (out_shape_main, jax.ShapeDtypeStruct((gm, 2, N), jnp.float32))
    else:
        out_specs = out_spec_main
        out_shape = out_shape_main
    return pl.pallas_call(kern, grid=(gm,), in_specs=in_specs, out_specs=out_specs,
                          out_shape=out_shape, compiler_params=_PAR,
                          )(a, w, b.reshape(1, N))


# --------------------------------------------------------------------------------------
# Kernel 4: materialize a folded BN affine (+ReLU), lane-dense.
#           Activations are flattened to (rows, 128) so C=32/64 tensors still use full
#           lanes; grid over row tiles.
# --------------------------------------------------------------------------------------
def _affine_kernel(x_ref, sc_ref, sh_ref, o_ref, *, relu):
    y = x_ref[...].astype(jnp.float32) * sc_ref[...] + sh_ref[...]
    if relu:
        y = jnp.maximum(y, 0.0)
    o_ref[...] = y.astype(o_ref.dtype)


def affine_apply(x, scale, shift, *, relu):
    Bx, H, W, C = x.shape
    total = Bx * H * W * C
    assert total % 128 == 0 and 128 % C == 0
    rep = 128 // C
    M = total // 128
    sc = jnp.tile(scale.astype(jnp.float32), rep).reshape(1, 128)
    sh = jnp.tile(shift.astype(jnp.float32), rep).reshape(1, 128)
    bm = _pick_bm(M, 256)
    y = pl.pallas_call(
        functools.partial(_affine_kernel, relu=relu),
        grid=(M // bm,),
        in_specs=[pl.BlockSpec((bm, 128), lambda i: (i, 0)),
                  pl.BlockSpec((1, 128), lambda i: (0, 0)),
                  pl.BlockSpec((1, 128), lambda i: (0, 0))],
        out_specs=pl.BlockSpec((bm, 128), lambda i: (i, 0)),
        out_shape=jax.ShapeDtypeStruct((M, 128), jnp.bfloat16),
        compiler_params=_PAR,
    )(x.reshape(M, 128), sc, sh)
    return y.reshape(Bx, H, W, C)


# --------------------------------------------------------------------------------------
# JAX glue helpers (padding / dilation / im2col / BN folding / patch layout)
# --------------------------------------------------------------------------------------
def _im2col(x, kh, kw, stride):
    Bx, H, W, C = x.shape
    oh = (H - kh) // stride + 1
    ow = (W - kw) // stride + 1
    cols = []
    for i in range(kh):
        for j in range(kw):
            cols.append(x[:, i:i + (oh - 1) * stride + 1:stride,
                          j:j + (ow - 1) * stride + 1:stride, :])
    patches = jnp.stack(cols, axis=3)
    return patches.reshape(Bx, oh, ow, kh * kw * C), oh, ow


def _dilate_pad(x, stride, padding, output_padding, k):
    Bx, H, W, C = x.shape
    Hd, Wd = (H - 1) * stride + 1, (W - 1) * stride + 1
    xd = jnp.zeros((Bx, Hd, Wd, C), x.dtype).at[:, ::stride, ::stride, :].set(x)
    p_lo = k - 1 - padding
    p_hi = p_lo + output_padding
    return jnp.pad(xd, ((0, 0), (p_lo, p_hi), (p_lo, p_hi), (0, 0)))


def bn_fold(stats, count, bn, eps=1e-5):
    gamma, beta = bn
    s = jnp.sum(stats[:, 0, :], axis=0)
    ss = jnp.sum(stats[:, 1, :], axis=0)
    mean = s / count
    var = jnp.maximum(ss / count - mean * mean, 0.0)
    scale = gamma * jax.lax.rsqrt(var + eps)
    shift = beta - mean * scale
    return scale, shift


def patchify(x):
    Bx, H, W, C = x.shape
    P = MIX_PATCH
    hp, wp = H // P, W // P
    t = x.reshape(Bx, hp, P, wp, P, C).transpose(0, 1, 3, 2, 4, 5)
    return t.reshape(Bx, hp * wp, P * P * C)


def unpatchify(t, H=MIX_IMAGE, W=MIX_IMAGE, C=DIM):
    Bx = t.shape[0]
    P = MIX_PATCH
    hp, wp = H // P, W // P
    x = t.reshape(Bx, hp, wp, P, P, C).transpose(0, 1, 3, 2, 4, 5)
    return x.reshape(Bx, H, W, C)


# --------------------------------------------------------------------------------------
# Parameter init (deterministic)
# --------------------------------------------------------------------------------------
class KeyGen:
    def __init__(self, seed):
        self._key = jax.random.PRNGKey(seed)

    def __call__(self):
        self._key, sub = jax.random.split(self._key)
        return sub


def _randn(kg, shape, scale, dtype):
    return (scale * jax.random.normal(kg(), shape, jnp.float32)).astype(dtype)


def init_conv2d(kg, kh, kw, cin, cout):
    w = _randn(kg, (kh * kw * cin, cout), 1.0 / math.sqrt(kh * kw * cin), jnp.bfloat16)
    b = _randn(kg, (cout,), 0.01, jnp.float32)
    return w, b


def init_bn(kg, c):
    return (1.0 + _randn(kg, (c,), 0.05, jnp.float32),
            _randn(kg, (c,), 0.05, jnp.float32))


def init_down(kg):
    p = {}
    p['c7_w'], p['c7_b'] = init_conv2d(kg, 7, 7, INPUT_NC, NGF)
    p['bn7'] = init_bn(kg, NGF)
    ch = NGF
    for i in range(N_DOWN):
        p[f'cd{i}_w'], p[f'cd{i}_b'] = init_conv2d(kg, 3, 3, ch, ch * 2)
        p[f'bnd{i}'] = init_bn(kg, ch * 2)
        ch *= 2
    return p


def init_conv_block_stream(kg):
    w1, b1 = init_conv2d(kg, 3, 3, DIM, DIM)
    w2, b2 = init_conv2d(kg, 3, 3, DIM, DIM)
    return dict(w1=w1, b1=b1, bn1=init_bn(kg, DIM), w2=w2, b2=b2, bn2=init_bn(kg, DIM))


def stack_conv_pair(s_a, s_b):
    vec = lambda v: v.reshape(1, -1).astype(jnp.float32)
    return {
        'w1': jnp.stack([s_a['w1'], s_b['w1']]),
        'b1': jnp.stack([vec(s_a['b1']), vec(s_b['b1'])]),
        'g1': jnp.stack([vec(s_a['bn1'][0]), vec(s_b['bn1'][0])]),
        'be1': jnp.stack([vec(s_a['bn1'][1]), vec(s_b['bn1'][1])]),
        'w2': jnp.stack([s_a['w2'], s_b['w2']]),
        'b2': jnp.stack([vec(s_a['b2']), vec(s_b['b2'])]),
        'g2': jnp.stack([vec(s_a['bn2'][0]), vec(s_b['bn2'][0])]),
        'be2': jnp.stack([vec(s_a['bn2'][1]), vec(s_b['bn2'][1])]),
    }


def init_mixer(kg):
    L = MIX_DEPTH
    np_, Kp = MIX_NP, MIX_KP
    d, td, cd = MIX_DIM, MIX_TOKEN_DIM, MIX_CHANNEL_DIM

    def w(shape, fan_in):
        return _randn(kg, shape, 1.0 / math.sqrt(fan_in), jnp.bfloat16)

    def bias(shape):
        return _randn(kg, shape, 0.01, jnp.float32)

    def ln(shape):
        return (1.0 + _randn(kg, shape, 0.05, jnp.float32),
                _randn(kg, shape, 0.05, jnp.float32))

    p = {}
    p['embed_w1'] = w((Kp, d), 2 * Kp)
    p['embed_w2'] = w((Kp, d), 2 * Kp)
    p['embed_b'] = bias((1, d))
    p['ln1_g'], p['ln1_b'] = ln((L, 1, d))
    p['tok_w1'] = w((L, np_, td), np_)
    p['tok_b1'] = bias((L, 1, td))
    p['tok_w2'] = w((L, td, np_), td)
    p['tok_b2'] = bias((L, np_, 1))
    p['ln2_g'], p['ln2_b'] = ln((L, 1, d))
    p['ch_w1'] = w((L, d, cd), d)
    p['ch_b1'] = bias((L, 1, cd))
    p['ch_w2'] = w((L, cd, d), cd)
    p['ch_b2'] = bias((L, 1, d))
    p['lno_g'], p['lno_b'] = ln((1, d))
    p['out_w'] = w((d, Kp), d)
    p['out_b'] = bias((1, Kp))
    return p


def init_up(kg):
    p = {}
    ch = DIM
    for i in range(N_DOWN):
        p[f'ct{i}_w'], p[f'ct{i}_b'] = init_conv2d(kg, 3, 3, ch, ch // 2)
        p[f'bnu{i}'] = init_bn(kg, ch // 2)
        ch //= 2
    p['c7_w'], p['c7_b'] = init_conv2d(kg, 7, 7, NGF, OUTPUT_NC)
    return p


def init_params(seed=1234):
    kg = KeyGen(seed)
    params = {}
    params['down1'] = init_down(kg)
    params['down2'] = init_down(kg)
    # streams 1..18 (stream 2 is created but unused, matching the PyTorch module)
    streams = [init_conv_block_stream(kg) for _ in range(18)]
    blocks = [stack_conv_pair(streams[0], streams[0])]          # block 1 shares stream1
    for bi in range(1, N_BLOCKS):
        blocks.append(stack_conv_pair(streams[2 * bi], streams[2 * bi + 1]))
    params['blocks'] = blocks
    params['mixers'] = [init_mixer(kg) for _ in range(N_BLOCKS)]
    conv1x1 = []
    for _ in range(N_BLOCKS):
        w = _randn(kg, (2 * DIM, DIM), 1.0 / math.sqrt(2 * DIM), jnp.bfloat16)
        b = _randn(kg, (DIM,), 0.01, jnp.float32)
        conv1x1.append((w, b))
    params['conv1x1'] = conv1x1
    params['both_fea'] = init_conv2d(kg, 2, 2, DIM, DIM // 2)
    params['up1'] = init_up(kg)
    params['up2'] = init_up(kg)
    return params


# --------------------------------------------------------------------------------------
# Model pieces (jitted at the mid level; cached across the 9 cascade blocks / 2 streams)
# --------------------------------------------------------------------------------------
@jax.jit
def stream_down_apply(p, x):
    # ReflectPad(3) -> Conv7 -> BN -> ReLU -> [Conv3 s2 p1 -> BN -> ReLU] x 2
    Bx = x.shape[0]
    xp = jnp.pad(x, ((0, 0), (3, 3), (3, 3), (0, 0)), mode='reflect')
    cols, oh, ow = _im2col(xp, 7, 7, 1)
    raw, st = matmul_apply(cols.reshape(Bx * oh * ow, -1), p['c7_w'], p['c7_b'],
                           with_stats=True)
    sc, sh = bn_fold(st, Bx * oh * ow, p['bn7'])
    h = affine_apply(raw.reshape(Bx, oh, ow, NGF), sc, sh, relu=True)
    for i in range(N_DOWN):
        hp = jnp.pad(h, ((0, 0), (1, 1), (1, 1), (0, 0)))          # zero pad, stride-2
        cols, oh, ow = _im2col(hp, 3, 3, 2)
        cin = h.shape[-1]
        cout = p[f'cd{i}_w'].shape[1]
        raw2d, st = matmul_apply(cols.reshape(Bx * oh * ow, 9 * cin), p[f'cd{i}_w'],
                                 p[f'cd{i}_b'], with_stats=True)
        sc, sh = bn_fold(st, Bx * oh * ow, p[f'bnd{i}'])
        h = affine_apply(raw2d.reshape(Bx, oh, ow, cout), sc, sh, relu=True)
    return h


@jax.jit
def cascade_block_apply(blkp, mixer_p, conv1x1_p, out1, out2):
    pad = lambda t: jnp.pad(t, ((0, 0), (1, 1), (1, 1), (0, 0)), mode='reflect')
    xs = jnp.stack([pad(out1), pad(out2)])                        # (2, B, 10, 10, 128)
    blk = conv_block_pair(blkp, xs)                               # (2, B, 8, 8, 128)
    p1, p2 = patchify(blk[0]), patchify(blk[1])                   # (B, 16, 512)
    prev = patchify(out2)
    o1p, o2p = mixer_tail_apply(mixer_p, conv1x1_p, p1, p2, prev)
    return unpatchify(o1p), unpatchify(o2p)


@jax.jit
def stream_up_apply(p, x):
    # [ConvT3 s2 p1 op1 -> BN -> ReLU] x 2 -> ReflectPad(3) -> Conv7 -> Tanh
    Bx = x.shape[0]
    h = x
    for i in range(N_DOWN):
        hd = _dilate_pad(h, 2, 1, 1, 3)
        cols, oh, ow = _im2col(hd, 3, 3, 1)
        cin = h.shape[-1]
        cout = p[f'ct{i}_w'].shape[1]
        raw2d, st = matmul_apply(cols.reshape(Bx * oh * ow, 9 * cin), p[f'ct{i}_w'],
                                 p[f'ct{i}_b'], with_stats=True)
        sc, sh = bn_fold(st, Bx * oh * ow, p[f'bnu{i}'])
        h = affine_apply(raw2d.reshape(Bx, oh, ow, cout), sc, sh, relu=True)
    hp = jnp.pad(h, ((0, 0), (3, 3), (3, 3), (0, 0)), mode='reflect')
    cols, oh, ow = _im2col(hp, 7, 7, 1)
    out = matmul_apply(cols.reshape(Bx * oh * ow, -1), p['c7_w'], p['c7_b'],
                       act=ACT_TANH, with_stats=False)
    return out.reshape(Bx, oh, ow, OUTPUT_NC)


@jax.jit
def both_fea_apply(p, x):
    w, b = p
    Bx = x.shape[0]
    hd = _dilate_pad(x, 2, 0, 0, 2)
    cols, oh, ow = _im2col(hd, 2, 2, 1)
    out = matmul_apply(cols.reshape(Bx * oh * ow, 4 * DIM), w, b, with_stats=False)
    return out.reshape(Bx, oh, ow, DIM // 2)


def cascade_mixer_forward(params, x1_nchw, x2_nchw):
    # NCHW f32 interface -> NHWC bf16 internal
    x1 = jnp.transpose(x1_nchw, (0, 2, 3, 1)).astype(jnp.bfloat16)
    x2 = jnp.transpose(x2_nchw, (0, 2, 3, 1)).astype(jnp.bfloat16)

    out1 = stream_down_apply(params['down1'], x1)   # x1_out
    out2 = stream_down_apply(params['down2'], x2)   # x2_out

    for bi in range(N_BLOCKS):
        out1, out2 = cascade_block_apply(params['blocks'][bi], params['mixers'][bi],
                                         params['conv1x1'][bi], out1, out2)

    both_feature = both_fea_apply(params['both_fea'], out2)
    out_seg = stream_up_apply(params['up1'], out1)
    out_img = stream_up_apply(params['up2'], out2)

    to_nchw = lambda t: jnp.transpose(t, (0, 3, 1, 2)).astype(jnp.float32)
    return to_nchw(both_feature), to_nchw(out_seg), to_nchw(out_img)


# --------------------------------------------------------------------------------------
if __name__ == "__main__":
    params = init_params(seed=1234)

    key = jax.random.PRNGKey(0)
    k1, k2 = jax.random.split(key)
    x1 = jax.random.normal(k1, (B, INPUT_NC, H_IN, W_IN), jnp.float32)
    x2 = jax.random.normal(k2, (B, INPUT_NC, H_IN, W_IN), jnp.float32)

    both_feature, out_seg, out_img = cascade_mixer_forward(params, x1, x2)
    jax.block_until_ready((both_feature, out_seg, out_img))

    assert both_feature.shape == (B, DIM // 2, 2 * MIX_IMAGE, 2 * MIX_IMAGE)
    assert out_seg.shape == (B, OUTPUT_NC, H_IN, W_IN)
    assert out_img.shape == (B, OUTPUT_NC, H_IN, W_IN)
    assert all(bool(jnp.all(jnp.isfinite(t))) for t in (both_feature, out_seg, out_img))

    print("KERNEL_OK")
</pallas_src>

<mosaic_0001>
module attributes {stable_mosaic.version = 11 : i64} {
  func.func @_matmul_kernel(%arg0: i32, %arg1: memref<256x147xbf16, #tpu.memory_space<vmem>>, %arg2: memref<147x32xbf16, #tpu.memory_space<vmem>>, %arg3: memref<1x32xf32, #tpu.memory_space<vmem>>, %arg4: memref<256x32xbf16, #tpu.memory_space<vmem>>, %arg5: memref<1x2x32xf32, #tpu.memory_space<vmem>>) attributes {dimension_semantics = [#tpu.dimension_semantics<parallel>], iteration_bounds = array<i64: 8>, scalar_prefetch = 0 : i64, scratch_operands = 0 : i64, tpu.core_type = #tpu.core_type<tc>, window_params = [{transform_indices = @transform_0, window_bounds = array<i64: 256, 147>}, {pipeline_mode = #tpu.pipeline_mode<synchronous>, transform_indices = @transform_1, window_bounds = array<i64: 147, 32>}, {pipeline_mode = #tpu.pipeline_mode<synchronous>, transform_indices = @transform_2, window_bounds = array<i64: 1, 32>}, {transform_indices = @transform_3, window_bounds = array<i64: 256, 32>}, {transform_indices = @transform_4, window_bounds = array<i64: 1, 2, 32>}]} {
    %c0 = arith.constant 0 : index
    %c0_0 = arith.constant 0 : index
    %0 = vector.load %arg1[%c0, %c0_0] : memref<256x147xbf16, #tpu.memory_space<vmem>>, vector<256x147xbf16>
    %c0_1 = arith.constant 0 : index
    %c0_2 = arith.constant 0 : index
    %1 = vector.load %arg2[%c0_1, %c0_2] : memref<147x32xbf16, #tpu.memory_space<vmem>>, vector<147x32xbf16>
    %cst = arith.constant dense<0.000000e+00> : vector<256x32xf32>
    %2 = tpu.matmul %0, %1, %cst {dimension_numbers = #tpu.dot_dimension_numbers<[1], [0], [0], [1], [0, 0, 1, 1], [], []>} : vector<256x147xbf16>, vector<147x32xbf16>, vector<256x32xf32> -> vector<256x32xf32>
    %c0_3 = arith.constant 0 : index
    %c0_4 = arith.constant 0 : index
    %3 = vector.load %arg3[%c0_3, %c0_4] : memref<1x32xf32, #tpu.memory_space<vmem>>, vector<1x32xf32>
    %4 = vector.broadcast %3 : vector<1x32xf32> to vector<256x32xf32>
    %5 = arith.addf %2, %4 : vector<256x32xf32>
    %cst_5 = arith.constant dense<0.000000e+00> : vector<32xf32>
    %6 = vector.multi_reduction <add>, %5, %cst_5 [0] : vector<256x32xf32> to vector<32xf32>
    %7 = vector.shape_cast %6 : vector<32xf32> to vector<1x32xf32>
    %8 = arith.mulf %5, %5 : vector<256x32xf32>
    %cst_6 = arith.constant dense<0.000000e+00> : vector<32xf32>
    %9 = vector.multi_reduction <add>, %8, %cst_6 [0] : vector<256x32xf32> to vector<32xf32>
    %10 = vector.shape_cast %9 : vector<32xf32> to vector<1x32xf32>
    %11 = tpu.concatenate %7, %10 in 0 : vector<1x32xf32>, vector<1x32xf32> -> vector<2x32xf32>
    %c0_7 = arith.constant 0 : index
    %c0_8 = arith.constant 0 : index
    %c0_9 = arith.constant 0 : index
    %12 = vector.load %arg5[%c0_7, %c0_8, %c0_9] : memref<1x2x32xf32, #tpu.memory_space<vmem>>, vector<1x2x32xf32>
    %13 = vector.shape_cast %12 : vector<1x2x32xf32> to vector<2x32xf32>
    %14 = vector.shape_cast %11 : vector<2x32xf32> to vector<1x2x32xf32>
    tpu.vector_store %arg5[%c0_7, %c0_8, %c0_9], %14 {strides = array<i32>} : memref<1x2x32xf32, #tpu.memory_space<vmem>>, vector<1x2x32xf32>,
    %15 = arith.truncf %5 : vector<256x32xf32> to vector<256x32xbf16>
    %c0_10 = arith.constant 0 : index
    %c0_11 = arith.constant 0 : index
    %16 = vector.load %arg4[%c0_10, %c0_11] : memref<256x32xbf16, #tpu.memory_space<vmem>>, vector<256x32xbf16>
    tpu.vector_store %arg4[%c0_10, %c0_11], %15 {strides = array<i32>} : memref<256x32xbf16, #tpu.memory_space<vmem>>, vector<256x32xbf16>,
    return
  }
  func.func @transform_0(%arg0: i32) -> (i32, i32) {
    %c0_i32 = arith.constant 0 : i32
    %c0_i32_0 = arith.constant 0 : i32
    return %arg0, %c0_i32 : i32, i32
  }
  func.func @transform_1(%arg0: i32) -> (i32, i32) {
    %c0_i32 = arith.constant 0 : i32
    %c0_i32_0 = arith.constant 0 : i32
    %c0_i32_1 = arith.constant 0 : i32
    return %c0_i32, %c0_i32_0 : i32, i32
  }
  func.func @transform_2(%arg0: i32) -> (i32, i32) {
    %c0_i32 = arith.constant 0 : i32
    %c0_i32_0 = arith.constant 0 : i32
    %c0_i32_1 = arith.constant 0 : i32
    return %c0_i32, %c0_i32_0 : i32, i32
  }
  func.func @transform_3(%arg0: i32) -> (i32, i32) {
    %c0_i32 = arith.constant 0 : i32
    %c0_i32_0 = arith.constant 0 : i32
    return %arg0, %c0_i32 : i32, i32
  }
  func.func @transform_4(%arg0: i32) -> (i32, i32, i32) {
    %c0_i32 = arith.constant 0 : i32
    %c0_i32_0 = arith.constant 0 : i32
    %c0_i32_1 = arith.constant 0 : i32
    return %arg0, %c0_i32, %c0_i32_0 : i32, i32, i32
  }
}

module attributes {stable_mosaic.version = 11 : i64} {
  func.func @_affine_kernel(%arg0: i32, %arg1: memref<256x128xbf16, #tpu.memory_space<vmem>>, %arg2: memref<1x128xf32, #tpu.memory_space<vmem>>, %arg3: memref<1x128xf32, #tpu.memory_space<vmem>>, %arg4: memref<256x128xbf16, #tpu.memory_space<vmem>>) attributes {dimension_semantics = [#tpu.dimension_semantics<parallel>], iteration_bounds = array<i64: 2>, scalar_prefetch = 0 : i64, scratch_operands = 0 : i64, tpu.core_type = #tpu.core_type<tc>, window_params = [{transform_indices = @transform_0, window_bounds = array<i64: 256, 128>}, {pipeline_mode = #tpu.pipeline_mode<synchronous>, transform_indices = @transform_1, window_bounds = array<i64: 1, 128>}, {pipeline_mode = #tpu.pipeline_mode<synchronous>, transform_indices = @transform_2, window_bounds = array<i64: 1, 128>}, {transform_indices = @transform_3, window_bounds = array<i64: 256, 128>}]} {
    %c0 = arith.constant 0 : index
    %c0_0 = arith.constant 0 : index
    %0 = vector.load %arg1[%c0, %c0_0] : memref<256x128xbf16, #tpu.memory_space<vmem>>, vector<256x128xbf16>
    %1 = arith.extf %0 : vector<256x128xbf16> to vector<256x128xf32>
    %c0_1 = arith.constant 0 : index
    %c0_2 = arith.constant 0 : index
    %2 = vector.load %arg2[%c0_1, %c0_2] : memref<1x128xf32, #tpu.memory_space<vmem>>, vector<1x128xf32>
    %3 = vector.broadcast %2 : vector<1x128xf32> to vector<256x128xf32>
    %4 = arith.mulf %1, %3 : vector<256x128xf32>
    %c0_3 = arith.constant 0 : index
    %c0_4 = arith.constant 0 : index
    %5 = vector.load %arg3[%c0_3, %c0_4] : memref<1x128xf32, #tpu.memory_space<vmem>>, vector<1x128xf32>
    %6 = vector.broadcast %5 : vector<1x128xf32> to vector<256x128xf32>
    %7 = arith.addf %4, %6 : vector<256x128xf32>
    %cst = arith.constant 0.000000e+00 : f32
    %8 = vector.broadcast %cst : f32 to vector<256x128xf32>
    %9 = arith.maximumf %7, %8 : vector<256x128xf32>
    %10 = arith.truncf %9 : vector<256x128xf32> to vector<256x128xbf16>
    %c0_5 = arith.constant 0 : index
    %c0_6 = arith.constant 0 : index
    %11 = vector.load %arg4[%c0_5, %c0_6] : memref<256x128xbf16, #tpu.memory_space<vmem>>, vector<256x128xbf16>
    tpu.vector_store %arg4[%c0_5, %c0_6], %10 {strides = array<i32>} : memref<256x128xbf16, #tpu.memory_space<vmem>>, vector<256x128xbf16>,
    return
  }
  func.func @transform_0(%arg0: i32) -> (i32, i32) {
    %c0_i32 = arith.constant 0 : i32
    %c0_i32_0 = arith.constant 0 : i32
    return %arg0, %c0_i32 : i32, i32
  }
  func.func @transform_1(%arg0: i32) -> (i32, i32) {
    %c0_i32 = arith.constant 0 : i32
    %c0_i32_0 = arith.constant 0 : i32
    %c0_i32_1 = arith.constant 0 : i32
    return %c0_i32, %c0_i32_0 : i32, i32
  }
  func.func @transform_2(%arg0: i32) -> (i32, i32) {
    %c0_i32 = arith.constant 0 : i32
    %c0_i32_0 = arith.constant 0 : i32
    %c0_i32_1 = arith.constant 0 : i32
    return %c0_i32, %c0_i32_0 : i32, i32
  }
  func.func @transform_3(%arg0: i32) -> (i32, i32) {
    %c0_i32 = arith.constant 0 : i32
    %c0_i32_0 = arith.constant 0 : i32
    return %arg0, %c0_i32 : i32, i32
  }
}

module attributes {stable_mosaic.version = 11 : i64} {
  func.func @_matmul_kernel(%arg0: i32, %arg1: memref<256x288xbf16, #tpu.memory_space<vmem>>, %arg2: memref<288x64xbf16, #tpu.memory_space<vmem>>, %arg3: memref<1x64xf32, #tpu.memory_space<vmem>>, %arg4: memref<256x64xbf16, #tpu.memory_space<vmem>>, %arg5: memref<1x2x64xf32, #tpu.memory_space<vmem>>) attributes {dimension_semantics = [#tpu.dimension_semantics<parallel>], iteration_bounds = array<i64: 2>, scalar_prefetch = 0 : i64, scratch_operands = 0 : i64, tpu.core_type = #tpu.core_type<tc>, window_params = [{transform_indices = @transform_0, window_bounds = array<i64: 256, 288>}, {pipeline_mode = #tpu.pipeline_mode<synchronous>, transform_indices = @transform_1, window_bounds = array<i64: 288, 64>}, {pipeline_mode = #tpu.pipeline_mode<synchronous>, transform_indices = @transform_2, window_bounds = array<i64: 1, 64>}, {transform_indices = @transform_3, window_bounds = array<i64: 256, 64>}, {transform_indices = @transform_4, window_bounds = array<i64: 1, 2, 64>}]} {
    %c0 = arith.constant 0 : index
    %c0_0 = arith.constant 0 : index
    %0 = vector.load %arg1[%c0, %c0_0] : memref<256x288xbf16, #tpu.memory_space<vmem>>, vector<256x288xbf16>
    %c0_1 = arith.constant 0 : index
    %c0_2 = arith.constant 0 : index
    %1 = vector.load %arg2[%c0_1, %c0_2] : memref<288x64xbf16, #tpu.memory_space<vmem>>, vector<288x64xbf16>
    %cst = arith.constant dense<0.000000e+00> : vector<256x64xf32>
    %2 = tpu.matmul %0, %1, %cst {dimension_numbers = #tpu.dot_dimension_numbers<[1], [0], [0], [1], [0, 0, 1, 1], [], []>} : vector<256x288xbf16>, vector<288x64xbf16>, vector<256x64xf32> -> vector<256x64xf32>
    %c0_3 = arith.constant 0 : index
    %c0_4 = arith.constant 0 : index
    %3 = vector.load %arg3[%c0_3, %c0_4] : memref<1x64xf32, #tpu.memory_space<vmem>>, vector<1x64xf32>
    %4 = vector.broadcast %3 : vector<1x64xf32> to vector<256x64xf32>
    %5 = arith.addf %2, %4 : vector<256x64xf32>
    %cst_5 = arith.constant dense<0.000000e+00> : vector<64xf32>
    %6 = vector.multi_reduction <add>, %5, %cst_5 [0] : vector<256x64xf32> to vector<64xf32>
    %7 = vector.shape_cast %6 : vector<64xf32> to vector<1x64xf32>
    %8 = arith.mulf %5, %5 : vector<256x64xf32>
    %cst_6 = arith.constant dense<0.000000e+00> : vector<64xf32>
    %9 = vector.multi_reduction <add>, %8, %cst_6 [0] : vector<256x64xf32> to vector<64xf32>
    %10 = vector.shape_cast %9 : vector<64xf32> to vector<1x64xf32>
    %11 = tpu.concatenate %7, %10 in 0 : vector<1x64xf32>, vector<1x64xf32> -> vector<2x64xf32>
    %c0_7 = arith.constant 0 : index
    %c0_8 = arith.constant 0 : index
    %c0_9 = arith.constant 0 : index
    %12 = vector.load %arg5[%c0_7, %c0_8, %c0_9] : memref<1x2x64xf32, #tpu.memory_space<vmem>>, vector<1x2x64xf32>
    %13 = vector.shape_cast %12 : vector<1x2x64xf32> to vector<2x64xf32>
    %14 = vector.shape_cast %11 : vector<2x64xf32> to vector<1x2x64xf32>
    tpu.vector_store %arg5[%c0_7, %c0_8, %c0_9], %14 {strides = array<i32>} : memref<1x2x64xf32, #tpu.memory_space<vmem>>, vector<1x2x64xf32>,
    %15 = arith.truncf %5 : vector<256x64xf32> to vector<256x64xbf16>
    %c0_10 = arith.constant 0 : index
    %c0_11 = arith.constant 0 : index
    %16 = vector.load %arg4[%c0_10, %c0_11] : memref<256x64xbf16, #tpu.memory_space<vmem>>, vector<256x64xbf16>
    tpu.vector_store %arg4[%c0_10, %c0_11], %15 {strides = array<i32>} : memref<256x64xbf16, #tpu.memory_space<vmem>>, vector<256x64xbf16>,
    return
  }
  func.func @transform_0(%arg0: i32) -> (i32, i32) {
    %c0_i32 = arith.constant 0 : i32
    %c0_i32_0 = arith.constant 0 : i32
    return %arg0, %c0_i32 : i32, i32
  }
  func.func @transform_1(%arg0: i32) -> (i32, i32) {
    %c0_i32 = arith.constant 0 : i32
    %c0_i32_0 = arith.constant 0 : i32
    %c0_i32_1 = arith.constant 0 : i32
    return %c0_i32, %c0_i32_0 : i32, i32
  }
  func.func @transform_2(%arg0: i32) -> (i32, i32) {
    %c0_i32 = arith.constant 0 : i32
    %c0_i32_0 = arith.constant 0 : i32
    %c0_i32_1 = arith.constant 0 : i32
    return %c0_i32, %c0_i32_0 : i32, i32
  }
  func.func @transform_3(%arg0: i32) -> (i32, i32) {
    %c0_i32 = arith.constant 0 : i32
    %c0_i32_0 = arith.constant 0 : i32
    return %arg0, %c0_i32 : i32, i32
  }
  func.func @transform_4(%arg0: i32) -> (i32, i32, i32) {
    %c0_i32 = arith.constant 0 : i32
    %c0_i32_0 = arith.constant 0 : i32
    %c0_i32_1 = arith.constant 0 : i32
    return %arg0, %c0_i32, %c0_i32_0 : i32, i32, i32
  }
}

module attributes {stable_mosaic.version = 11 : i64} {
  func.func @_affine_kernel(%arg0: i32, %arg1: memref<128x128xbf16, #tpu.memory_space<vmem>>, %arg2: memref<1x128xf32, #tpu.memory_space<vmem>>, %arg3: memref<1x128xf32, #tpu.memory_space<vmem>>, %arg4: memref<128x128xbf16, #tpu.memory_space<vmem>>) attributes {dimension_semantics = [#tpu.dimension_semantics<parallel>], iteration_bounds = array<i64: 2>, scalar_prefetch = 0 : i64, scratch_operands = 0 : i64, tpu.core_type = #tpu.core_type<tc>, window_params = [{transform_indices = @transform_0, window_bounds = array<i64: 128, 128>}, {pipeline_mode = #tpu.pipeline_mode<synchronous>, transform_indices = @transform_1, window_bounds = array<i64: 1, 128>}, {pipeline_mode = #tpu.pipeline_mode<synchronous>, transform_indices = @transform_2, window_bounds = array<i64: 1, 128>}, {transform_indices = @transform_3, window_bounds = array<i64: 128, 128>}]} {
    %c0 = arith.constant 0 : index
    %c0_0 = arith.constant 0 : index
    %0 = vector.load %arg1[%c0, %c0_0] : memref<128x128xbf16, #tpu.memory_space<vmem>>, vector<128x128xbf16>
    %1 = arith.extf %0 : vector<128x128xbf16> to vector<128x128xf32>
    %c0_1 = arith.constant 0 : index
    %c0_2 = arith.constant 0 : index
    %2 = vector.load %arg2[%c0_1, %c0_2] : memref<1x128xf32, #tpu.memory_space<vmem>>, vector<1x128xf32>
    %3 = vector.broadcast %2 : vector<1x128xf32> to vector<128x128xf32>
    %4 = arith.mulf %1, %3 : vector<128x128xf32>
    %c0_3 = arith.constant 0 : index
    %c0_4 = arith.constant 0 : index
    %5 = vector.load %arg3[%c0_3, %c0_4] : memref<1x128xf32, #tpu.memory_space<vmem>>, vector<1x128xf32>
    %6 = vector.broadcast %5 : vector<1x128xf32> to vector<128x128xf32>
    %7 = arith.addf %4, %6 : vector<128x128xf32>
    %cst = arith.constant 0.000000e+00 : f32
    %8 = vector.broadcast %cst : f32 to vector<128x128xf32>
    %9 = arith.maximumf %7, %8 : vector<128x128xf32>
    %10 = arith.truncf %9 : vector<128x128xf32> to vector<128x128xbf16>
    %c0_5 = arith.constant 0 : index
    %c0_6 = arith.constant 0 : index
    %11 = vector.load %arg4[%c0_5, %c0_6] : memref<128x128xbf16, #tpu.memory_space<vmem>>, vector<128x128xbf16>
    tpu.vector_store %arg4[%c0_5, %c0_6], %10 {strides = array<i32>} : memref<128x128xbf16, #tpu.memory_space<vmem>>, vector<128x128xbf16>,
    return
  }
  func.func @transform_0(%arg0: i32) -> (i32, i32) {
    %c0_i32 = arith.constant 0 : i32
    %c0_i32_0 = arith.constant 0 : i32
    return %arg0, %c0_i32 : i32, i32
  }
  func.func @transform_1(%arg0: i32) -> (i32, i32) {
    %c0_i32 = arith.constant 0 : i32
    %c0_i32_0 = arith.constant 0 : i32
    %c0_i32_1 = arith.constant 0 : i32
    return %c0_i32, %c0_i32_0 : i32, i32
  }
  func.func @transform_2(%arg0: i32) -> (i32, i32) {
    %c0_i32 = arith.constant 0 : i32
    %c0_i32_0 = arith.constant 0 : i32
    %c0_i32_1 = arith.constant 0 : i32
    return %c0_i32, %c0_i32_0 : i32, i32
  }
  func.func @transform_3(%arg0: i32) -> (i32, i32) {
    %c0_i32 = arith.constant 0 : i32
    %c0_i32_0 = arith.constant 0 : i32
    return %arg0, %c0_i32 : i32, i32
  }
}

module attributes {stable_mosaic.version = 11 : i64} {
  func.func @_matmul_kernel(%arg0: i32, %arg1: memref<64x576xbf16, #tpu.memory_space<vmem>>, %arg2: memref<576x128xbf16, #tpu.memory_space<vmem>>, %arg3: memref<1x128xf32, #tpu.memory_space<vmem>>, %arg4: memref<64x128xbf16, #tpu.memory_space<vmem>>, %arg5: memref<1x2x128xf32, #tpu.memory_space<vmem>>) attributes {dimension_semantics = [#tpu.dimension_semantics<parallel>], iteration_bounds = array<i64: 2>, scalar_prefetch = 0 : i64, scratch_operands = 0 : i64, tpu.core_type = #tpu.core_type<tc>, window_params = [{transform_indices = @transform_0, window_bounds = array<i64: 64, 576>}, {pipeline_mode = #tpu.pipeline_mode<synchronous>, transform_indices = @transform_1, window_bounds = array<i64: 576, 128>}, {pipeline_mode = #tpu.pipeline_mode<synchronous>, transform_indices = @transform_2, window_bounds = array<i64: 1, 128>}, {transform_indices = @transform_3, window_bounds = array<i64: 64, 128>}, {transform_indices = @transform_4, window_bounds = array<i64: 1, 2, 128>}]} {
    %c0 = arith.constant 0 : index
    %c0_0 = arith.constant 0 : index
    %0 = vector.load %arg1[%c0, %c0_0] : memref<64x576xbf16, #tpu.memory_space<vmem>>, vector<64x576xbf16>
    %c0_1 = arith.constant 0 : index
    %c0_2 = arith.constant 0 : index
    %1 = vector.load %arg2[%c0_1, %c0_2] : memref<576x128xbf16, #tpu.memory_space<vmem>>, vector<576x128xbf16>
    %cst = arith.constant dense<0.000000e+00> : vector<64x128xf32>
    %2 = tpu.matmul %0, %1, %cst {dimension_numbers = #tpu.dot_dimension_numbers<[1], [0], [0], [1], [0, 0, 1, 1], [], []>} : vector<64x576xbf16>, vector<576x128xbf16>, vector<64x128xf32> -> vector<64x128xf32>
    %c0_3 = arith.constant 0 : index
    %c0_4 = arith.constant 0 : index
    %3 = vector.load %arg3[%c0_3, %c0_4] : memref<1x128xf32, #tpu.memory_space<vmem>>, vector<1x128xf32>
    %4 = vector.broadcast %3 : vector<1x128xf32> to vector<64x128xf32>
    %5 = arith.addf %2, %4 : vector<64x128xf32>
    %cst_5 = arith.constant dense<0.000000e+00> : vector<128xf32>
    %6 = vector.multi_reduction <add>, %5, %cst_5 [0] : vector<64x128xf32> to vector<128xf32>
    %7 = vector.shape_cast %6 : vector<128xf32> to vector<1x128xf32>
    %8 = arith.mulf %5, %5 : vector<64x128xf32>
    %cst_6 = arith.constant dense<0.000000e+00> : vector<128xf32>
    %9 = vector.multi_reduction <add>, %8, %cst_6 [0] : vector<64x128xf32> to vector<128xf32>
    %10 = vector.shape_cast %9 : vector<128xf32> to vector<1x128xf32>
    %11 = tpu.concatenate %7, %10 in 0 : vector<1x128xf32>, vector<1x128xf32> -> vector<2x128xf32>
    %c0_7 = arith.constant 0 : index
    %c0_8 = arith.constant 0 : index
    %c0_9 = arith.constant 0 : index
    %12 = vector.load %arg5[%c0_7, %c0_8, %c0_9] : memref<1x2x128xf32, #tpu.memory_space<vmem>>, vector<1x2x128xf32>
    %13 = vector.shape_cast %12 : vector<1x2x128xf32> to vector<2x128xf32>
    %14 = vector.shape_cast %11 : vector<2x128xf32> to vector<1x2x128xf32>
    tpu.vector_store %arg5[%c0_7, %c0_8, %c0_9], %14 {strides = array<i32>} : memref<1x2x128xf32, #tpu.memory_space<vmem>>, vector<1x2x128xf32>,
    %15 = arith.truncf %5 : vector<64x128xf32> to vector<64x128xbf16>
    %c0_10 = arith.constant 0 : index
    %c0_11 = arith.constant 0 : index
    %16 = vector.load %arg4[%c0_10, %c0_11] : memref<64x128xbf16, #tpu.memory_space<vmem>>, vector<64x128xbf16>
    tpu.vector_store %arg4[%c0_10, %c0_11], %15 {strides = array<i32>} : memref<64x128xbf16, #tpu.memory_space<vmem>>, vector<64x128xbf16>,
    return
  }
  func.func @transform_0(%arg0: i32) -> (i32, i32) {
    %c0_i32 = arith.constant 0 : i32
    %c0_i32_0 = arith.constant 0 : i32
    return %arg0, %c0_i32 : i32, i32
  }
  func.func @transform_1(%arg0: i32) -> (i32, i32) {
    %c0_i32 = arith.constant 0 : i32
    %c0_i32_0 = arith.constant 0 : i32
    %c0_i32_1 = arith.constant 0 : i32
    return %c0_i32, %c0_i32_0 : i32, i32
  }
  func.func @transform_2(%arg0: i32) -> (i32, i32) {
    %c0_i32 = arith.constant 0 : i32
    %c0_i32_0 = arith.constant 0 : i32
    %c0_i32_1 = arith.constant 0 : i32
    return %c0_i32, %c0_i32_0 : i32, i32
  }
  func.func @transform_3(%arg0: i32) -> (i32, i32) {
    %c0_i32 = arith.constant 0 : i32
    %c0_i32_0 = arith.constant 0 : i32
    return %arg0, %c0_i32 : i32, i32
  }
  func.func @transform_4(%arg0: i32) -> (i32, i32, i32) {
    %c0_i32 = arith.constant 0 : i32
    %c0_i32_0 = arith.constant 0 : i32
    %c0_i32_1 = arith.constant 0 : i32
    return %arg0, %c0_i32, %c0_i32_0 : i32, i32, i32
  }
}

module attributes {stable_mosaic.version = 11 : i64} {
  func.func @_affine_kernel(%arg0: i32, %arg1: memref<64x128xbf16, #tpu.memory_space<vmem>>, %arg2: memref<1x128xf32, #tpu.memory_space<vmem>>, %arg3: memref<1x128xf32, #tpu.memory_space<vmem>>, %arg4: memref<64x128xbf16, #tpu.memory_space<vmem>>) attributes {dimension_semantics = [#tpu.dimension_semantics<parallel>], iteration_bounds = array<i64: 2>, scalar_prefetch = 0 : i64, scratch_operands = 0 : i64, tpu.core_type = #tpu.core_type<tc>, window_params = [{transform_indices = @transform_0, window_bounds = array<i64: 64, 128>}, {pipeline_mode = #tpu.pipeline_mode<synchronous>, transform_indices = @transform_1, window_bounds = array<i64: 1, 128>}, {pipeline_mode = #tpu.pipeline_mode<synchronous>, transform_indices = @transform_2, window_bounds = array<i64: 1, 128>}, {transform_indices = @transform_3, window_bounds = array<i64: 64, 128>}]} {
    %c0 = arith.constant 0 : index
    %c0_0 = arith.constant 0 : index
    %0 = vector.load %arg1[%c0, %c0_0] : memref<64x128xbf16, #tpu.memory_space<vmem>>, vector<64x128xbf16>
    %1 = arith.extf %0 : vector<64x128xbf16> to vector<64x128xf32>
    %c0_1 = arith.constant 0 : index
    %c0_2 = arith.constant 0 : index
    %2 = vector.load %arg2[%c0_1, %c0_2] : memref<1x128xf32, #tpu.memory_space<vmem>>, vector<1x128xf32>
    %3 = vector.broadcast %2 : vector<1x128xf32> to vector<64x128xf32>
    %4 = arith.mulf %1, %3 : vector<64x128xf32>
    %c0_3 = arith.constant 0 : index
    %c0_4 = arith.constant 0 : index
    %5 = vector.load %arg3[%c0_3, %c0_4] : memref<1x128xf32, #tpu.memory_space<vmem>>, vector<1x128xf32>
    %6 = vector.broadcast %5 : vector<1x128xf32> to vector<64x128xf32>
    %7 = arith.addf %4, %6 : vector<64x128xf32>
    %cst = arith.constant 0.000000e+00 : f32
    %8 = vector.broadcast %cst : f32 to vector<64x128xf32>
    %9 = arith.maximumf %7, %8 : vector<64x128xf32>
    %10 = arith.truncf %9 : vector<64x128xf32> to vector<64x128xbf16>
    %c0_5 = arith.constant 0 : index
    %c0_6 = arith.constant 0 : index
    %11 = vector.load %arg4[%c0_5, %c0_6] : memref<64x128xbf16, #tpu.memory_space<vmem>>, vector<64x128xbf16>
    tpu.vector_store %arg4[%c0_5, %c0_6], %10 {strides = array<i32>} : memref<64x128xbf16, #tpu.memory_space<vmem>>, vector<64x128xbf16>,
    return
  }
  func.func @transform_0(%arg0: i32) -> (i32, i32) {
    %c0_i32 = arith.constant 0 : i32
    %c0_i32_0 = arith.constant 0 : i32
    return %arg0, %c0_i32 : i32, i32
  }
  func.func @transform_1(%arg0: i32) -> (i32, i32) {
    %c0_i32 = arith.constant 0 : i32
    %c0_i32_0 = arith.constant 0 : i32
    %c0_i32_1 = arith.constant 0 : i32
    return %c0_i32, %c0_i32_0 : i32, i32
  }
  func.func @transform_2(%arg0: i32) -> (i32, i32) {
    %c0_i32 = arith.constant 0 : i32
    %c0_i32_0 = arith.constant 0 : i32
    %c0_i32_1 = arith.constant 0 : i32
    return %c0_i32, %c0_i32_0 : i32, i32
  }
  func.func @transform_3(%arg0: i32) -> (i32, i32) {
    %c0_i32 = arith.constant 0 : i32
    %c0_i32_0 = arith.constant 0 : i32
    return %arg0, %c0_i32 : i32, i32
  }
}

</mosaic_0001>

<llo_original>
// kernel: tile.25
$region0: #{tile.25}
  #allocation0 [shape = 's32[1]{0}', space=sflag, size = 0x4, scoped, tag = 'scoped memory for tile.25']
  %s0 = inlined_call_operand.vmem [shape: f32[32], index: 0, kind: input, shape index: {}]
  %s1 = inlined_call_operand.vmem [shape: f32[4,32], index: 1, kind: output, shape index: {}]
  // Predicated region
  $region2: #{tile.25} parent=0 // pred_check
    _
  $region3: #{tile.25} parent=0 // pred_check_branch
    %3 = sbr.rel (0) target = $region5
  $region4: #{tile.25} parent=0 // pred_region
    _
  $region5: #{tile.25} parent=0 // pred_fallthru
    _
  %v4 = vld [vmem:[%s0] ss:$0 sm:$0xff]
  %5 = vst [vmem:[%s1] sm:$0xf] %v4

// kernel: stream_down_apply.6
$region0: #{stream_down_apply.6}
  #allocation0 [shape = 'u32[]', space=smem, size = 0x4, offset = 0x4, fixed_abs, tag = 'smem constant byte address 0x4 - core index']
  #allocation1 [shape = 'u32[144,128]{1,0:T(1,128)}', space=vmem, size = 0x12000, scoped, tag = 'internal scratch']
  %s0 = inlined_call_operand.vmem [shape: bf16[2048,147], index: 0, kind: input, shape index: {}]
  %s1 = inlined_call_operand.vmem [shape: bf16[147,32], index: 1, kind: input, shape index: {}]
  %s2 = inlined_call_operand.vmem [shape: f32[1,32], index: 2, kind: input, shape index: {}]
  %s3 = inlined_call_operand.vmem [shape: bf16[2048,32], index: 3, kind: output, shape index: {0}]
  %s4 = inlined_call_operand.vmem [shape: f32[8,2,32], index: 4, kind: output, shape index: {1}]
  %5 = xla_tuple %s3, %s4
  %s6 = sld [smem:[#allocation0]]
  $region53: #{stream_down_apply.6} parent=0
    _
  %s8 = ssub.s32 1, %s6
  %s9 = scalar_select 0, %s8, %s6
  loop: start=0, step=1, limit=10
  $region2: #{stream_down_apply.6} parent=0 // loop_pre_header
    _
  $region3: #{stream_down_apply.6} parent=0 // loop_header
    %s11 = sphi 0, %s15
    %p12 = scmp.ge.s32.totalorder %s11, 10
    %s21 = sphi 0, %s23
    %s24 = sphi 0, %s21
    %s25 = sphi 0, %s24
    %s41 = sphi 0, %s25
    %s45 = sphi 0, %s45
    %s47 = sphi 0, %s45
    %s48 = sphi 0, %s47
    %s62 = sphi 0, %s48
    %s66 = sphi 0, %s66
    %s68 = sphi 0, %s66
    %s69 = sphi 0, %s68
    %s83 = sphi 0, %s69
    %s89 = sphi 0, %s91
    %s92 = sphi 0, %s89
    %s93 = sphi 0, %s92
    %s109 = sphi 0, %s93
    %s115 = sphi 0, %s117
    %s118 = sphi 0, %s115
    %s119 = sphi 0, %s118
    %s135 = sphi 0, %s119
  $region4: #{stream_down_apply.6} parent=0 // loop_header_branch
    %14 = sbr.rel (%p12) target = $region8
  $region5: #{stream_down_apply.6} parent=0 // loop_body
    %s16 = ssub.s32 %s11, 1
    %s17 = ssub.s32 %s11, 2
    %s18 = sadd.s32 %s11, 1
    %s19 = ssub.s32 %s11, %s18
    %p20 = scmp.eq.s32.totalorder %s19, 0
    %s22 = sadd.s32 %s21, 1
    %s23 = scalar_select %p20, %s21, %s22
    %p26 = pneg %p20
    %p27 = scmp.eq.s32.totalorder %s11, 7
    %p28 = por %p26, %p27
    %p29 = scmp.ne.s32.totalorder %s21, %s24
    %p30 = scmp.eq.s32.totalorder %s11, 0
    %p31 = por %p29, %p30
    %p32 = scmp.ne.s32.totalorder %s21, %s24
    %p33 = scmp.eq.s32.totalorder %s16, 7
    %p34 = por %p32, %p33
    %p35 = scmp.ne.s32.totalorder %s24, %s25
    %p36 = scmp.eq.s32.totalorder %s16, 0
    %p37 = por %p35, %p36
    %p38 = scmp.ne.s32.totalorder %s24, %s25
    %p39 = scmp.eq.s32.totalorder %s17, 7
    %p40 = por %p38, %p39
    %p42 = scmp.ne.s32.totalorder %s25, %s41
    %p43 = scmp.eq.s32.totalorder %s17, 0
    %p44 = por %p42, %p43
    %s46 = sadd.s32 %s45, 1
    %p49 = scmp.eq.s32.totalorder %s11, 7
    %p50 = scmp.ne.s32.totalorder %s45, %s47
    %p51 = scmp.eq.s32.totalorder %s11, 0
    %p52 = por %p50, %p51
    %p53 = scmp.ne.s32.totalorder %s45, %s47
    %p54 = scmp.eq.s32.totalorder %s16, 7
    %p55 = por %p53, %p54
    %p56 = scmp.ne.s32.totalorder %s47, %s48
    %p57 = scmp.eq.s32.totalorder %s16, 0
    %p58 = por %p56, %p57
    %p59 = scmp.ne.s32.totalorder %s47, %s48
    %p60 = scmp.eq.s32.totalorder %s17, 7
    %p61 = por %p59, %p60
    %p63 = scmp.ne.s32.totalorder %s48, %s62
    %p64 = scmp.eq.s32.totalorder %s17, 0
    %p65 = por %p63, %p64
    %s67 = sadd.s32 %s66, 1
    %p70 = scmp.eq.s32.totalorder %s11, 7
    %p71 = scmp.ne.s32.totalorder %s66, %s68
    %p72 = scmp.eq.s32.totalorder %s11, 0
    %p73 = por %p71, %p72
    %p74 = scmp.ne.s32.totalorder %s66, %s68
    %p75 = scmp.eq.s32.totalorder %s16, 7
    %p76 = por %p74, %p75
    %p77 = scmp.ne.s32.totalorder %s68, %s69
    %p78 = scmp.eq.s32.totalorder %s16, 0
    %p79 = por %p77, %p78
    %p80 = scmp.ne.s32.totalorder %s68, %s69
    %p81 = scmp.eq.s32.totalorder %s17, 7
    %p82 = por %p80, %p81
    %p84 = scmp.ne.s32.totalorder %s69, %s83
    %p85 = scmp.eq.s32.totalorder %s17, 0
    %p86 = por %p84, %p85
    %s87 = ssub.s32 %s11, %s18
    %p88 = scmp.eq.s32.totalorder %s87, 0
    %s90 = sadd.s32 %s89, 1
    %s91 = scalar_select %p88, %s89, %s90
    %p94 = pneg %p88
    %p95 = scmp.eq.s32.totalorder %s11, 7
    %p96 = por %p94, %p95
    %p97 = scmp.ne.s32.totalorder %s89, %s92
    %p98 = scmp.eq.s32.totalorder %s11, 0
    %p99 = por %p97, %p98
    %p100 = scmp.ne.s32.totalorder %s89, %s92
    %p101 = scmp.eq.s32.totalorder %s16, 7
    %p102 = por %p100, %p101
    %p103 = scmp.ne.s32.totalorder %s92, %s93
    %p104 = scmp.eq.s32.totalorder %s16, 0
    %p105 = por %p103, %p104
    %p106 = scmp.ne.s32.totalorder %s92, %s93
    %p107 = scmp.eq.s32.totalorder %s17, 7
    %p108 = por %p106, %p107
    %p110 = scmp.ne.s32.totalorder %s93, %s109
    %p111 = scmp.eq.s32.totalorder %s17, 0
    %p112 = por %p110, %p111
    %s113 = ssub.s32 %s11, %s18
    %p114 = scmp.eq.s32.totalorder %s113, 0
    %s116 = sadd.s32 %s115, 1
    %s117 = scalar_select %p114, %s115, %s116
    %p120 = pneg %p114
    %p121 = scmp.eq.s32.totalorder %s11, 7
    %p122 = por %p120, %p121
    %p123 = scmp.ne.s32.totalorder %s115, %s118
    %p124 = scmp.eq.s32.totalorder %s11, 0
    %p125 = por %p123, %p124
    %p126 = scmp.ne.s32.totalorder %s115, %s118
    %p127 = scmp.eq.s32.totalorder %s16, 7
    %p128 = por %p126, %p127
    %p129 = scmp.ne.s32.totalorder %s118, %s119
    %p130 = scmp.eq.s32.totalorder %s16, 0
    %p131 = por %p129, %p130
    %p132 = scmp.ne.s32.totalorder %s118, %s119
    %p133 = scmp.eq.s32.totalorder %s17, 7
    %p134 = por %p132, %p133
    %p136 = scmp.ne.s32.totalorder %s119, %s135
    %p137 = scmp.eq.s32.totalorder %s17, 0
    %p138 = por %p136, %p137
    %p139 = scmp.le.s32.totalorder 1, %s11
    %p140 = scmp.lt.s32.totalorder %s11, 9
    %p141 = pnand %p139, %p140
    %p142 = pneg %p141
    // Predicated region
    $region9: #{stream_down_apply.6} parent=5 // pred_check
      _
    $region10: #{stream_down_apply.6} parent=5 // pred_check_branch
      %144 = sbr.rel (%p141) target = $region12
    $region11: #{stream_down_apply.6} parent=5 // pred_region
      %s145 = ssub.s32 %s11, 1
      // Predicated region
      $region13: #{stream_down_apply.6} parent=11 // pred_check
        %p146 = pneg %p58
      $region14: #{stream_down_apply.6} parent=11 // pred_check_branch
        %148 = sbr.rel (%p146) target = $region16
      $region15: #{stream_down_apply.6} parent=11 // pred_region
        _
      $region16: #{stream_down_apply.6} parent=11 // pred_fallthru
        _
      // Predicated region
      $region17: #{stream_down_apply.6} parent=11 // pred_check
        %p149 = pneg %p79
      $region18: #{stream_down_apply.6} parent=11 // pred_check_branch
        %151 = sbr.rel (%p149) target = $region20
      $region19: #{stream_down_apply.6} parent=11 // pred_region
        _
      $region20: #{stream_down_apply.6} parent=11 // pred_fallthru
        _
    $region12: #{stream_down_apply.6} parent=5 // pred_fallthru
      _
    %p152 = scmp.lt.s32.totalorder %s11, 8
    // Predicated region
    $region21: #{stream_down_apply.6} parent=5 // pred_check
      %p153 = pneg %p152
    $region22: #{stream_down_apply.6} parent=5 // pred_check_branch
      %155 = sbr.rel (%p153) target = $region24
    $region23: #{stream_down_apply.6} parent=5 // pred_region
      // Predicated region
      $region25: #{stream_down_apply.6} parent=23 // pred_check
        %p156 = pneg %p31
      $region26: #{stream_down_apply.6} parent=23 // pred_check_branch
        %158 = sbr.rel (%p156) target = $region28
      $region27: #{stream_down_apply.6} parent=23 // pred_region
        %s159 = smul.u32 32, %s11
        %p160 = scmp.lt.s32.totalorder %s159, 255
        %s161 = scalar_select %p160, %s159, 255
        %s162 = smul.addr %s161, 2
        %s163 = smul.addr %s162, 4
        %s164 = scalar_lea.vmem %s0, %s163
        %s165 = smul.u32 32, %s11
      $region28: #{stream_down_apply.6} parent=23 // pred_fallthru
        _
    $region24: #{stream_down_apply.6} parent=5 // pred_fallthru
      _
    %p166 = scmp.le.s32.totalorder 1, %s11
    %p167 = scmp.lt.s32.totalorder %s11, 9
    %p168 = pnand %p166, %p167
    %p169 = pneg %p168
    // Predicated region
    $region29: #{stream_down_apply.6} parent=5 // pred_check
      _
    $region30: #{stream_down_apply.6} parent=5 // pred_check_branch
      %171 = sbr.rel (%p168) target = $region32
    $region31: #{stream_down_apply.6} parent=5 // pred_region
      %s172 = ssub.s32 %s11, 1
      %s173 = smul.u32 32, %s16
      %p174 = scmp.lt.s32.totalorder %s173, 255
      %s175 = scalar_select %p174, %s173, 255
      %s176 = smul.addr %s175, 2
      %s177 = smul.addr %s176, 4
      %s178 = scalar_lea.vmem %s0, %s177
      %p179 = pneg %p37
      %p180 = pneg %p34
      %p181 = pneg %p58
      %p182 = pneg %p55
      %p183 = pneg %p79
      %p184 = pneg %p76
      %p185 = pneg %p105
      %p186 = pneg %p102
      %s187 = smul.u32 32, %s16
      %p188 = scmp.lt.s32.totalorder %s187, 255
      %s189 = scalar_select %p188, %s187, 255
      %s190 = smul.addr %s189, 4
      %s191 = scalar_lea.vmem %s3, %s190
      %p192 = pneg %p131
      %p193 = pneg %p128
      %p194 = scmp.lt.s32.totalorder %s16, 7
      %s195 = scalar_select %p194, %s16, 7
      %s196 = smul.addr %s195, 2
      %s197 = scalar_lea.vmem %s4, %s196
      %s198 = smul.u32 32, %s16
      %p199 = scmp.lt.s32.totalorder %s198, 255
      %s200 = scalar_select %p199, %s198, 255
      %s201 = smul.addr %s200, 2
      %s202 = smul.addr %s201, 4
      %s203 = scalar_lea.vmem %s0, %s202
      %s204 = smul.u32 32, %s16
      %s205 = smul.u32 32, %s16
      %p206 = scmp.lt.s32.totalorder %s205, 255
      %s207 = scalar_select %p206, %s205, 255
      %s208 = smul.addr %s207, 4
      %s209 = scalar_lea.vmem %s3, %s208
      %s210 = smul.u32 32, %s16
      %p211 = scmp.lt.s32.totalorder %s16, 7
      %s212 = scalar_select %p211, %s16, 7
      %s213 = smul.addr %s212, 2
      %s214 = scalar_lea.vmem %s4, %s213
      %v216 = vld [vmem:[%s203] sm:$0xff]
      %v217 = vld [vmem:[%s203 + $0x8] sm:$0xff]
      %v218 = vld [vmem:[%s203 + $0x10] sm:$0xff]
      %v219 = vld [vmem:[%s203 + $0x18] sm:$0xff]
      %v220 = vld [vmem:[%s203 + $0x20] sm:$0xff]
      %v221 = vld [vmem:[%s203 + $0x28] sm:$0xff]
      %v222 = vld [vmem:[%s203 + $0x30] sm:$0xff]
      %v223 = vld [vmem:[%s203 + $0x38] sm:$0xff]
      %v224 = vld [vmem:[%s203 + $0x40] sm:$0xff]
      %v225 = vld [vmem:[%s203 + $0x48] sm:$0xff]
      %v226 = vld [vmem:[%s203 + $0x50] sm:$0xff]
      %v227 = vld [vmem:[%s203 + $0x58] sm:$0xff]
      %v228 = vld [vmem:[%s203 + $0x60] sm:$0xff]
      %v229 = vld [vmem:[%s203 + $0x68] sm:$0xff]
      %v230 = vld [vmem:[%s203 + $0x70] sm:$0xff]
      %v231 = vld [vmem:[%s203 + $0x78] sm:$0xff]
      %v232 = vld [vmem:[%s203 + $0x80] sm:$0xff]
      %v233 = vld [vmem:[%s203 + $0x88] sm:$0xff]
      %v234 = vld [vmem:[%s203 + $0x90] sm:$0xff]
      %v235 = vld [vmem:[%s203 + $0x98] sm:$0xff]
      %v236 = vld [vmem:[%s203 + $0xa0] sm:$0xff]
      %v237 = vld [vmem:[%s203 + $0xa8] sm:$0xff]
      %v238 = vld [vmem:[%s203 + $0xb0] sm:$0xff]
      %v239 = vld [vmem:[%s203 + $0xb8] sm:$0xff]
      %v240 = vld [vmem:[%s203 + $0xc0] sm:$0xff]
      %v241 = vld [vmem:[%s203 + $0xc8] sm:$0xff]
      %v242 = vld [vmem:[%s203 + $0xd0] sm:$0xff]
      %v243 = vld [vmem:[%s203 + $0xd8] sm:$0xff]
      %v244 = vld [vmem:[%s203 + $0xe0] sm:$0xff]
      %v245 = vld [vmem:[%s203 + $0xe8] sm:$0xff]
      %v246 = vld [vmem:[%s203 + $0xf0] sm:$0xff]
      %v247 = vld [vmem:[%s203 + $0xf8] sm:$0xff]
      %v248 = vld [vmem:[%s1] sm:$0xf]
      %v249 = vld [vmem:[%s1 + $0x4] sm:$0xf]
      %v250 = vld [vmem:[%s1 + $0x8] sm:$0xf]
      %v251 = vld [vmem:[%s1 + $0xc] sm:$0xf]
      %v252 = vld [vmem:[%s1 + $0x10] sm:$0xf]
      %v253 = vld [vmem:[%s1 + $0x14] sm:$0xf]
      %v254 = vld [vmem:[%s1 + $0x18] sm:$0xf]
      %v255 = vld [vmem:[%s1 + $0x1c] sm:$0xf]
      %v256 = vld [vmem:[%s1 + $0x20] sm:$0xf]
      %v257 = vld [vmem:[%s1 + $0x24] sm:$0xf]
      %v258 = vld [vmem:[%s1 + $0x28] sm:$0xf]
      %v259 = vld [vmem:[%s1 + $0x2c] sm:$0xf]
      %v260 = vld [vmem:[%s1 + $0x30] sm:$0xf]
      %v261 = vld [vmem:[%s1 + $0x34] sm:$0xf]
      %v262 = vld [vmem:[%s1 + $0x38] sm:$0xf]
      %v263 = vld [vmem:[%s1 + $0x3c] sm:$0xf]
      %v264 = vld [vmem:[%s1 + $0x40] sm:$0xf]
      %v265 = vld [vmem:[%s1 + $0x44] sm:$0xf]
      %v266 = vld [vmem:[%s1 + $0x48] sm:$0x3]
      %v267 = vld [vmem:[%s2] sm:$0x1]
      %v269 = vlaneseq
      %v270 = vshrl.u32 %v269, 7
      %v271 = vsub.s32 0, %v270
      %v272 = vrot.slane %v267, %v271
      %v306 = vunpack.c.l.b16 %v216
      %v307 = vunpack.c.h.b16 %v216
      %v308 = vunpack.c.l.b16 %v217
      %v309 = vunpack.c.h.b16 %v217
      %v310 = vunpack.c.l.b16 %v218
      %v311 = vunpack.c.h.b16 %v218
      %v312 = vunpack.c.l.b16 %v219
      %v313 = vunpack.c.h.b16 %v219
      %v314 = vunpack.c.l.b16 %v220
      %v315 = vunpack.c.h.b16 %v220
      %v316 = vunpack.c.l.b16 %v221
      %v317 = vunpack.c.h.b16 %v221
      %v318 = vunpack.c.l.b16 %v222
      %v319 = vunpack.c.h.b16 %v222
      %v320 = vunpack.c.l.b16 %v223
      %v321 = vunpack.c.h.b16 %v223
      %v322 = vunpack.c.l.b16 %v224
      %v323 = vunpack.c.h.b16 %v224
      %v324 = vunpack.c.l.b16 %v225
      %v325 = vunpack.c.h.b16 %v225
      %v326 = vunpack.c.l.b16 %v226
      %v327 = vunpack.c.h.b16 %v226
      %v328 = vunpack.c.l.b16 %v227
      %v329 = vunpack.c.h.b16 %v227
      %v330 = vunpack.c.l.b16 %v228
      %v331 = vunpack.c.h.b16 %v228
      %v332 = vunpack.c.l.b16 %v229
      %v333 = vunpack.c.h.b16 %v229
      %v334 = vunpack.c.l.b16 %v230
      %v335 = vunpack.c.h.b16 %v230
      %v336 = vunpack.c.l.b16 %v231
      %v337 = vunpack.c.h.b16 %v231
      %v338 = vunpack.c.l.b16 %v232
      %v339 = vunpack.c.h.b16 %v232
      %v340 = vunpack.c.l.b16 %v233
      %v341 = vunpack.c.h.b16 %v233
      %v342 = vunpack.c.l.b16 %v234
      %v343 = vunpack.c.h.b16 %v234
      %v344 = vunpack.c.l.b16 %v235
      %v345 = vunpack.c.h.b16 %v235
      %v346 = vunpack.c.l.b16 %v236
      %v347 = vunpack.c.h.b16 %v236
      %v348 = vunpack.c.l.b16 %v237
      %v349 = vunpack.c.h.b16 %v237
      %v350 = vunpack.c.l.b16 %v238
      %v351 = vunpack.c.h.b16 %v238
      %v352 = vunpack.c.l.b16 %v239
      %v353 = vunpack.c.h.b16 %v239
      %v354 = vunpack.c.l.b16 %v240
      %v355 = vunpack.c.h.b16 %v240
      %v356 = vunpack.c.l.b16 %v241
      %v357 = vunpack.c.h.b16 %v241
      %v358 = vunpack.c.l.b16 %v242
      %v359 = vunpack.c.h.b16 %v242
      %v360 = vunpack.c.l.b16 %v243
      %v361 = vunpack.c.h.b16 %v243
      %v362 = vunpack.c.l.b16 %v244
      %v363 = vunpack.c.h.b16 %v244
      %v364 = vunpack.c.l.b16 %v245
      %v365 = vunpack.c.h.b16 %v245
      %v366 = vunpack.c.l.b16 %v246
      %v367 = vunpack.c.h.b16 %v246
      %v368 = vunpack.c.l.b16 %v247
      %v369 = vunpack.c.h.b16 %v247
      %v370 = vpack.c.b16 %v308, %v306
      %v371 = vpack.c.b16 %v309, %v307
      %v372 = vpack.c.b16 %v312, %v310
      %v373 = vpack.c.b16 %v313, %v311
      %v374 = vpack.c.b16 %v316, %v314
      %v375 = vpack.c.b16 %v317, %v315
      %v376 = vpack.c.b16 %v320, %v318
      %v377 = vpack.c.b16 %v321, %v319
      %v378 = vpack.c.b16 %v324, %v322
      %v379 = vpack.c.b16 %v325, %v323
      %v380 = vpack.c.b16 %v328, %v326
      %v381 = vpack.c.b16 %v329, %v327
      %v382 = vpack.c.b16 %v332, %v330
      %v383 = vpack.c.b16 %v333, %v331
      %v384 = vpack.c.b16 %v336, %v334
      %v385 = vpack.c.b16 %v337, %v335
      %v386 = vpack.c.b16 %v340, %v338
      %v387 = vpack.c.b16 %v341, %v339
      %v388 = vpack.c.b16 %v344, %v342
      %v389 = vpack.c.b16 %v345, %v343
      %v390 = vpack.c.b16 %v348, %v346
      %v391 = vpack.c.b16 %v349, %v347
      %v392 = vpack.c.b16 %v352, %v350
      %v393 = vpack.c.b16 %v353, %v351
      %v394 = vpack.c.b16 %v356, %v354
      %v395 = vpack.c.b16 %v357, %v355
      %v396 = vpack.c.b16 %v360, %v358
      %v397 = vpack.c.b16 %v361, %v359
      %v398 = vpack.c.b16 %v364, %v362
      %v399 = vpack.c.b16 %v365, %v363
      %v400 = vpack.c.b16 %v368, %v366
      %v401 = vpack.c.b16 %v369, %v367
      %v437 = vunpack.c.l.b16 %v248
      %v438 = vunpack.c.l.b16 %v249
      %v439 = vunpack.c.l.b16 %v250
      %v440 = vunpack.c.l.b16 %v251
      %v441 = vunpack.c.l.b16 %v252
      %v442 = vunpack.c.l.b16 %v253
      %v443 = vunpack.c.l.b16 %v254
      %v444 = vunpack.c.l.b16 %v255
      %v445 = vunpack.c.l.b16 %v256
      %v446 = vunpack.c.l.b16 %v257
      %v447 = vunpack.c.l.b16 %v258
      %v448 = vunpack.c.l.b16 %v259
      %v449 = vunpack.c.l.b16 %v260
      %v450 = vunpack.c.l.b16 %v261
      %v451 = vunpack.c.l.b16 %v262
      %v452 = vunpack.c.l.b16 %v263
      %v453 = vunpack.c.l.b16 %v264
      %v454 = vunpack.c.l.b16 %v265
      %v455 = vunpack.c.l.b16 %v266
      %v456 = vpack.c.b16 %v438, %v437
      %v457 = vpack.c.b16 %v440, %v439
      %v458 = vpack.c.b16 %v442, %v441
      %v459 = vpack.c.b16 %v444, %v443
      %v460 = vpack.c.b16 %v446, %v445
      %v461 = vpack.c.b16 %v448, %v447
      %v462 = vpack.c.b16 %v450, %v449
      %v463 = vpack.c.b16 %v452, %v451
      %v464 = vpack.c.b16 %v454, %v453
      %v465 = vpack.c.b16 %v455, %v455
      %vm475 = vcmask 154624
      %v477 = vsel %vm475, %v371, 0
      %v480 = vsel %vm475, %v373, 0
      %v483 = vsel %vm475, %v375, 0
      %v486 = vsel %vm475, %v377, 0
      %v489 = vsel %vm475, %v379, 0
      %v492 = vsel %vm475, %v381, 0
      %v495 = vsel %vm475, %v383, 0
      %v498 = vsel %vm475, %v385, 0
      %v501 = vsel %vm475, %v387, 0
      %v504 = vsel %vm475, %v389, 0
      %v507 = vsel %vm475, %v391, 0
      %v510 = vsel %vm475, %v393, 0
      %v513 = vsel %vm475, %v395, 0
      %v516 = vsel %vm475, %v397, 0
      %v519 = vsel %vm475, %v399, 0
      %v522 = vsel %vm475, %v401, 0
      %vm524 = vcmask 1040384
      %vm525 = vcmask 1041408
      %v526 = vsel %vm524, 4294967295, 65535
      %v527 = vsel %vm525, %v526, 0
      %v529 = vand.u32 %v465, %v527
      %531 = vmatprep.subr.bf16.mxu0 0
      %532 = vmatpush1.bf16.msra.mxu0 %v456
      %533 = vmatprep.subr.bf16.mxu0 0
      %534 = vmatpush1.bf16.msra.mxu0 %v457
      %535 = vmatprep.subr.bf16.mxu0 0
      %536 = vmatpush1.bf16.msra.mxu0 %v458
      %537 = vmatprep.subr.bf16.mxu0 0
      %538 = vmatpush1.bf16.msra.mxu0 %v459
      %539 = vmatprep.subr.bf16.mxu0 0
      %540 = vmatpush1.bf16.msra.mxu0 %v460
      %541 = vmatprep.subr.bf16.mxu0 0
      %542 = vmatpush1.bf16.msra.mxu0 %v461
      %543 = vmatprep.subr.bf16.mxu0 0
      %544 = vmatpush1.bf16.msra.mxu0 %v462
      %545 = vmatprep.subr.bf16.mxu0 0
      %546 = vmatpush1.bf16.msra.mxu0 %v463
      %547 = vmatprep.subr.bf16.mxu0 0
      %548 = vmatpush1.bf16.msra.mxu0 %v464
      %549 = vmatprep.subr.bf16.mxu0 0
      %550 = vmatpush1.bf16.msra.mxu0 %v529
      %551 = vmatprep.subr.bf16.mxu0 0
      %552 = vmatpush1.bf16.msra.mxu0 0
      %553 = vmatprep.subr.bf16.mxu0 0
      %554 = vmatpush1.bf16.msra.mxu0 0
      %555 = vmatprep.subr.bf16.mxu0 0
      %556 = vmatpush1.bf16.msra.mxu0 0
      %557 = vmatprep.subr.bf16.mxu0 0
      %558 = vmatpush1.bf16.msra.mxu0 0
      %559 = vmatprep.subr.bf16.mxu0 0
      %560 = vmatpush1.bf16.msra.mxu0 0
      %561 = vmatprep.subr.bf16.mxu0 0
      %562 = vmatpush1.bf16.msra.mxu0 0
      %563 = vmatprep.mubr.bf16.mxu0 %v477
      %564 = vmatmul.mubr.bf16.gmra.mrb[0].mxu0 %v370
      %v565 = vpop.f32.mrb[0].mxu0
      %v566 = vadd.f32 %v272, %v565
      %v567 = vpop.f32.mrb[0].mxu0
      %v568 = vpop.f32.mrb[0].mxu0
      %v569 = vadd.f32 %v272, %v568
      %v570 = vpop.f32.mrb[0].mxu0
      %571 = vmatprep.mubr.bf16.mxu0 %v480
      %572 = vmatmul.mubr.bf16.gmra.mrb[0].mxu0 %v372
      %v573 = vpop.f32.mrb[0].mxu0
      %v574 = vadd.f32 %v272, %v573
      %v575 = vpop.f32.mrb[0].mxu0
      %v576 = vpop.f32.mrb[0].mxu0
      %v577 = vadd.f32 %v272, %v576
      %v578 = vpop.f32.mrb[0].mxu0
      %579 = vmatprep.mubr.bf16.mxu0 %v483
      %580 = vmatmul.mubr.bf16.gmra.mrb[0].mxu0 %v374
      %v581 = vpop.f32.mrb[0].mxu0
      %v582 = vadd.f32 %v272, %v581
      %v583 = vpop.f32.mrb[0].mxu0
      %v584 = vpop.f32.mrb[0].mxu0
      %v585 = vadd.f32 %v272, %v584
      %v586 = vpop.f32.mrb[0].mxu0
      %587 = vmatprep.mubr.bf16.mxu0 %v486
      %588 = vmatmul.mubr.bf16.gmra.mrb[0].mxu0 %v376
      %v589 = vpop.f32.mrb[0].mxu0
      %v590 = vadd.f32 %v272, %v589
      %v591 = vpop.f32.mrb[0].mxu0
      %v592 = vpop.f32.mrb[0].mxu0
      %v593 = vadd.f32 %v272, %v592
      %v594 = vpop.f32.mrb[0].mxu0
      %595 = vmatprep.mubr.bf16.mxu0 %v489
      %596 = vmatmul.mubr.bf16.gmra.mrb[0].mxu0 %v378
      %v597 = vpop.f32.mrb[0].mxu0
      %v598 = vadd.f32 %v272, %v597
      %v599 = vpop.f32.mrb[0].mxu0
      %v600 = vpop.f32.mrb[0].mxu0
      %v601 = vadd.f32 %v272, %v600
      %v602 = vpop.f32.mrb[0].mxu0
      %603 = vmatprep.mubr.bf16.mxu0 %v492
      %604 = vmatmul.mubr.bf16.gmra.mrb[0].mxu0 %v380
      %v605 = vpop.f32.mrb[0].mxu0
      %v606 = vadd.f32 %v272, %v605
      %v607 = vpop.f32.mrb[0].mxu0
      %v608 = vpop.f32.mrb[0].mxu0
      %v609 = vadd.f32 %v272, %v608
      %v610 = vpop.f32.mrb[0].mxu0
      %611 = vmatprep.mubr.bf16.mxu0 %v495
      %612 = vmatmul.mubr.bf16.gmra.mrb[0].mxu0 %v382
      %v613 = vpop.f32.mrb[0].mxu0
      %v614 = vadd.f32 %v272, %v613
      %v615 = vpop.f32.mrb[0].mxu0
      %v616 = vpop.f32.mrb[0].mxu0
      %v617 = vadd.f32 %v272, %v616
      %v618 = vpop.f32.mrb[0].mxu0
      %619 = vmatprep.mubr.bf16.mxu0 %v498
      %620 = vmatmul.mubr.bf16.gmra.mrb[0].mxu0 %v384
      %v621 = vpop.f32.mrb[0].mxu0
      %v622 = vadd.f32 %v272, %v621
      %v623 = vpop.f32.mrb[0].mxu0
      %v624 = vpop.f32.mrb[0].mxu0
      %v625 = vadd.f32 %v272, %v624
      %v626 = vpop.f32.mrb[0].mxu0
      %627 = vmatprep.mubr.bf16.mxu0 %v501
      %628 = vmatmul.mubr.bf16.gmra.mrb[0].mxu0 %v386
      %v629 = vpop.f32.mrb[0].mxu0
      %v630 = vadd.f32 %v272, %v629
      %v631 = vpop.f32.mrb[0].mxu0
      %v632 = vpop.f32.mrb[0].mxu0
      %v633 = vadd.f32 %v272, %v632
      %v634 = vpop.f32.mrb[0].mxu0
      %635 = vmatprep.mubr.bf16.mxu0 %v504
      %636 = vmatmul.mubr.bf16.gmra.mrb[0].mxu0 %v388
      %v637 = vpop.f32.mrb[0].mxu0
      %v638 = vadd.f32 %v272, %v637
      %v639 = vpop.f32.mrb[0].mxu0
      %v640 = vpop.f32.mrb[0].mxu0
      %v641 = vadd.f32 %v272, %v640
      %v642 = vpop.f32.mrb[0].mxu0
      %643 = vmatprep.mubr.bf16.mxu0 %v507
      %644 = vmatmul.mubr.bf16.gmra.mrb[0].mxu0 %v390
      %v645 = vpop.f32.mrb[0].mxu0
      %v646 = vadd.f32 %v272, %v645
      %v647 = vpop.f32.mrb[0].mxu0
      %v648 = vpop.f32.mrb[0].mxu0
      %v649 = vadd.f32 %v272, %v648
      %v650 = vpop.f32.mrb[0].mxu0
      %651 = vmatprep.mubr.bf16.mxu0 %v510
      %652 = vmatmul.mubr.bf16.gmra.mrb[0].mxu0 %v392
      %v653 = vpop.f32.mrb[0].mxu0
      %v654 = vadd.f32 %v272, %v653
      %v655 = vpop.f32.mrb[0].mxu0
      %v656 = vpop.f32.mrb[0].mxu0
      %v657 = vadd.f32 %v272, %v656
      %v658 = vpop.f32.mrb[0].mxu0
      %659 = vmatprep.mubr.bf16.mxu0 %v513
      %660 = vmatmul.mubr.bf16.gmra.mrb[0].mxu0 %v394
      %v661 = vpop.f32.mrb[0].mxu0
      %v662 = vadd.f32 %v272, %v661
      %v663 = vpop.f32.mrb[0].mxu0
      %v664 = vpop.f32.mrb[0].mxu0
      %v665 = vadd.f32 %v272, %v664
      %v666 = vpop.f32.mrb[0].mxu0
      %667 = vmatprep.mubr.bf16.mxu0 %v516
      %668 = vmatmul.mubr.bf16.gmra.mrb[0].mxu0 %v396
      %v669 = vpop.f32.mrb[0].mxu0
      %v670 = vadd.f32 %v272, %v669
      %v671 = vpop.f32.mrb[0].mxu0
      %v672 = vpop.f32.mrb[0].mxu0
      %v673 = vadd.f32 %v272, %v672
      %v674 = vpop.f32.mrb[0].mxu0
      %675 = vmatprep.mubr.bf16.mxu0 %v519
      %676 = vmatmul.mubr.bf16.gmra.mrb[0].mxu0 %v398
      %v677 = vpop.f32.mrb[0].mxu0
      %v678 = vadd.f32 %v272, %v677
      %v679 = vpop.f32.mrb[0].mxu0
      %v680 = vpop.f32.mrb[0].mxu0
      %v681 = vadd.f32 %v272, %v680
      %v682 = vpop.f32.mrb[0].mxu0
      %683 = vmatprep.mubr.bf16.mxu0 %v522
      %684 = vmatmul.mubr.bf16.gmra.mrb[0].mxu0 %v400
      %v685 = vpop.f32.mrb[0].mxu0
      %v686 = vadd.f32 %v272, %v685
      %v687 = vpop.f32.mrb[0].mxu0
      %v688 = vpop.f32.mrb[0].mxu0
      %v689 = vadd.f32 %v272, %v688
      %v690 = vpop.f32.mrb[0].mxu0
      %691 = vdwg.mxu0
      %vm692 = vcmask 261120
      %v693 = vsel %vm692, %v566, 0.0
      %v694 = vsel %vm692, %v569, 0.0
      %v695 = vadd.f32 %v693, %v694
      %v696 = vsel %vm692, %v574, 0.0
      %v697 = vadd.f32 %v695, %v696
      %v698 = vsel %vm692, %v577, 0.0
      %v699 = vadd.f32 %v697, %v698
      %v700 = vsel %vm692, %v582, 0.0
      %v701 = vadd.f32 %v699, %v700
      %v702 = vsel %vm692, %v585, 0.0
      %v703 = vadd.f32 %v701, %v702
      %v704 = vsel %vm692, %v590, 0.0
      %v705 = vadd.f32 %v703, %v704
      %v706 = vsel %vm692, %v593, 0.0
      %v707 = vadd.f32 %v705, %v706
      %v708 = vsel %vm692, %v598, 0.0
      %v709 = vadd.f32 %v707, %v708
      %v710 = vsel %vm692, %v601, 0.0
      %v711 = vadd.f32 %v709, %v710
      %v712 = vsel %vm692, %v606, 0.0
      %v713 = vadd.f32 %v711, %v712
      %v714 = vsel %vm692, %v609, 0.0
      %v715 = vadd.f32 %v713, %v714
      %v716 = vsel %vm692, %v614, 0.0
      %v717 = vadd.f32 %v715, %v716
      %v718 = vsel %vm692, %v617, 0.0
      %v719 = vadd.f32 %v717, %v718
      %v720 = vsel %vm692, %v622, 0.0
      %v721 = vadd.f32 %v719, %v720
      %v722 = vsel %vm692, %v625, 0.0
      %v723 = vadd.f32 %v721, %v722
      %v724 = vsel %vm692, %v630, 0.0
      %v725 = vadd.f32 %v723, %v724
      %v726 = vsel %vm692, %v633, 0.0
      %v727 = vadd.f32 %v725, %v726
      %v728 = vsel %vm692, %v638, 0.0
      %v729 = vadd.f32 %v727, %v728
      %v730 = vsel %vm692, %v641, 0.0
      %v731 = vadd.f32 %v729, %v730
      %v732 = vsel %vm692, %v646, 0.0
      %v733 = vadd.f32 %v731, %v732
      %v734 = vsel %vm692, %v649, 0.0
      %v735 = vadd.f32 %v733, %v734
      %v736 = vsel %vm692, %v654, 0.0
      %v737 = vadd.f32 %v735, %v736
      %v738 = vsel %vm692, %v657, 0.0
      %v739 = vadd.f32 %v737, %v738
      %v740 = vsel %vm692, %v662, 0.0
      %v741 = vadd.f32 %v739, %v740
      %v742 = vsel %vm692, %v665, 0.0
      %v743 = vadd.f32 %v741, %v742
      %v744 = vsel %vm692, %v670, 0.0
      %v745 = vadd.f32 %v743, %v744
      %v746 = vsel %vm692, %v673, 0.0
      %v747 = vadd.f32 %v745, %v746
      %v748 = vsel %vm692, %v678, 0.0
      %v749 = vadd.f32 %v747, %v748
      %v750 = vsel %vm692, %v681, 0.0
      %v751 = vadd.f32 %v749, %v750
      %v752 = vsel %vm692, %v686, 0.0
      %v753 = vadd.f32 %v751, %v752
      %v754 = vsel %vm692, %v689, 0.0
      %v755 = vadd.f32 %v753, %v754
      %v756 = vrot.slane %v755, 4
      %v757 = vadd.f32 %v755, %v756
      %v758 = vrot.slane %v757, 2
      %v759 = vadd.f32 %v757, %v758
      %v760 = vrot.slane %v759, 1
      %v761 = vadd.f32 %v759, %v760
      %v762 = vmul.f32 %v566, %v566
      %v763 = vmul.f32 %v569, %v569
      %v764 = vmul.f32 %v574, %v574
      %v765 = vmul.f32 %v577, %v577
      %v766 = vmul.f32 %v582, %v582
      %v767 = vmul.f32 %v585, %v585
      %v768 = vmul.f32 %v590, %v590
      %v769 = vmul.f32 %v593, %v593
      %v770 = vmul.f32 %v598, %v598
      %v771 = vmul.f32 %v601, %v601
      %v772 = vmul.f32 %v606, %v606
      %v773 = vmul.f32 %v609, %v609
      %v774 = vmul.f32 %v614, %v614
      %v775 = vmul.f32 %v617, %v617
      %v776 = vmul.f32 %v622, %v622
      %v777 = vmul.f32 %v625, %v625
      %v778 = vmul.f32 %v630, %v630
      %v779 = vmul.f32 %v633, %v633
      %v780 = vmul.f32 %v638, %v638
      %v781 = vmul.f32 %v641, %v641
      %v782 = vmul.f32 %v646, %v646
      %v783 = vmul.f32 %v649, %v649
      %v784 = vmul.f32 %v654, %v654
      %v785 = vmul.f32 %v657, %v657
      %v786 = vmul.f32 %v662, %v662
      %v787 = vmul.f32 %v665, %v665
      %v788 = vmul.f32 %v670, %v670
      %v789 = vmul.f32 %v673, %v673
      %v790 = vmul.f32 %v678, %v678
      %v791 = vmul.f32 %v681, %v681
      %v792 = vmul.f32 %v686, %v686
      %v793 = vmul.f32 %v689, %v689
      %v794 = vsel %vm692, %v762, 0.0
      %v795 = vsel %vm692, %v763, 0.0
      %v796 = vadd.f32 %v794, %v795
      %v797 = vsel %vm692, %v764, 0.0
      %v798 = vadd.f32 %v796, %v797
      %v799 = vsel %vm692, %v765, 0.0
      %v800 = vadd.f32 %v798, %v799
      %v801 = vsel %vm692, %v766, 0.0
      %v802 = vadd.f32 %v800, %v801
      %v803 = vsel %vm692, %v767, 0.0
      %v804 = vadd.f32 %v802, %v803
      %v805 = vsel %vm692, %v768, 0.0
      %v806 = vadd.f32 %v804, %v805
      %v807 = vsel %vm692, %v769, 0.0
      %v808 = vadd.f32 %v806, %v807
      %v809 = vsel %vm692, %v770, 0.0
      %v810 = vadd.f32 %v808, %v809
      %v811 = vsel %vm692, %v771, 0.0
      %v812 = vadd.f32 %v810, %v811
      %v813 = vsel %vm692, %v772, 0.0
      %v814 = vadd.f32 %v812, %v813
      %v815 = vsel %vm692, %v773, 0.0
      %v816 = vadd.f32 %v814, %v815
      %v817 = vsel %vm692, %v774, 0.0
      %v818 = vadd.f32 %v816, %v817
      %v819 = vsel %vm692, %v775, 0.0
      %v820 = vadd.f32 %v818, %v819
      %v821 = vsel %vm692, %v776, 0.0
      %v822 = vadd.f32 %v820, %v821
      %v823 = vsel %vm692, %v777, 0.0
      %v824 = vadd.f32 %v822, %v823
      %v825 = vsel %vm692, %v778, 0.0
      %v826 = vadd.f32 %v824, %v825
      %v827 = vsel %vm692, %v779, 0.0
      %v828 = vadd.f32 %v826, %v827
      %v829 = vsel %vm692, %v780, 0.0
      %v830 = vadd.f32 %v828, %v829
      %v831 = vsel %vm692, %v781, 0.0
      %v832 = vadd.f32 %v830, %v831
      %v833 = vsel %vm692, %v782, 0.0
      %v834 = vadd.f32 %v832, %v833
      %v835 = vsel %vm692, %v783, 0.0
      %v836 = vadd.f32 %v834, %v835
      %v837 = vsel %vm692, %v784, 0.0
      %v838 = vadd.f32 %v836, %v837
      %v839 = vsel %vm692, %v785, 0.0
      %v840 = vadd.f32 %v838, %v839
      %v841 = vsel %vm692, %v786, 0.0
      %v842 = vadd.f32 %v840, %v841
      %v843 = vsel %vm692, %v787, 0.0
      %v844 = vadd.f32 %v842, %v843
      %v845 = vsel %vm692, %v788, 0.0
      %v846 = vadd.f32 %v844, %v845
      %v847 = vsel %vm692, %v789, 0.0
      %v848 = vadd.f32 %v846, %v847
      %v849 = vsel %vm692, %v790, 0.0
      %v850 = vadd.f32 %v848, %v849
      %v851 = vsel %vm692, %v791, 0.0
      %v852 = vadd.f32 %v850, %v851
      %v853 = vsel %vm692, %v792, 0.0
      %v854 = vadd.f32 %v852, %v853
      %v855 = vsel %vm692, %v793, 0.0
      %v856 = vadd.f32 %v854, %v855
      %v857 = vrot.slane %v856, 4
      %v858 = vadd.f32 %v856, %v857
      %v859 = vrot.slane %v858, 2
      %v860 = vadd.f32 %v858, %v859
      %v861 = vrot.slane %v860, 1
      %v862 = vadd.f32 %v860, %v861
      %v863 = vsel %vm524, %v761, %v862
      %vm864 = vcmask 254976
      %865 = vst.msk [vmem:[%s214] sm:$0x3] %vm864, %v863
      %v866 = vpack.c.bf16 %v569, %v566
      %v867 = vpack.c.bf16 %v577, %v574
      %v868 = vpack.c.bf16 %v585, %v582
      %v869 = vpack.c.bf16 %v593, %v590
      %v870 = vpack.c.bf16 %v601, %v598
      %v871 = vpack.c.bf16 %v609, %v606
      %v872 = vpack.c.bf16 %v617, %v614
      %v873 = vpack.c.bf16 %v625, %v622
      %v874 = vpack.c.bf16 %v633, %v630
      %v875 = vpack.c.bf16 %v641, %v638
      %v876 = vpack.c.bf16 %v649, %v646
      %v877 = vpack.c.bf16 %v657, %v654
      %v878 = vpack.c.bf16 %v665, %v662
      %v879 = vpack.c.bf16 %v673, %v670
      %v880 = vpack.c.bf16 %v681, %v678
      %v881 = vpack.c.bf16 %v689, %v686
      %v898 = vunpack.c.l.b16 %v866
      %v899 = vunpack.c.h.b16 %v866
      %v900 = vunpack.c.l.b16 %v867
      %v901 = vunpack.c.h.b16 %v867
      %v902 = vunpack.c.l.b16 %v868
      %v903 = vunpack.c.h.b16 %v868
      %v904 = vunpack.c.l.b16 %v869
      %v905 = vunpack.c.h.b16 %v869
      %v906 = vunpack.c.l.b16 %v870
      %v907 = vunpack.c.h.b16 %v870
      %v908 = vunpack.c.l.b16 %v871
      %v909 = vunpack.c.h.b16 %v871
      %v910 = vunpack.c.l.b16 %v872
      %v911 = vunpack.c.h.b16 %v872
      %v912 = vunpack.c.l.b16 %v873
      %v913 = vunpack.c.h.b16 %v873
      %v914 = vunpack.c.l.b16 %v874
      %v915 = vunpack.c.h.b16 %v874
      %v916 = vunpack.c.l.b16 %v875
      %v917 = vunpack.c.h.b16 %v875
      %v918 = vunpack.c.l.b16 %v876
      %v919 = vunpack.c.h.b16 %v876
      %v920 = vunpack.c.l.b16 %v877
      %v921 = vunpack.c.h.b16 %v877
      %v922 = vunpack.c.l.b16 %v878
      %v923 = vunpack.c.h.b16 %v878
      %v924 = vunpack.c.l.b16 %v879
      %v925 = vunpack.c.h.b16 %v879
      %v926 = vunpack.c.l.b16 %v880
      %v927 = vunpack.c.h.b16 %v880
      %v928 = vunpack.c.l.b16 %v881
      %v929 = vunpack.c.h.b16 %v881
      %v930 = vpack.c.b16 %v898, %v898
      %v931 = vpack.c.b16 %v899, %v899
      %v932 = vpack.c.b16 %v900, %v900
      %v933 = vpack.c.b16 %v901, %v901
      %v934 = vpack.c.b16 %v902, %v902
      %v935 = vpack.c.b16 %v903, %v903
      %v936 = vpack.c.b16 %v904, %v904
      %v937 = vpack.c.b16 %v905, %v905
      %v938 = vpack.c.b16 %v906, %v906
      %v939 = vpack.c.b16 %v907, %v907
      %v940 = vpack.c.b16 %v908, %v908
      %v941 = vpack.c.b16 %v909, %v909
      %v942 = vpack.c.b16 %v910, %v910
      %v943 = vpack.c.b16 %v911, %v911
      %v944 = vpack.c.b16 %v912, %v912
      %v945 = vpack.c.b16 %v913, %v913
      %v946 = vpack.c.b16 %v914, %v914
      %v947 = vpack.c.b16 %v915, %v915
      %v948 = vpack.c.b16 %v916, %v916
      %v949 = vpack.c.b16 %v917, %v917
      %v950 = vpack.c.b16 %v918, %v918
      %v951 = vpack.c.b16 %v919, %v919
      %v952 = vpack.c.b16 %v920, %v920
      %v953 = vpack.c.b16 %v921, %v921
      %v954 = vpack.c.b16 %v922, %v922
      %v955 = vpack.c.b16 %v923, %v923
      %v956 = vpack.c.b16 %v924, %v924
      %v957 = vpack.c.b16 %v925, %v925
      %v958 = vpack.c.b16 %v926, %v926
      %v959 = vpack.c.b16 %v927, %v927
      %v960 = vpack.c.b16 %v928, %v928
      %v961 = vpack.c.b16 %v929, %v929
      %vm994 = vcmask 257024
      %995 = vst.msk [vmem:[%s209] sm:$0xf] %vm994, %v930
      %996 = vst.msk [vmem:[%s209 + $0x4] sm:$0xf] %vm994, %v931
      %997 = vst.msk [vmem:[%s209 + $0x8] sm:$0xf] %vm994, %v932
      %998 = vst.msk [vmem:[%s209 + $0xc] sm:$0xf] %vm994, %v933
      %999 = vst.msk [vmem:[%s209 + $0x10] sm:$0xf] %vm994, %v934
      %1000 = vst.msk [vmem:[%s209 + $0x14] sm:$0xf] %vm994, %v935
      %1001 = vst.msk [vmem:[%s209 + $0x18] sm:$0xf] %vm994, %v936
      %1002 = vst.msk [vmem:[%s209 + $0x1c] sm:$0xf] %vm994, %v937
      %1003 = vst.msk [vmem:[%s209 + $0x20] sm:$0xf] %vm994, %v938
      %1004 = vst.msk [vmem:[%s209 + $0x24] sm:$0xf] %vm994, %v939
      %1005 = vst.msk [vmem:[%s209 + $0x28] sm:$0xf] %vm994, %v940
      %1006 = vst.msk [vmem:[%s209 + $0x2c] sm:$0xf] %vm994, %v941
      %1007 = vst.msk [vmem:[%s209 + $0x30] sm:$0xf] %vm994, %v942
      %1008 = vst.msk [vmem:[%s209 + $0x34] sm:$0xf] %vm994, %v943
      %1009 = vst.msk [vmem:[%s209 + $0x38] sm:$0xf] %vm994, %v944
      %1010 = vst.msk [vmem:[%s209 + $0x3c] sm:$0xf] %vm994, %v945
      %1011 = vst.msk [vmem:[%s209 + $0x40] sm:$0xf] %vm994, %v946
      %1012 = vst.msk [vmem:[%s209 + $0x44] sm:$0xf] %vm994, %v947
      %1013 = vst.msk [vmem:[%s209 + $0x48] sm:$0xf] %vm994, %v948
      %1014 = vst.msk [vmem:[%s209 + $0x4c] sm:$0xf] %vm994, %v949
      %1015 = vst.msk [vmem:[%s209 + $0x50] sm:$0xf] %vm994, %v950
      %1016 = vst.msk [vmem:[%s209 + $0x54] sm:$0xf] %vm994, %v951
      %1017 = vst.msk [vmem:[%s209 + $0x58] sm:$0xf] %vm994, %v952
      %1018 = vst.msk [vmem:[%s209 + $0x5c] sm:$0xf] %vm994, %v953
      %1019 = vst.msk [vmem:[%s209 + $0x60] sm:$0xf] %vm994, %v954
      %1020 = vst.msk [vmem:[%s209 + $0x64] sm:$0xf] %vm994, %v955
      %1021 = vst.msk [vmem:[%s209 + $0x68] sm:$0xf] %vm994, %v956
      %1022 = vst.msk [vmem:[%s209 + $0x6c] sm:$0xf] %vm994, %v957
      %1023 = vst.msk [vmem:[%s209 + $0x70] sm:$0xf] %vm994, %v958
      %1024 = vst.msk [vmem:[%s209 + $0x74] sm:$0xf] %vm994, %v959
      %1025 = vst.msk [vmem:[%s209 + $0x78] sm:$0xf] %vm994, %v960
      %1026 = vst.msk [vmem:[%s209 + $0x7c] sm:$0xf] %vm994, %v961
      %s1027 = smul.u32 32, %s16
      %p1028 = scmp.lt.s32.totalorder %s1027, 255
      %s1029 = scalar_select %p1028, %s1027, 255
      %s1030 = smul.addr %s1029, 4
      %s1031 = scalar_lea.vmem %s3, %s1030
      %p1032 = scmp.lt.s32.totalorder %s16, 7
      %s1033 = scalar_select %p1032, %s16, 7
      %s1034 = smul.addr %s1033, 2
      %s1035 = scalar_lea.vmem %s4, %s1034
      // Predicated region
      $region33: #{stream_down_apply.6} parent=31 // pred_check
        %p1036 = pneg %p102
      $region34: #{stream_down_apply.6} parent=31 // pred_check_branch
        %1038 = sbr.rel (%p1036) target = $region36
      $region35: #{stream_down_apply.6} parent=31 // pred_region
        %s1039 = smul.u32 32, %s16
      $region36: #{stream_down_apply.6} parent=31 // pred_fallthru
        _
      // Predicated region
      $region37: #{stream_down_apply.6} parent=31 // pred_check
        %p1040 = pneg %p128
      $region38: #{stream_down_apply.6} parent=31 // pred_check_branch
        %1042 = sbr.rel (%p1040) target = $region40
      $region39: #{stream_down_apply.6} parent=31 // pred_region
        _
      $region40: #{stream_down_apply.6} parent=31 // pred_fallthru
        _
    $region32: #{stream_down_apply.6} parent=5 // pred_fallthru
      _
    %p1043 = scmp.le.s32.totalorder 2, %s11
    // Predicated region
    $region41: #{stream_down_apply.6} parent=5 // pred_check
      %p1044 = pneg %p1043
    $region42: #{stream_down_apply.6} parent=5 // pred_check_branch
      %1046 = sbr.rel (%p1044) target = $region44
    $region43: #{stream_down_apply.6} parent=5 // pred_region
      %s1047 = ssub.s32 %s11, 2
      // Predicated region
      $region45: #{stream_down_apply.6} parent=43 // pred_check
        %p1048 = pneg %p108
      $region46: #{stream_down_apply.6} parent=43 // pred_check_branch
        %1050 = sbr.rel (%p1048) target = $region48
      $region47: #{stream_down_apply.6} parent=43 // pred_region
        %s1051 = smul.u32 32, %s17
        %p1052 = scmp.lt.s32.totalorder %s1051, 255
        %s1053 = scalar_select %p1052, %s1051, 255
        %s1054 = smul.addr %s1053, 4
        %s1055 = scalar_lea.vmem %s3, %s1054
      $region48: #{stream_down_apply.6} parent=43 // pred_fallthru
        _
      // Predicated region
      $region49: #{stream_down_apply.6} parent=43 // pred_check
        %p1056 = pneg %p134
      $region50: #{stream_down_apply.6} parent=43 // pred_check_branch
        %1058 = sbr.rel (%p1056) target = $region52
      $region51: #{stream_down_apply.6} parent=43 // pred_region
        %p1059 = scmp.lt.s32.totalorder %s17, 7
        %s1060 = scalar_select %p1059, %s17, 7
        %s1061 = smul.addr %s1060, 2
        %s1062 = scalar_lea.vmem %s4, %s1061
      $region52: #{stream_down_apply.6} parent=43 // pred_fallthru
        _
    $region44: #{stream_down_apply.6} parent=5 // pred_fallthru
      _
  $region6: #{stream_down_apply.6} parent=0 // loop_footer
    %s15 = sadd.s32 1, %s11
  $region7: #{stream_down_apply.6} parent=0 // loop_footer_branch
    %10 = sbr.rel target = $region3
  $region8: #{stream_down_apply.6} parent=0 // loop_exit
    _

// kernel: tile.26
$region0: #{tile.26}
  %s0 = inlined_call_operand.vmem [shape: f32[4,32], index: 0, kind: input, shape index: {}]
  %s1 = inlined_call_operand.vmem [shape: f32[1,128], index: 1, kind: output, shape index: {}]
  $region1: #{tile.26} parent=0
    #allocation0 [shape = 'u8[4096]{0}', space=vmem, size = 0x1000, scoped, tag = 'scoped mem for output reshape']
    #allocation1 [shape = 'u8[4096]{0}', space=vmem, size = 0x1000, scoped, tag = 'scoped mem for input reshape']
    %s3 = sshllo.u32 0, 4
    %v4 = vld [vmem:[%s0] sm:%s3]
    %5 = vst [vmem:[#allocation1] sm:%s3] %v4
    %v6 = vld [vmem:[#allocation1] sm:$0x1]
    %vm7 = vcmask 261120
    %8 = vst.msk [vmem:[#allocation0] sm:$0x1] %vm7, %v6
    %s9 = scalar_lea.vmem [#allocation1], 3
    %v10 = vld [vmem:[%s9] sm:$0x1]
    %11 = vrot.lane.b32.xlu0 %v10, 96
    %v12 = vpop.permute.xlu0 %11
    %vm13 = vcmask 1048320
    %14 = vst.msk [vmem:[#allocation0] sm:$0x1] %vm13, %v12
    %s15 = scalar_lea.vmem [#allocation1], 2
    %v16 = vld [vmem:[%s15] sm:$0x1]
    %17 = vrot.lane.b32.xlu0 %v16, 64
    %v18 = vpop.permute.xlu0 %17
    %vm19 = vcmask 785920
    %20 = vst.msk [vmem:[#allocation0] sm:$0x1] %vm19, %v18
    %s21 = scalar_lea.vmem [#allocation1], 1
    %v22 = vld [vmem:[%s21] sm:$0x1]
    %23 = vrot.lane.b32.xlu0 %v22, 32
    %v24 = vpop.permute.xlu0 %23
    %vm25 = vcmask 523520
    %26 = vst.msk [vmem:[#allocation0] sm:$0x1] %vm25, %v24
    %s28 = sshllo.u32 0, 1
    %v30 = vld [vmem:[#allocation0] sm:%s28]
    %s31 = sshllo.u32 0, 1
    %32 = vst [vmem:[%s1] sm:%s31] %v30

// kernel: stream_down_apply.7
$region0: #{stream_down_apply.7}
  #allocation0 [shape = 'u32[]', space=smem, size = 0x4, offset = 0x4, fixed_abs, tag = 'smem constant byte address 0x4 - core index']
  #allocation1 [shape = 'u32[144,128]{1,0:T(1,128)}', space=vmem, size = 0x12000, scoped, tag = 'internal scratch']
  %s0 = inlined_call_operand.vmem [shape: bf16[512,128], index: 0, kind: input, shape index: {}]
  %s1 = inlined_call_operand.vmem [shape: f32[1,128], index: 1, kind: input, shape index: {}]
  %s2 = inlined_call_operand.vmem [shape: f32[1,128], index: 2, kind: input, shape index: {}]
  %s3 = inlined_call_operand.vmem [shape: bf16[512,128], index: 3, kind: output, shape index: {}]
  %s4 = sld [smem:[#allocation0]]
  $region45: #{stream_down_apply.7} parent=0
    _
  %s6 = ssub.s32 1, %s4
  %s7 = scalar_select 0, %s6, %s4
  loop: start=0, step=1, limit=4
  $region2: #{stream_down_apply.7} parent=0 // loop_pre_header
    _
  $region3: #{stream_down_apply.7} parent=0 // loop_header
    %s9 = sphi 0, %s13
    %p10 = scmp.ge.s32.totalorder %s9, 4
    %s19 = sphi 0, %s21
    %s22 = sphi 0, %s19
    %s23 = sphi 0, %s22
    %s39 = sphi 0, %s23
    %s43 = sphi 0, %s43
    %s45 = sphi 0, %s43
    %s46 = sphi 0, %s45
    %s60 = sphi 0, %s46
    %s64 = sphi 0, %s64
    %s66 = sphi 0, %s64
    %s67 = sphi 0, %s66
    %s81 = sphi 0, %s67
    %s87 = sphi 0, %s89
    %s90 = sphi 0, %s87
    %s91 = sphi 0, %s90
    %s107 = sphi 0, %s91
  $region4: #{stream_down_apply.7} parent=0 // loop_header_branch
    %12 = sbr.rel (%p10) target = $region8
  $region5: #{stream_down_apply.7} parent=0 // loop_body
    %s14 = ssub.s32 %s9, 1
    %s15 = ssub.s32 %s9, 2
    %s16 = sadd.s32 %s9, 1
    %s17 = ssub.s32 %s9, %s16
    %p18 = scmp.eq.s32.totalorder %s17, 0
    %s20 = sadd.s32 %s19, 1
    %s21 = scalar_select %p18, %s19, %s20
    %p24 = pneg %p18
    %p25 = scmp.eq.s32.totalorder %s9, 1
    %p26 = por %p24, %p25
    %p27 = scmp.ne.s32.totalorder %s19, %s22
    %p28 = scmp.eq.s32.totalorder %s9, 0
    %p29 = por %p27, %p28
    %p30 = scmp.ne.s32.totalorder %s19, %s22
    %p31 = scmp.eq.s32.totalorder %s14, 1
    %p32 = por %p30, %p31
    %p33 = scmp.ne.s32.totalorder %s22, %s23
    %p34 = scmp.eq.s32.totalorder %s14, 0
    %p35 = por %p33, %p34
    %p36 = scmp.ne.s32.totalorder %s22, %s23
    %p37 = scmp.eq.s32.totalorder %s15, 1
    %p38 = por %p36, %p37
    %p40 = scmp.ne.s32.totalorder %s23, %s39
    %p41 = scmp.eq.s32.totalorder %s15, 0
    %p42 = por %p40, %p41
    %s44 = sadd.s32 %s43, 1
    %p47 = scmp.eq.s32.totalorder %s9, 1
    %p48 = scmp.ne.s32.totalorder %s43, %s45
    %p49 = scmp.eq.s32.totalorder %s9, 0
    %p50 = por %p48, %p49
    %p51 = scmp.ne.s32.totalorder %s43, %s45
    %p52 = scmp.eq.s32.totalorder %s14, 1
    %p53 = por %p51, %p52
    %p54 = scmp.ne.s32.totalorder %s45, %s46
    %p55 = scmp.eq.s32.totalorder %s14, 0
    %p56 = por %p54, %p55
    %p57 = scmp.ne.s32.totalorder %s45, %s46
    %p58 = scmp.eq.s32.totalorder %s15, 1
    %p59 = por %p57, %p58
    %p61 = scmp.ne.s32.totalorder %s46, %s60
    %p62 = scmp.eq.s32.totalorder %s15, 0
    %p63 = por %p61, %p62
    %s65 = sadd.s32 %s64, 1
    %p68 = scmp.eq.s32.totalorder %s9, 1
    %p69 = scmp.ne.s32.totalorder %s64, %s66
    %p70 = scmp.eq.s32.totalorder %s9, 0
    %p71 = por %p69, %p70
    %p72 = scmp.ne.s32.totalorder %s64, %s66
    %p73 = scmp.eq.s32.totalorder %s14, 1
    %p74 = por %p72, %p73
    %p75 = scmp.ne.s32.totalorder %s66, %s67
    %p76 = scmp.eq.s32.totalorder %s14, 0
    %p77 = por %p75, %p76
    %p78 = scmp.ne.s32.totalorder %s66, %s67
    %p79 = scmp.eq.s32.totalorder %s15, 1
    %p80 = por %p78, %p79
    %p82 = scmp.ne.s32.totalorder %s67, %s81
    %p83 = scmp.eq.s32.totalorder %s15, 0
    %p84 = por %p82, %p83
    %s85 = ssub.s32 %s9, %s16
    %p86 = scmp.eq.s32.totalorder %s85, 0
    %s88 = sadd.s32 %s87, 1
    %s89 = scalar_select %p86, %s87, %s88
    %p92 = pneg %p86
    %p93 = scmp.eq.s32.totalorder %s9, 1
    %p94 = por %p92, %p93
    %p95 = scmp.ne.s32.totalorder %s87, %s90
    %p96 = scmp.eq.s32.totalorder %s9, 0
    %p97 = por %p95, %p96
    %p98 = scmp.ne.s32.totalorder %s87, %s90
    %p99 = scmp.eq.s32.totalorder %s14, 1
    %p100 = por %p98, %p99
    %p101 = scmp.ne.s32.totalorder %s90, %s91
    %p102 = scmp.eq.s32.totalorder %s14, 0
    %p103 = por %p101, %p102
    %p104 = scmp.ne.s32.totalorder %s90, %s91
    %p105 = scmp.eq.s32.totalorder %s15, 1
    %p106 = por %p104, %p105
    %p108 = scmp.ne.s32.totalorder %s91, %s107
    %p109 = scmp.eq.s32.totalorder %s15, 0
    %p110 = por %p108, %p109
    %p111 = scmp.le.s32.totalorder 1, %s9
    %p112 = scmp.lt.s32.totalorder %s9, 3
    %p113 = pnand %p111, %p112
    %p114 = pneg %p113
    // Predicated region
    $region9: #{stream_down_apply.7} parent=5 // pred_check
      _
    $region10: #{stream_down_apply.7} parent=5 // pred_check_branch
      %116 = sbr.rel (%p113) target = $region12
    $region11: #{stream_down_apply.7} parent=5 // pred_region
      %s117 = ssub.s32 %s9, 1
      // Predicated region
      $region13: #{stream_down_apply.7} parent=11 // pred_check
        %p118 = pneg %p56
      $region14: #{stream_down_apply.7} parent=11 // pred_check_branch
        %120 = sbr.rel (%p118) target = $region16
      $region15: #{stream_down_apply.7} parent=11 // pred_region
        _
      $region16: #{stream_down_apply.7} parent=11 // pred_fallthru
        _
      // Predicated region
      $region17: #{stream_down_apply.7} parent=11 // pred_check
        %p121 = pneg %p77
      $region18: #{stream_down_apply.7} parent=11 // pred_check_branch
        %123 = sbr.rel (%p121) target = $region20
      $region19: #{stream_down_apply.7} parent=11 // pred_region
        _
      $region20: #{stream_down_apply.7} parent=11 // pred_fallthru
        _
    $region12: #{stream_down_apply.7} parent=5 // pred_fallthru
      _
    %p124 = scmp.lt.s32.totalorder %s9, 2
    // Predicated region
    $region21: #{stream_down_apply.7} parent=5 // pred_check
      %p125 = pneg %p124
    $region22: #{stream_down_apply.7} parent=5 // pred_check_branch
      %127 = sbr.rel (%p125) target = $region24
    $region23: #{stream_down_apply.7} parent=5 // pred_region
      // Predicated region
      $region25: #{stream_down_apply.7} parent=23 // pred_check
        %p128 = pneg %p29
      $region26: #{stream_down_apply.7} parent=23 // pred_check_branch
        %130 = sbr.rel (%p128) target = $region28
      $region27: #{stream_down_apply.7} parent=23 // pred_region
        %s131 = smul.u32 32, %s9
        %p132 = scmp.lt.s32.totalorder %s131, 63
        %s133 = scalar_select %p132, %s131, 63
        %s134 = smul.addr %s133, 4
        %s135 = scalar_lea.vmem %s0, %s134
        %s136 = smul.u32 32, %s9
      $region28: #{stream_down_apply.7} parent=23 // pred_fallthru
        _
    $region24: #{stream_down_apply.7} parent=5 // pred_fallthru
      _
    %p137 = scmp.le.s32.totalorder 1, %s9
    %p138 = scmp.lt.s32.totalorder %s9, 3
    %p139 = pnand %p137, %p138
    %p140 = pneg %p139
    // Predicated region
    $region29: #{stream_down_apply.7} parent=5 // pred_check
      _
    $region30: #{stream_down_apply.7} parent=5 // pred_check_branch
      %142 = sbr.rel (%p139) target = $region32
    $region31: #{stream_down_apply.7} parent=5 // pred_region
      %s143 = ssub.s32 %s9, 1
      %s144 = smul.u32 32, %s14
      %p145 = scmp.lt.s32.totalorder %s144, 63
      %s146 = scalar_select %p145, %s144, 63
      %s147 = smul.addr %s146, 4
      %s148 = scalar_lea.vmem %s0, %s147
      %p149 = pneg %p35
      %p150 = pneg %p32
      %p151 = pneg %p56
      %p152 = pneg %p53
      %p153 = pneg %p77
      %p154 = pneg %p74
      %p155 = pneg %p103
      %p156 = pneg %p100
      %s157 = smul.u32 32, %s14
      %p158 = scmp.lt.s32.totalorder %s157, 63
      %s159 = scalar_select %p158, %s157, 63
      %s160 = smul.addr %s159, 4
      %s161 = scalar_lea.vmem %s3, %s160
      %s162 = smul.u32 32, %s14
      %p163 = scmp.lt.s32.totalorder %s162, 63
      %s164 = scalar_select %p163, %s162, 63
      %s165 = smul.addr %s164, 4
      %s166 = scalar_lea.vmem %s0, %s165
      %s167 = smul.u32 32, %s14
      %s168 = smul.u32 32, %s14
      %p169 = scmp.lt.s32.totalorder %s168, 63
      %s170 = scalar_select %p169, %s168, 63
      %s171 = smul.addr %s170, 4
      %s172 = scalar_lea.vmem %s3, %s171
      %s173 = smul.u32 32, %s14
      %v174 = vld [vmem:[%s166] sm:$0xf]
      %v175 = vld [vmem:[%s166 + $0x4] sm:$0xf]
      %v176 = vld [vmem:[%s166 + $0x8] sm:$0xf]
      %v177 = vld [vmem:[%s166 + $0xc] sm:$0xf]
      %v178 = vld [vmem:[%s166 + $0x10] sm:$0xf]
      %v179 = vld [vmem:[%s166 + $0x14] sm:$0xf]
      %v180 = vld [vmem:[%s166 + $0x18] sm:$0xf]
      %v181 = vld [vmem:[%s166 + $0x1c] sm:$0xf]
      %v182 = vld [vmem:[%s166 + $0x20] sm:$0xf]
      %v183 = vld [vmem:[%s166 + $0x24] sm:$0xf]
      %v184 = vld [vmem:[%s166 + $0x28] sm:$0xf]
      %v185 = vld [vmem:[%s166 + $0x2c] sm:$0xf]
      %v186 = vld [vmem:[%s166 + $0x30] sm:$0xf]
      %v187 = vld [vmem:[%s166 + $0x34] sm:$0xf]
      %v188 = vld [vmem:[%s166 + $0x38] sm:$0xf]
      %v189 = vld [vmem:[%s166 + $0x3c] sm:$0xf]
      %v190 = vld [vmem:[%s166 + $0x40] sm:$0xf]
      %v191 = vld [vmem:[%s166 + $0x44] sm:$0xf]
      %v192 = vld [vmem:[%s166 + $0x48] sm:$0xf]
      %v193 = vld [vmem:[%s166 + $0x4c] sm:$0xf]
      %v194 = vld [vmem:[%s166 + $0x50] sm:$0xf]
      %v195 = vld [vmem:[%s166 + $0x54] sm:$0xf]
      %v196 = vld [vmem:[%s166 + $0x58] sm:$0xf]
      %v197 = vld [vmem:[%s166 + $0x5c] sm:$0xf]
      %v198 = vld [vmem:[%s166 + $0x60] sm:$0xf]
      %v199 = vld [vmem:[%s166 + $0x64] sm:$0xf]
      %v200 = vld [vmem:[%s166 + $0x68] sm:$0xf]
      %v201 = vld [vmem:[%s166 + $0x6c] sm:$0xf]
      %v202 = vld [vmem:[%s166 + $0x70] sm:$0xf]
      %v203 = vld [vmem:[%s166 + $0x74] sm:$0xf]
      %v204 = vld [vmem:[%s166 + $0x78] sm:$0xf]
      %v205 = vld [vmem:[%s166 + $0x7c] sm:$0xf]
      %v206 = vunpack.c.l.bf16 %v174
      %v207 = vunpack.c.l.bf16 %v175
      %v208 = vunpack.c.l.bf16 %v176
      %v209 = vunpack.c.l.bf16 %v177
      %v210 = vunpack.c.l.bf16 %v178
      %v211 = vunpack.c.l.bf16 %v179
      %v212 = vunpack.c.l.bf16 %v180
      %v213 = vunpack.c.l.bf16 %v181
      %v214 = vunpack.c.l.bf16 %v182
      %v215 = vunpack.c.l.bf16 %v183
      %v216 = vunpack.c.l.bf16 %v184
      %v217 = vunpack.c.l.bf16 %v185
      %v218 = vunpack.c.l.bf16 %v186
      %v219 = vunpack.c.l.bf16 %v187
      %v220 = vunpack.c.l.bf16 %v188
      %v221 = vunpack.c.l.bf16 %v189
      %v222 = vunpack.c.l.bf16 %v190
      %v223 = vunpack.c.l.bf16 %v191
      %v224 = vunpack.c.l.bf16 %v192
      %v225 = vunpack.c.l.bf16 %v193
      %v226 = vunpack.c.l.bf16 %v194
      %v227 = vunpack.c.l.bf16 %v195
      %v228 = vunpack.c.l.bf16 %v196
      %v229 = vunpack.c.l.bf16 %v197
      %v230 = vunpack.c.l.bf16 %v198
      %v231 = vunpack.c.l.bf16 %v199
      %v232 = vunpack.c.l.bf16 %v200
      %v233 = vunpack.c.l.bf16 %v201
      %v234 = vunpack.c.l.bf16 %v202
      %v235 = vunpack.c.l.bf16 %v203
      %v236 = vunpack.c.l.bf16 %v204
      %v237 = vunpack.c.l.bf16 %v205
      %v238 = vld [vmem:[%s1] sm:$0x1]
      %v240 = vlaneseq
      %v241 = vshrl.u32 %v240, 7
      %v242 = vsub.s32 0, %v241
      %v243 = vrot.slane %v238, %v242
      %v245 = vmul.f32 %v206, %v243
      %v246 = vmul.f32 %v207, %v243
      %v247 = vmul.f32 %v208, %v243
      %v248 = vmul.f32 %v209, %v243
      %v249 = vmul.f32 %v210, %v243
      %v250 = vmul.f32 %v211, %v243
      %v251 = vmul.f32 %v212, %v243
      %v252 = vmul.f32 %v213, %v243
      %v253 = vmul.f32 %v214, %v243
      %v254 = vmul.f32 %v215, %v243
      %v255 = vmul.f32 %v216, %v243
      %v256 = vmul.f32 %v217, %v243
      %v257 = vmul.f32 %v218, %v243
      %v258 = vmul.f32 %v219, %v243
      %v259 = vmul.f32 %v220, %v243
      %v260 = vmul.f32 %v221, %v243
      %v261 = vmul.f32 %v222, %v243
      %v262 = vmul.f32 %v223, %v243
      %v263 = vmul.f32 %v224, %v243
      %v264 = vmul.f32 %v225, %v243
      %v265 = vmul.f32 %v226, %v243
      %v266 = vmul.f32 %v227, %v243
      %v267 = vmul.f32 %v228, %v243
      %v268 = vmul.f32 %v229, %v243
      %v269 = vmul.f32 %v230, %v243
      %v270 = vmul.f32 %v231, %v243
      %v271 = vmul.f32 %v232, %v243
      %v272 = vmul.f32 %v233, %v243
      %v273 = vmul.f32 %v234, %v243
      %v274 = vmul.f32 %v235, %v243
      %v275 = vmul.f32 %v236, %v243
      %v276 = vmul.f32 %v237, %v243
      %v277 = vld [vmem:[%s2] sm:$0x1]
      %v279 = vlaneseq
      %v280 = vshrl.u32 %v279, 7
      %v281 = vsub.s32 0, %v280
      %v282 = vrot.slane %v277, %v281
      %v284 = vadd.f32 %v245, %v282
      %v285 = vadd.f32 %v246, %v282
      %v286 = vadd.f32 %v247, %v282
      %v287 = vadd.f32 %v248, %v282
      %v288 = vadd.f32 %v249, %v282
      %v289 = vadd.f32 %v250, %v282
      %v290 = vadd.f32 %v251, %v282
      %v291 = vadd.f32 %v252, %v282
      %v292 = vadd.f32 %v253, %v282
      %v293 = vadd.f32 %v254, %v282
      %v294 = vadd.f32 %v255, %v282
      %v295 = vadd.f32 %v256, %v282
      %v296 = vadd.f32 %v257, %v282
      %v297 = vadd.f32 %v258, %v282
      %v298 = vadd.f32 %v259, %v282
      %v299 = vadd.f32 %v260, %v282
      %v300 = vadd.f32 %v261, %v282
      %v301 = vadd.f32 %v262, %v282
      %v302 = vadd.f32 %v263, %v282
      %v303 = vadd.f32 %v264, %v282
      %v304 = vadd.f32 %v265, %v282
      %v305 = vadd.f32 %v266, %v282
      %v306 = vadd.f32 %v267, %v282
      %v307 = vadd.f32 %v268, %v282
      %v308 = vadd.f32 %v269, %v282
      %v309 = vadd.f32 %v270, %v282
      %v310 = vadd.f32 %v271, %v282
      %v311 = vadd.f32 %v272, %v282
      %v312 = vadd.f32 %v273, %v282
      %v313 = vadd.f32 %v274, %v282
      %v314 = vadd.f32 %v275, %v282
      %v315 = vadd.f32 %v276, %v282
      %v316 = vmax.f32 %v284, 0.0
      %v317 = vmax.f32 %v285, 0.0
      %v318 = vmax.f32 %v286, 0.0
      %v319 = vmax.f32 %v287, 0.0
      %v320 = vmax.f32 %v288, 0.0
      %v321 = vmax.f32 %v289, 0.0
      %v322 = vmax.f32 %v290, 0.0
      %v323 = vmax.f32 %v291, 0.0
      %v324 = vmax.f32 %v292, 0.0
      %v325 = vmax.f32 %v293, 0.0
      %v326 = vmax.f32 %v294, 0.0
      %v327 = vmax.f32 %v295, 0.0
      %v328 = vmax.f32 %v296, 0.0
      %v329 = vmax.f32 %v297, 0.0
      %v330 = vmax.f32 %v298, 0.0
      %v331 = vmax.f32 %v299, 0.0
      %v332 = vmax.f32 %v300, 0.0
      %v333 = vmax.f32 %v301, 0.0
      %v334 = vmax.f32 %v302, 0.0
      %v335 = vmax.f32 %v303, 0.0
      %v336 = vmax.f32 %v304, 0.0
      %v337 = vmax.f32 %v305, 0.0
      %v338 = vmax.f32 %v306, 0.0
      %v339 = vmax.f32 %v307, 0.0
      %v340 = vmax.f32 %v308, 0.0
      %v341 = vmax.f32 %v309, 0.0
      %v342 = vmax.f32 %v310, 0.0
      %v343 = vmax.f32 %v311, 0.0
      %v344 = vmax.f32 %v312, 0.0
      %v345 = vmax.f32 %v313, 0.0
      %v346 = vmax.f32 %v314, 0.0
      %v347 = vmax.f32 %v315, 0.0
      %v348 = vpack.c.bf16 %v317, %v316
      %v349 = vpack.c.bf16 %v319, %v318
      %v350 = vpack.c.bf16 %v321, %v320
      %v351 = vpack.c.bf16 %v323, %v322
      %v352 = vpack.c.bf16 %v325, %v324
      %v353 = vpack.c.bf16 %v327, %v326
      %v354 = vpack.c.bf16 %v329, %v328
      %v355 = vpack.c.bf16 %v331, %v330
      %v356 = vpack.c.bf16 %v333, %v332
      %v357 = vpack.c.bf16 %v335, %v334
      %v358 = vpack.c.bf16 %v337, %v336
      %v359 = vpack.c.bf16 %v339, %v338
      %v360 = vpack.c.bf16 %v341, %v340
      %v361 = vpack.c.bf16 %v343, %v342
      %v362 = vpack.c.bf16 %v345, %v344
      %v363 = vpack.c.bf16 %v347, %v346
      %v380 = vunpack.c.l.b16 %v348
      %v381 = vunpack.c.h.b16 %v348
      %v382 = vunpack.c.l.b16 %v349
      %v383 = vunpack.c.h.b16 %v349
      %v384 = vunpack.c.l.b16 %v350
      %v385 = vunpack.c.h.b16 %v350
      %v386 = vunpack.c.l.b16 %v351
      %v387 = vunpack.c.h.b16 %v351
      %v388 = vunpack.c.l.b16 %v352
      %v389 = vunpack.c.h.b16 %v352
      %v390 = vunpack.c.l.b16 %v353
      %v391 = vunpack.c.h.b16 %v353
      %v392 = vunpack.c.l.b16 %v354
      %v393 = vunpack.c.h.b16 %v354
      %v394 = vunpack.c.l.b16 %v355
      %v395 = vunpack.c.h.b16 %v355
      %v396 = vunpack.c.l.b16 %v356
      %v397 = vunpack.c.h.b16 %v356
      %v398 = vunpack.c.l.b16 %v357
      %v399 = vunpack.c.h.b16 %v357
      %v400 = vunpack.c.l.b16 %v358
      %v401 = vunpack.c.h.b16 %v358
      %v402 = vunpack.c.l.b16 %v359
      %v403 = vunpack.c.h.b16 %v359
      %v404 = vunpack.c.l.b16 %v360
      %v405 = vunpack.c.h.b16 %v360
      %v406 = vunpack.c.l.b16 %v361
      %v407 = vunpack.c.h.b16 %v361
      %v408 = vunpack.c.l.b16 %v362
      %v409 = vunpack.c.h.b16 %v362
      %v410 = vunpack.c.l.b16 %v363
      %v411 = vunpack.c.h.b16 %v363
      %v412 = vpack.c.b16 %v380, %v380
      %v413 = vpack.c.b16 %v381, %v381
      %v414 = vpack.c.b16 %v382, %v382
      %v415 = vpack.c.b16 %v383, %v383
      %v416 = vpack.c.b16 %v384, %v384
      %v417 = vpack.c.b16 %v385, %v385
      %v418 = vpack.c.b16 %v386, %v386
      %v419 = vpack.c.b16 %v387, %v387
      %v420 = vpack.c.b16 %v388, %v388
      %v421 = vpack.c.b16 %v389, %v389
      %v422 = vpack.c.b16 %v390, %v390
      %v423 = vpack.c.b16 %v391, %v391
      %v424 = vpack.c.b16 %v392, %v392
      %v425 = vpack.c.b16 %v393, %v393
      %v426 = vpack.c.b16 %v394, %v394
      %v427 = vpack.c.b16 %v395, %v395
      %v428 = vpack.c.b16 %v396, %v396
      %v429 = vpack.c.b16 %v397, %v397
      %v430 = vpack.c.b16 %v398, %v398
      %v431 = vpack.c.b16 %v399, %v399
      %v432 = vpack.c.b16 %v400, %v400
      %v433 = vpack.c.b16 %v401, %v401
      %v434 = vpack.c.b16 %v402, %v402
      %v435 = vpack.c.b16 %v403, %v403
      %v436 = vpack.c.b16 %v404, %v404
      %v437 = vpack.c.b16 %v405, %v405
      %v438 = vpack.c.b16 %v406, %v406
      %v439 = vpack.c.b16 %v407, %v407
      %v440 = vpack.c.b16 %v408, %v408
      %v441 = vpack.c.b16 %v409, %v409
      %v442 = vpack.c.b16 %v410, %v410
      %v443 = vpack.c.b16 %v411, %v411
      %476 = vst [vmem:[%s172] sm:$0xf] %v412
      %477 = vst [vmem:[%s172 + $0x4] sm:$0xf] %v413
      %478 = vst [vmem:[%s172 + $0x8] sm:$0xf] %v414
      %479 = vst [vmem:[%s172 + $0xc] sm:$0xf] %v415
      %480 = vst [vmem:[%s172 + $0x10] sm:$0xf] %v416
      %481 = vst [vmem:[%s172 + $0x14] sm:$0xf] %v417
      %482 = vst [vmem:[%s172 + $0x18] sm:$0xf] %v418
      %483 = vst [vmem:[%s172 + $0x1c] sm:$0xf] %v419
      %484 = vst [vmem:[%s172 + $0x20] sm:$0xf] %v420
      %485 = vst [vmem:[%s172 + $0x24] sm:$0xf] %v421
      %486 = vst [vmem:[%s172 + $0x28] sm:$0xf] %v422
      %487 = vst [vmem:[%s172 + $0x2c] sm:$0xf] %v423
      %488 = vst [vmem:[%s172 + $0x30] sm:$0xf] %v424
      %489 = vst [vmem:[%s172 + $0x34] sm:$0xf] %v425
      %490 = vst [vmem:[%s172 + $0x38] sm:$0xf] %v426
      %491 = vst [vmem:[%s172 + $0x3c] sm:$0xf] %v427
      %492 = vst [vmem:[%s172 + $0x40] sm:$0xf] %v428
      %493 = vst [vmem:[%s172 + $0x44] sm:$0xf] %v429
      %494 = vst [vmem:[%s172 + $0x48] sm:$0xf] %v430
      %495 = vst [vmem:[%s172 + $0x4c] sm:$0xf] %v431
      %496 = vst [vmem:[%s172 + $0x50] sm:$0xf] %v432
      %497 = vst [vmem:[%s172 + $0x54] sm:$0xf] %v433
      %498 = vst [vmem:[%s172 + $0x58] sm:$0xf] %v434
      %499 = vst [vmem:[%s172 + $0x5c] sm:$0xf] %v435
      %500 = vst [vmem:[%s172 + $0x60] sm:$0xf] %v436
      %501 = vst [vmem:[%s172 + $0x64] sm:$0xf] %v437
      %502 = vst [vmem:[%s172 + $0x68] sm:$0xf] %v438
      %503 = vst [vmem:[%s172 + $0x6c] sm:$0xf] %v439
      %504 = vst [vmem:[%s172 + $0x70] sm:$0xf] %v440
      %505 = vst [vmem:[%s172 + $0x74] sm:$0xf] %v441
      %506 = vst [vmem:[%s172 + $0x78] sm:$0xf] %v442
      %507 = vst [vmem:[%s172 + $0x7c] sm:$0xf] %v443
      %s508 = smul.u32 32, %s14
      %p509 = scmp.lt.s32.totalorder %s508, 63
      %s510 = scalar_select %p509, %s508, 63
      %s511 = smul.addr %s510, 4
      %s512 = scalar_lea.vmem %s3, %s511
      // Predicated region
      $region33: #{stream_down_apply.7} parent=31 // pred_check
        %p513 = pneg %p100
      $region34: #{stream_down_apply.7} parent=31 // pred_check_branch
        %515 = sbr.rel (%p513) target = $region36
      $region35: #{stream_down_apply.7} parent=31 // pred_region
        %s516 = smul.u32 32, %s14
      $region36: #{stream_down_apply.7} parent=31 // pred_fallthru
        _
    $region32: #{stream_down_apply.7} parent=5 // pred_fallthru
      _
    %p517 = scmp.le.s32.totalorder 2, %s9
    // Predicated region
    $region37: #{stream_down_apply.7} parent=5 // pred_check
      %p518 = pneg %p517
    $region38: #{stream_down_apply.7} parent=5 // pred_check_branch
      %520 = sbr.rel (%p518) target = $region40
    $region39: #{stream_down_apply.7} parent=5 // pred_region
      %s521 = ssub.s32 %s9, 2
      // Predicated region
      $region41: #{stream_down_apply.7} parent=39 // pred_check
        %p522 = pneg %p106
      $region42: #{stream_down_apply.7} parent=39 // pred_check_branch
        %524 = sbr.rel (%p522) target = $region44
      $region43: #{stream_down_apply.7} parent=39 // pred_region
        %s525 = smul.u32 32, %s15
        %p526 = scmp.lt.s32.totalorder %s525, 63
        %s527 = scalar_select %p526, %s525, 63
        %s528 = smul.addr %s527, 4
        %s529 = scalar_lea.vmem %s3, %s528
      $region44: #{stream_down_apply.7} parent=39 // pred_fallthru
        _
    $region40: #{stream_down_apply.7} parent=5 // pred_fallthru
      _
  $region6: #{stream_down_apply.7} parent=0 // loop_footer
    %s13 = sadd.s32 1, %s9
  $region7: #{stream_down_apply.7} parent=0 // loop_footer_branch
    %8 = sbr.rel target = $region3
  $region8: #{stream_down_apply.7} parent=0 // loop_exit
    _

// kernel: stream_down_apply.8
$region0: #{stream_down_apply.8}
  #allocation0 [shape = 'u32[]', space=smem, size = 0x4, offset = 0x4, fixed_abs, tag = 'smem constant byte address 0x4 - core index']
  #allocation1 [shape = 'u32[144,128]{1,0:T(1,128)}', space=vmem, size = 0x12000, scoped, tag = 'internal scratch']
  %s0 = inlined_call_operand.vmem [shape: bf16[512,288], index: 0, kind: input, shape index: {}]
  %s1 = inlined_call_operand.vmem [shape: bf16[288,64], index: 1, kind: input, shape index: {}]
  %s2 = inlined_call_operand.vmem [shape: f32[1,64], index: 2, kind: input, shape index: {}]
  %s3 = inlined_call_operand.vmem [shape: bf16[512,64], index: 3, kind: output, shape index: {0}]
  %s4 = inlined_call_operand.vmem [shape: f32[2,2,64], index: 4, kind: output, shape index: {1}]
  %5 = xla_tuple %s3, %s4
  %s6 = sld [smem:[#allocation0]]
  $region53: #{stream_down_apply.8} parent=0
    _
  %s8 = ssub.s32 1, %s6
  %s9 = scalar_select 0, %s8, %s6
  loop: start=0, step=1, limit=4
  $region2: #{stream_down_apply.8} parent=0 // loop_pre_header
    _
  $region3: #{stream_down_apply.8} parent=0 // loop_header
    %s11 = sphi 0, %s15
    %p12 = scmp.ge.s32.totalorder %s11, 4
    %s21 = sphi 0, %s23
    %s24 = sphi 0, %s21
    %s25 = sphi 0, %s24
    %s41 = sphi 0, %s25
    %s45 = sphi 0, %s45
    %s47 = sphi 0, %s45
    %s48 = sphi 0, %s47
    %s62 = sphi 0, %s48
    %s66 = sphi 0, %s66
    %s68 = sphi 0, %s66
    %s69 = sphi 0, %s68
    %s83 = sphi 0, %s69
    %s89 = sphi 0, %s91
    %s92 = sphi 0, %s89
    %s93 = sphi 0, %s92
    %s109 = sphi 0, %s93
    %s115 = sphi 0, %s117
    %s118 = sphi 0, %s115
    %s119 = sphi 0, %s118
    %s135 = sphi 0, %s119
  $region4: #{stream_down_apply.8} parent=0 // loop_header_branch
    %14 = sbr.rel (%p12) target = $region8
  $region5: #{stream_down_apply.8} parent=0 // loop_body
    %s16 = ssub.s32 %s11, 1
    %s17 = ssub.s32 %s11, 2
    %s18 = sadd.s32 %s11, 1
    %s19 = ssub.s32 %s11, %s18
    %p20 = scmp.eq.s32.totalorder %s19, 0
    %s22 = sadd.s32 %s21, 1
    %s23 = scalar_select %p20, %s21, %s22
    %p26 = pneg %p20
    %p27 = scmp.eq.s32.totalorder %s11, 1
    %p28 = por %p26, %p27
    %p29 = scmp.ne.s32.totalorder %s21, %s24
    %p30 = scmp.eq.s32.totalorder %s11, 0
    %p31 = por %p29, %p30
    %p32 = scmp.ne.s32.totalorder %s21, %s24
    %p33 = scmp.eq.s32.totalorder %s16, 1
    %p34 = por %p32, %p33
    %p35 = scmp.ne.s32.totalorder %s24, %s25
    %p36 = scmp.eq.s32.totalorder %s16, 0
    %p37 = por %p35, %p36
    %p38 = scmp.ne.s32.totalorder %s24, %s25
    %p39 = scmp.eq.s32.totalorder %s17, 1
    %p40 = por %p38, %p39
    %p42 = scmp.ne.s32.totalorder %s25, %s41
    %p43 = scmp.eq.s32.totalorder %s17, 0
    %p44 = por %p42, %p43
    %s46 = sadd.s32 %s45, 1
    %p49 = scmp.eq.s32.totalorder %s11, 1
    %p50 = scmp.ne.s32.totalorder %s45, %s47
    %p51 = scmp.eq.s32.totalorder %s11, 0
    %p52 = por %p50, %p51
    %p53 = scmp.ne.s32.totalorder %s45, %s47
    %p54 = scmp.eq.s32.totalorder %s16, 1
    %p55 = por %p53, %p54
    %p56 = scmp.ne.s32.totalorder %s47, %s48
    %p57 = scmp.eq.s32.totalorder %s16, 0
    %p58 = por %p56, %p57
    %p59 = scmp.ne.s32.totalorder %s47, %s48
    %p60 = scmp.eq.s32.totalorder %s17, 1
    %p61 = por %p59, %p60
    %p63 = scmp.ne.s32.totalorder %s48, %s62
    %p64 = scmp.eq.s32.totalorder %s17, 0
    %p65 = por %p63, %p64
    %s67 = sadd.s32 %s66, 1
    %p70 = scmp.eq.s32.totalorder %s11, 1
    %p71 = scmp.ne.s32.totalorder %s66, %s68
    %p72 = scmp.eq.s32.totalorder %s11, 0
    %p73 = por %p71, %p72
    %p74 = scmp.ne.s32.totalorder %s66, %s68
    %p75 = scmp.eq.s32.totalorder %s16, 1
    %p76 = por %p74, %p75
    %p77 = scmp.ne.s32.totalorder %s68, %s69
    %p78 = scmp.eq.s32.totalorder %s16, 0
    %p79 = por %p77, %p78
    %p80 = scmp.ne.s32.totalorder %s68, %s69
    %p81 = scmp.eq.s32.totalorder %s17, 1
    %p82 = por %p80, %p81
    %p84 = scmp.ne.s32.totalorder %s69, %s83
    %p85 = scmp.eq.s32.totalorder %s17, 0
    %p86 = por %p84, %p85
    %s87 = ssub.s32 %s11, %s18
    %p88 = scmp.eq.s32.totalorder %s87, 0
    %s90 = sadd.s32 %s89, 1
    %s91 = scalar_select %p88, %s89, %s90
    %p94 = pneg %p88
    %p95 = scmp.eq.s32.totalorder %s11, 1
    %p96 = por %p94, %p95
    %p97 = scmp.ne.s32.totalorder %s89, %s92
    %p98 = scmp.eq.s32.totalorder %s11, 0
    %p99 = por %p97, %p98
    %p100 = scmp.ne.s32.totalorder %s89, %s92
    %p101 = scmp.eq.s32.totalorder %s16, 1
    %p102 = por %p100, %p101
    %p103 = scmp.ne.s32.totalorder %s92, %s93
    %p104 = scmp.eq.s32.totalorder %s16, 0
    %p105 = por %p103, %p104
    %p106 = scmp.ne.s32.totalorder %s92, %s93
    %p107 = scmp.eq.s32.totalorder %s17, 1
    %p108 = por %p106, %p107
    %p110 = scmp.ne.s32.totalorder %s93, %s109
    %p111 = scmp.eq.s32.totalorder %s17, 0
    %p112 = por %p110, %p111
    %s113 = ssub.s32 %s11, %s18
    %p114 = scmp.eq.s32.totalorder %s113, 0
    %s116 = sadd.s32 %s115, 1
    %s117 = scalar_select %p114, %s115, %s116
    %p120 = pneg %p114
    %p121 = scmp.eq.s32.totalorder %s11, 1
    %p122 = por %p120, %p121
    %p123 = scmp.ne.s32.totalorder %s115, %s118
    %p124 = scmp.eq.s32.totalorder %s11, 0
    %p125 = por %p123, %p124
    %p126 = scmp.ne.s32.totalorder %s115, %s118
    %p127 = scmp.eq.s32.totalorder %s16, 1
    %p128 = por %p126, %p127
    %p129 = scmp.ne.s32.totalorder %s118, %s119
    %p130 = scmp.eq.s32.totalorder %s16, 0
    %p131 = por %p129, %p130
    %p132 = scmp.ne.s32.totalorder %s118, %s119
    %p133 = scmp.eq.s32.totalorder %s17, 1
    %p134 = por %p132, %p133
    %p136 = scmp.ne.s32.totalorder %s119, %s135
    %p137 = scmp.eq.s32.totalorder %s17, 0
    %p138 = por %p136, %p137
    %p139 = scmp.le.s32.totalorder 1, %s11
    %p140 = scmp.lt.s32.totalorder %s11, 3
    %p141 = pnand %p139, %p140
    %p142 = pneg %p141
    // Predicated region
    $region9: #{stream_down_apply.8} parent=5 // pred_check
      _
    $region10: #{stream_down_apply.8} parent=5 // pred_check_branch
      %144 = sbr.rel (%p141) target = $region12
    $region11: #{stream_down_apply.8} parent=5 // pred_region
      %s145 = ssub.s32 %s11, 1
      // Predicated region
      $region13: #{stream_down_apply.8} parent=11 // pred_check
        %p146 = pneg %p58
      $region14: #{stream_down_apply.8} parent=11 // pred_check_branch
        %148 = sbr.rel (%p146) target = $region16
      $region15: #{stream_down_apply.8} parent=11 // pred_region
        _
      $region16: #{stream_down_apply.8} parent=11 // pred_fallthru
        _
      // Predicated region
      $region17: #{stream_down_apply.8} parent=11 // pred_check
        %p149 = pneg %p79
      $region18: #{stream_down_apply.8} parent=11 // pred_check_branch
        %151 = sbr.rel (%p149) target = $region20
      $region19: #{stream_down_apply.8} parent=11 // pred_region
        _
      $region20: #{stream_down_apply.8} parent=11 // pred_fallthru
        _
    $region12: #{stream_down_apply.8} parent=5 // pred_fallthru
      _
    %p152 = scmp.lt.s32.totalorder %s11, 2
    // Predicated region
    $region21: #{stream_down_apply.8} parent=5 // pred_check
      %p153 = pneg %p152
    $region22: #{stream_down_apply.8} parent=5 // pred_check_branch
      %155 = sbr.rel (%p153) target = $region24
    $region23: #{stream_down_apply.8} parent=5 // pred_region
      // Predicated region
      $region25: #{stream_down_apply.8} parent=23 // pred_check
        %p156 = pneg %p31
      $region26: #{stream_down_apply.8} parent=23 // pred_check_branch
        %158 = sbr.rel (%p156) target = $region28
      $region27: #{stream_down_apply.8} parent=23 // pred_region
        %s159 = smul.u32 32, %s11
        %p160 = scmp.lt.s32.totalorder %s159, 63
        %s161 = scalar_select %p160, %s159, 63
        %s162 = smul.addr %s161, 3
        %s163 = smul.addr %s162, 4
        %s164 = scalar_lea.vmem %s0, %s163
        %s165 = smul.u32 32, %s11
      $region28: #{stream_down_apply.8} parent=23 // pred_fallthru
        _
    $region24: #{stream_down_apply.8} parent=5 // pred_fallthru
      _
    %p166 = scmp.le.s32.totalorder 1, %s11
    %p167 = scmp.lt.s32.totalorder %s11, 3
    %p168 = pnand %p166, %p167
    %p169 = pneg %p168
    // Predicated region
    $region29: #{stream_down_apply.8} parent=5 // pred_check
      _
    $region30: #{stream_down_apply.8} parent=5 // pred_check_branch
      %171 = sbr.rel (%p168) target = $region32
    $region31: #{stream_down_apply.8} parent=5 // pred_region
      %s172 = ssub.s32 %s11, 1
      %s173 = smul.u32 32, %s16
      %p174 = scmp.lt.s32.totalorder %s173, 63
      %s175 = scalar_select %p174, %s173, 63
      %s176 = smul.addr %s175, 3
      %s177 = smul.addr %s176, 4
      %s178 = scalar_lea.vmem %s0, %s177
      %p179 = pneg %p37
      %p180 = pneg %p34
      %p181 = pneg %p58
      %p182 = pneg %p55
      %p183 = pneg %p79
      %p184 = pneg %p76
      %p185 = pneg %p105
      %p186 = pneg %p102
      %s187 = smul.u32 32, %s16
      %p188 = scmp.lt.s32.totalorder %s187, 63
      %s189 = scalar_select %p188, %s187, 63
      %s190 = smul.addr %s189, 4
      %s191 = scalar_lea.vmem %s3, %s190
      %p192 = pneg %p131
      %p193 = pneg %p128
      %p194 = scmp.lt.s32.totalorder %s16, 1
      %s195 = scalar_select %p194, %s16, 1
      %s196 = smul.addr %s195, 2
      %s197 = scalar_lea.vmem %s4, %s196
      %s198 = smul.u32 32, %s16
      %p199 = scmp.lt.s32.totalorder %s198, 63
      %s200 = scalar_select %p199, %s198, 63
      %s201 = smul.addr %s200, 3
      %s202 = smul.addr %s201, 4
      %s203 = scalar_lea.vmem %s0, %s202
      %s204 = smul.u32 32, %s16
      %s205 = smul.u32 32, %s16
      %p206 = scmp.lt.s32.totalorder %s205, 63
      %s207 = scalar_select %p206, %s205, 63
      %s208 = smul.addr %s207, 4
      %s209 = scalar_lea.vmem %s3, %s208
      %s210 = smul.u32 32, %s16
      %p211 = scmp.lt.s32.totalorder %s16, 1
      %s212 = scalar_select %p211, %s16, 1
      %s213 = smul.addr %s212, 2
      %s214 = scalar_lea.vmem %s4, %s213
      %v216 = vld [vmem:[%s203] sm:$0xff]
      %v217 = vld [vmem:[%s203 + $0x8] sm:$0xf]
      %v218 = vld [vmem:[%s203 + $0xc] sm:$0xff]
      %v219 = vld [vmem:[%s203 + $0x14] sm:$0xf]
      %v220 = vld [vmem:[%s203 + $0x18] sm:$0xff]
      %v221 = vld [vmem:[%s203 + $0x20] sm:$0xf]
      %v222 = vld [vmem:[%s203 + $0x24] sm:$0xff]
      %v223 = vld [vmem:[%s203 + $0x2c] sm:$0xf]
      %v224 = vld [vmem:[%s203 + $0x30] sm:$0xff]
      %v225 = vld [vmem:[%s203 + $0x38] sm:$0xf]
      %v226 = vld [vmem:[%s203 + $0x3c] sm:$0xff]
      %v227 = vld [vmem:[%s203 + $0x44] sm:$0xf]
      %v228 = vld [vmem:[%s203 + $0x48] sm:$0xff]
      %v229 = vld [vmem:[%s203 + $0x50] sm:$0xf]
      %v230 = vld [vmem:[%s203 + $0x54] sm:$0xff]
      %v231 = vld [vmem:[%s203 + $0x5c] sm:$0xf]
      %v232 = vld [vmem:[%s203 + $0x60] sm:$0xff]
      %v233 = vld [vmem:[%s203 + $0x68] sm:$0xf]
      %v234 = vld [vmem:[%s203 + $0x6c] sm:$0xff]
      %v235 = vld [vmem:[%s203 + $0x74] sm:$0xf]
      %v236 = vld [vmem:[%s203 + $0x78] sm:$0xff]
      %v237 = vld [vmem:[%s203 + $0x80] sm:$0xf]
      %v238 = vld [vmem:[%s203 + $0x84] sm:$0xff]
      %v239 = vld [vmem:[%s203 + $0x8c] sm:$0xf]
      %v240 = vld [vmem:[%s203 + $0x90] sm:$0xff]
      %v241 = vld [vmem:[%s203 + $0x98] sm:$0xf]
      %v242 = vld [vmem:[%s203 + $0x9c] sm:$0xff]
      %v243 = vld [vmem:[%s203 + $0xa4] sm:$0xf]
      %v244 = vld [vmem:[%s203 + $0xa8] sm:$0xff]
      %v245 = vld [vmem:[%s203 + $0xb0] sm:$0xf]
      %v246 = vld [vmem:[%s203 + $0xb4] sm:$0xff]
      %v247 = vld [vmem:[%s203 + $0xbc] sm:$0xf]
      %v248 = vld [vmem:[%s203 + $0xc0] sm:$0xff]
      %v249 = vld [vmem:[%s203 + $0xc8] sm:$0xf]
      %v250 = vld [vmem:[%s203 + $0xcc] sm:$0xff]
      %v251 = vld [vmem:[%s203 + $0xd4] sm:$0xf]
      %v252 = vld [vmem:[%s203 + $0xd8] sm:$0xff]
      %v253 = vld [vmem:[%s203 + $0xe0] sm:$0xf]
      %v254 = vld [vmem:[%s203 + $0xe4] sm:$0xff]
      %v255 = vld [vmem:[%s203 + $0xec] sm:$0xf]
      %v256 = vld [vmem:[%s203 + $0xf0] sm:$0xff]
      %v257 = vld [vmem:[%s203 + $0xf8] sm:$0xf]
      %v258 = vld [vmem:[%s203 + $0xfc] sm:$0xff]
      %v259 = vld [vmem:[%s203 + $0x104] sm:$0xf]
      %v260 = vld [vmem:[%s203 + $0x108] sm:$0xff]
      %v261 = vld [vmem:[%s203 + $0x110] sm:$0xf]
      %v262 = vld [vmem:[%s203 + $0x114] sm:$0xff]
      %v263 = vld [vmem:[%s203 + $0x11c] sm:$0xf]
      %v264 = vld [vmem:[%s203 + $0x120] sm:$0xff]
      %v265 = vld [vmem:[%s203 + $0x128] sm:$0xf]
      %v266 = vld [vmem:[%s203 + $0x12c] sm:$0xff]
      %v267 = vld [vmem:[%s203 + $0x134] sm:$0xf]
      %v268 = vld [vmem:[%s203 + $0x138] sm:$0xff]
      %v269 = vld [vmem:[%s203 + $0x140] sm:$0xf]
      %v270 = vld [vmem:[%s203 + $0x144] sm:$0xff]
      %v271 = vld [vmem:[%s203 + $0x14c] sm:$0xf]
      %v272 = vld [vmem:[%s203 + $0x150] sm:$0xff]
      %v273 = vld [vmem:[%s203 + $0x158] sm:$0xf]
      %v274 = vld [vmem:[%s203 + $0x15c] sm:$0xff]
      %v275 = vld [vmem:[%s203 + $0x164] sm:$0xf]
      %v276 = vld [vmem:[%s203 + $0x168] sm:$0xff]
      %v277 = vld [vmem:[%s203 + $0x170] sm:$0xf]
      %v278 = vld [vmem:[%s203 + $0x174] sm:$0xff]
      %v279 = vld [vmem:[%s203 + $0x17c] sm:$0xf]
      %v280 = vld [vmem:[%s1] sm:$0xf]
      %v281 = vld [vmem:[%s1 + $0x4] sm:$0xf]
      %v282 = vld [vmem:[%s1 + $0x8] sm:$0xf]
      %v283 = vld [vmem:[%s1 + $0xc] sm:$0xf]
      %v284 = vld [vmem:[%s1 + $0x10] sm:$0xf]
      %v285 = vld [vmem:[%s1 + $0x14] sm:$0xf]
      %v286 = vld [vmem:[%s1 + $0x18] sm:$0xf]
      %v287 = vld [vmem:[%s1 + $0x1c] sm:$0xf]
      %v288 = vld [vmem:[%s1 + $0x20] sm:$0xf]
      %v289 = vld [vmem:[%s1 + $0x24] sm:$0xf]
      %v290 = vld [vmem:[%s1 + $0x28] sm:$0xf]
      %v291 = vld [vmem:[%s1 + $0x2c] sm:$0xf]
      %v292 = vld [vmem:[%s1 + $0x30] sm:$0xf]
      %v293 = vld [vmem:[%s1 + $0x34] sm:$0xf]
      %v294 = vld [vmem:[%s1 + $0x38] sm:$0xf]
      %v295 = vld [vmem:[%s1 + $0x3c] sm:$0xf]
      %v296 = vld [vmem:[%s1 + $0x40] sm:$0xf]
      %v297 = vld [vmem:[%s1 + $0x44] sm:$0xf]
      %v298 = vld [vmem:[%s1 + $0x48] sm:$0xf]
      %v299 = vld [vmem:[%s1 + $0x4c] sm:$0xf]
      %v300 = vld [vmem:[%s1 + $0x50] sm:$0xf]
      %v301 = vld [vmem:[%s1 + $0x54] sm:$0xf]
      %v302 = vld [vmem:[%s1 + $0x58] sm:$0xf]
      %v303 = vld [vmem:[%s1 + $0x5c] sm:$0xf]
      %v304 = vld [vmem:[%s1 + $0x60] sm:$0xf]
      %v305 = vld [vmem:[%s1 + $0x64] sm:$0xf]
      %v306 = vld [vmem:[%s1 + $0x68] sm:$0xf]
      %v307 = vld [vmem:[%s1 + $0x6c] sm:$0xf]
      %v308 = vld [vmem:[%s1 + $0x70] sm:$0xf]
      %v309 = vld [vmem:[%s1 + $0x74] sm:$0xf]
      %v310 = vld [vmem:[%s1 + $0x78] sm:$0xf]
      %v311 = vld [vmem:[%s1 + $0x7c] sm:$0xf]
      %v312 = vld [vmem:[%s1 + $0x80] sm:$0xf]
      %v313 = vld [vmem:[%s1 + $0x84] sm:$0xf]
      %v314 = vld [vmem:[%s1 + $0x88] sm:$0xf]
      %v315 = vld [vmem:[%s1 + $0x8c] sm:$0xf]
      %v316 = vld [vmem:[%s2] sm:$0x1]
      %v318 = vlaneseq
      %v319 = vshrl.u32 %v318, 7
      %v320 = vsub.s32 0, %v319
      %v321 = vrot.slane %v316, %v320
      %v387 = vunpack.c.l.b16 %v216
      %v388 = vunpack.c.h.b16 %v216
      %v389 = vunpack.c.l.b16 %v217
      %v390 = vunpack.c.l.b16 %v218
      %v391 = vunpack.c.h.b16 %v218
      %v392 = vunpack.c.l.b16 %v219
      %v393 = vunpack.c.l.b16 %v220
      %v394 = vunpack.c.h.b16 %v220
      %v395 = vunpack.c.l.b16 %v221
      %v396 = vunpack.c.l.b16 %v222
      %v397 = vunpack.c.h.b16 %v222
      %v398 = vunpack.c.l.b16 %v223
      %v399 = vunpack.c.l.b16 %v224
      %v400 = vunpack.c.h.b16 %v224
      %v401 = vunpack.c.l.b16 %v225
      %v402 = vunpack.c.l.b16 %v226
      %v403 = vunpack.c.h.b16 %v226
      %v404 = vunpack.c.l.b16 %v227
      %v405 = vunpack.c.l.b16 %v228
      %v406 = vunpack.c.h.b16 %v228
      %v407 = vunpack.c.l.b16 %v229
      %v408 = vunpack.c.l.b16 %v230
      %v409 = vunpack.c.h.b16 %v230
      %v410 = vunpack.c.l.b16 %v231
      %v411 = vunpack.c.l.b16 %v232
      %v412 = vunpack.c.h.b16 %v232
      %v413 = vunpack.c.l.b16 %v233
      %v414 = vunpack.c.l.b16 %v234
      %v415 = vunpack.c.h.b16 %v234
      %v416 = vunpack.c.l.b16 %v235
      %v417 = vunpack.c.l.b16 %v236
      %v418 = vunpack.c.h.b16 %v236
      %v419 = vunpack.c.l.b16 %v237
      %v420 = vunpack.c.l.b16 %v238
      %v421 = vunpack.c.h.b16 %v238
      %v422 = vunpack.c.l.b16 %v239
      %v423 = vunpack.c.l.b16 %v240
      %v424 = vunpack.c.h.b16 %v240
      %v425 = vunpack.c.l.b16 %v241
      %v426 = vunpack.c.l.b16 %v242
      %v427 = vunpack.c.h.b16 %v242
      %v428 = vunpack.c.l.b16 %v243
      %v429 = vunpack.c.l.b16 %v244
      %v430 = vunpack.c.h.b16 %v244
      %v431 = vunpack.c.l.b16 %v245
      %v432 = vunpack.c.l.b16 %v246
      %v433 = vunpack.c.h.b16 %v246
      %v434 = vunpack.c.l.b16 %v247
      %v435 = vunpack.c.l.b16 %v248
      %v436 = vunpack.c.h.b16 %v248
      %v437 = vunpack.c.l.b16 %v249
      %v438 = vunpack.c.l.b16 %v250
      %v439 = vunpack.c.h.b16 %v250
      %v440 = vunpack.c.l.b16 %v251
      %v441 = vunpack.c.l.b16 %v252
      %v442 = vunpack.c.h.b16 %v252
      %v443 = vunpack.c.l.b16 %v253
      %v444 = vunpack.c.l.b16 %v254
      %v445 = vunpack.c.h.b16 %v254
      %v446 = vunpack.c.l.b16 %v255
      %v447 = vunpack.c.l.b16 %v256
      %v448 = vunpack.c.h.b16 %v256
      %v449 = vunpack.c.l.b16 %v257
      %v450 = vunpack.c.l.b16 %v258
      %v451 = vunpack.c.h.b16 %v258
      %v452 = vunpack.c.l.b16 %v259
      %v453 = vunpack.c.l.b16 %v260
      %v454 = vunpack.c.h.b16 %v260
      %v455 = vunpack.c.l.b16 %v261
      %v456 = vunpack.c.l.b16 %v262
      %v457 = vunpack.c.h.b16 %v262
      %v458 = vunpack.c.l.b16 %v263
      %v459 = vunpack.c.l.b16 %v264
      %v460 = vunpack.c.h.b16 %v264
      %v461 = vunpack.c.l.b16 %v265
      %v462 = vunpack.c.l.b16 %v266
      %v463 = vunpack.c.h.b16 %v266
      %v464 = vunpack.c.l.b16 %v267
      %v465 = vunpack.c.l.b16 %v268
      %v466 = vunpack.c.h.b16 %v268
      %v467 = vunpack.c.l.b16 %v269
      %v468 = vunpack.c.l.b16 %v270
      %v469 = vunpack.c.h.b16 %v270
      %v470 = vunpack.c.l.b16 %v271
      %v471 = vunpack.c.l.b16 %v272
      %v472 = vunpack.c.h.b16 %v272
      %v473 = vunpack.c.l.b16 %v273
      %v474 = vunpack.c.l.b16 %v274
      %v475 = vunpack.c.h.b16 %v274
      %v476 = vunpack.c.l.b16 %v275
      %v477 = vunpack.c.l.b16 %v276
      %v478 = vunpack.c.h.b16 %v276
      %v479 = vunpack.c.l.b16 %v277
      %v480 = vunpack.c.l.b16 %v278
      %v481 = vunpack.c.h.b16 %v278
      %v482 = vunpack.c.l.b16 %v279
      %v483 = vpack.c.b16 %v390, %v387
      %v484 = vpack.c.b16 %v391, %v388
      %v485 = vpack.c.b16 %v392, %v389
      %v486 = vpack.c.b16 %v396, %v393
      %v487 = vpack.c.b16 %v397, %v394
      %v488 = vpack.c.b16 %v398, %v395
      %v489 = vpack.c.b16 %v402, %v399
      %v490 = vpack.c.b16 %v403, %v400
      %v491 = vpack.c.b16 %v404, %v401
      %v492 = vpack.c.b16 %v408, %v405
      %v493 = vpack.c.b16 %v409, %v406
      %v494 = vpack.c.b16 %v410, %v407
      %v495 = vpack.c.b16 %v414, %v411
      %v496 = vpack.c.b16 %v415, %v412
      %v497 = vpack.c.b16 %v416, %v413
      %v498 = vpack.c.b16 %v420, %v417
      %v499 = vpack.c.b16 %v421, %v418
      %v500 = vpack.c.b16 %v422, %v419
      %v501 = vpack.c.b16 %v426, %v423
      %v502 = vpack.c.b16 %v427, %v424
      %v503 = vpack.c.b16 %v428, %v425
      %v504 = vpack.c.b16 %v432, %v429
      %v505 = vpack.c.b16 %v433, %v430
      %v506 = vpack.c.b16 %v434, %v431
      %v507 = vpack.c.b16 %v438, %v435
      %v508 = vpack.c.b16 %v439, %v436
      %v509 = vpack.c.b16 %v440, %v437
      %v510 = vpack.c.b16 %v444, %v441
      %v511 = vpack.c.b16 %v445, %v442
      %v512 = vpack.c.b16 %v446, %v443
      %v513 = vpack.c.b16 %v450, %v447
      %v514 = vpack.c.b16 %v451, %v448
      %v515 = vpack.c.b16 %v452, %v449
      %v516 = vpack.c.b16 %v456, %v453
      %v517 = vpack.c.b16 %v457, %v454
      %v518 = vpack.c.b16 %v458, %v455
      %v519 = vpack.c.b16 %v462, %v459
      %v520 = vpack.c.b16 %v463, %v460
      %v521 = vpack.c.b16 %v464, %v461
      %v522 = vpack.c.b16 %v468, %v465
      %v523 = vpack.c.b16 %v469, %v466
      %v524 = vpack.c.b16 %v470, %v467
      %v525 = vpack.c.b16 %v474, %v471
      %v526 = vpack.c.b16 %v475, %v472
      %v527 = vpack.c.b16 %v476, %v473
      %v528 = vpack.c.b16 %v480, %v477
      %v529 = vpack.c.b16 %v481, %v478
      %v530 = vpack.c.b16 %v482, %v479
      %v599 = vunpack.c.l.b16 %v280
      %v600 = vunpack.c.l.b16 %v281
      %v601 = vunpack.c.l.b16 %v282
      %v602 = vunpack.c.l.b16 %v283
      %v603 = vunpack.c.l.b16 %v284
      %v604 = vunpack.c.l.b16 %v285
      %v605 = vunpack.c.l.b16 %v286
      %v606 = vunpack.c.l.b16 %v287
      %v607 = vunpack.c.l.b16 %v288
      %v608 = vunpack.c.l.b16 %v289
      %v609 = vunpack.c.l.b16 %v290
      %v610 = vunpack.c.l.b16 %v291
      %v611 = vunpack.c.l.b16 %v292
      %v612 = vunpack.c.l.b16 %v293
      %v613 = vunpack.c.l.b16 %v294
      %v614 = vunpack.c.l.b16 %v295
      %v615 = vunpack.c.l.b16 %v296
      %v616 = vunpack.c.l.b16 %v297
      %v617 = vunpack.c.l.b16 %v298
      %v618 = vunpack.c.l.b16 %v299
      %v619 = vunpack.c.l.b16 %v300
      %v620 = vunpack.c.l.b16 %v301
      %v621 = vunpack.c.l.b16 %v302
      %v622 = vunpack.c.l.b16 %v303
      %v623 = vunpack.c.l.b16 %v304
      %v624 = vunpack.c.l.b16 %v305
      %v625 = vunpack.c.l.b16 %v306
      %v626 = vunpack.c.l.b16 %v307
      %v627 = vunpack.c.l.b16 %v308
      %v628 = vunpack.c.l.b16 %v309
      %v629 = vunpack.c.l.b16 %v310
      %v630 = vunpack.c.l.b16 %v311
      %v631 = vunpack.c.l.b16 %v312
      %v632 = vunpack.c.l.b16 %v313
      %v633 = vunpack.c.l.b16 %v314
      %v634 = vunpack.c.l.b16 %v315
      %v635 = vpack.c.b16 %v600, %v599
      %v636 = vpack.c.b16 %v602, %v601
      %v637 = vpack.c.b16 %v604, %v603
      %v638 = vpack.c.b16 %v606, %v605
      %v639 = vpack.c.b16 %v608, %v607
      %v640 = vpack.c.b16 %v610, %v609
      %v641 = vpack.c.b16 %v612, %v611
      %v642 = vpack.c.b16 %v614, %v613
      %v643 = vpack.c.b16 %v616, %v615
      %v644 = vpack.c.b16 %v618, %v617
      %v645 = vpack.c.b16 %v620, %v619
      %v646 = vpack.c.b16 %v622, %v621
      %v647 = vpack.c.b16 %v624, %v623
      %v648 = vpack.c.b16 %v626, %v625
      %v649 = vpack.c.b16 %v628, %v627
      %v650 = vpack.c.b16 %v630, %v629
      %v651 = vpack.c.b16 %v632, %v631
      %v652 = vpack.c.b16 %v634, %v633
      %vm671 = vcmask 261120
      %v673 = vsel %vm671, %v485, 0
      %v676 = vsel %vm671, %v488, 0
      %v679 = vsel %vm671, %v491, 0
      %v682 = vsel %vm671, %v494, 0
      %v685 = vsel %vm671, %v497, 0
      %v688 = vsel %vm671, %v500, 0
      %v691 = vsel %vm671, %v503, 0
      %v694 = vsel %vm671, %v506, 0
      %v697 = vsel %vm671, %v509, 0
      %v700 = vsel %vm671, %v512, 0
      %v703 = vsel %vm671, %v515, 0
      %v706 = vsel %vm671, %v518, 0
      %v709 = vsel %vm671, %v521, 0
      %v712 = vsel %vm671, %v524, 0
      %v715 = vsel %vm671, %v527, 0
      %v718 = vsel %vm671, %v530, 0
      %720 = vmatprep.subr.bf16.mxu0 0
      %721 = vmatpush1.bf16.msra.mxu0 %v635
      %722 = vmatprep.subr.bf16.mxu0 0
      %723 = vmatpush1.bf16.msra.mxu0 %v636
      %724 = vmatprep.subr.bf16.mxu0 0
      %725 = vmatpush1.bf16.msra.mxu0 %v637
      %726 = vmatprep.subr.bf16.mxu0 0
      %727 = vmatpush1.bf16.msra.mxu0 %v638
      %728 = vmatprep.subr.bf16.mxu0 0
      %729 = vmatpush1.bf16.msra.mxu0 %v639
      %730 = vmatprep.subr.bf16.mxu0 0
      %731 = vmatpush1.bf16.msra.mxu0 %v640
      %732 = vmatprep.subr.bf16.mxu0 0
      %733 = vmatpush1.bf16.msra.mxu0 %v641
      %734 = vmatprep.subr.bf16.mxu0 0
      %735 = vmatpush1.bf16.msra.mxu0 %v642
      %736 = vmatprep.subr.bf16.mxu0 0
      %737 = vmatpush1.bf16.msra.mxu0 %v643
      %738 = vmatprep.subr.bf16.mxu0 0
      %739 = vmatpush1.bf16.msra.mxu0 %v644
      %740 = vmatprep.subr.bf16.mxu0 0
      %741 = vmatpush1.bf16.msra.mxu0 %v645
      %742 = vmatprep.subr.bf16.mxu0 0
      %743 = vmatpush1.bf16.msra.mxu0 %v646
      %744 = vmatprep.subr.bf16.mxu0 0
      %745 = vmatpush1.bf16.msra.mxu0 %v647
      %746 = vmatprep.subr.bf16.mxu0 0
      %747 = vmatpush1.bf16.msra.mxu0 %v648
      %748 = vmatprep.subr.bf16.mxu0 0
      %749 = vmatpush1.bf16.msra.mxu0 %v649
      %750 = vmatprep.subr.bf16.mxu0 0
      %751 = vmatpush1.bf16.msra.mxu0 %v650
      %752 = vmatprep.mubr.bf16.mxu0 %v484
      %753 = vmatmul.mubr.bf16.gmra.mrb[0].mxu0 %v483
      %v754 = vpop.f32.mrb[0].mxu0
      %v755 = vadd.f32 %v321, %v754
      %v756 = vpop.f32.mrb[0].mxu0
      %v757 = vpop.f32.mrb[0].mxu0
      %v758 = vadd.f32 %v321, %v757
      %v759 = vpop.f32.mrb[0].mxu0
      %760 = vmatprep.mubr.bf16.mxu0 %v487
      %761 = vmatmul.mubr.bf16.gmra.mrb[0].mxu0 %v486
      %v762 = vpop.f32.mrb[0].mxu0
      %v763 = vadd.f32 %v321, %v762
      %v764 = vpop.f32.mrb[0].mxu0
      %v765 = vpop.f32.mrb[0].mxu0
      %v766 = vadd.f32 %v321, %v765
      %v767 = vpop.f32.mrb[0].mxu0
      %768 = vmatprep.mubr.bf16.mxu0 %v490
      %769 = vmatmul.mubr.bf16.gmra.mrb[0].mxu0 %v489
      %v770 = vpop.f32.mrb[0].mxu0
      %v771 = vadd.f32 %v321, %v770
      %v772 = vpop.f32.mrb[0].mxu0
      %v773 = vpop.f32.mrb[0].mxu0
      %v774 = vadd.f32 %v321, %v773
      %v775 = vpop.f32.mrb[0].mxu0
      %776 = vmatprep.mubr.bf16.mxu0 %v493
      %777 = vmatmul.mubr.bf16.gmra.mrb[0].mxu0 %v492
      %v778 = vpop.f32.mrb[0].mxu0
      %v779 = vadd.f32 %v321, %v778
      %v780 = vpop.f32.mrb[0].mxu0
      %v781 = vpop.f32.mrb[0].mxu0
      %v782 = vadd.f32 %v321, %v781
      %v783 = vpop.f32.mrb[0].mxu0
      %784 = vmatprep.mubr.bf16.mxu0 %v496
      %785 = vmatmul.mubr.bf16.gmra.mrb[0].mxu0 %v495
      %v786 = vpop.f32.mrb[0].mxu0
      %v787 = vadd.f32 %v321, %v786
      %v788 = vpop.f32.mrb[0].mxu0
      %v789 = vpop.f32.mrb[0].mxu0
      %v790 = vadd.f32 %v321, %v789
      %v791 = vpop.f32.mrb[0].mxu0
      %792 = vmatprep.mubr.bf16.mxu0 %v499
      %793 = vmatmul.mubr.bf16.gmra.mrb[0].mxu0 %v498
      %v794 = vpop.f32.mrb[0].mxu0
      %v795 = vadd.f32 %v321, %v794
      %v796 = vpop.f32.mrb[0].mxu0
      %v797 = vpop.f32.mrb[0].mxu0
      %v798 = vadd.f32 %v321, %v797
      %v799 = vpop.f32.mrb[0].mxu0
      %800 = vmatprep.mubr.bf16.mxu0 %v502
      %801 = vmatmul.mubr.bf16.gmra.mrb[0].mxu0 %v501
      %v802 = vpop.f32.mrb[0].mxu0
      %v803 = vadd.f32 %v321, %v802
      %v804 = vpop.f32.mrb[0].mxu0
      %v805 = vpop.f32.mrb[0].mxu0
      %v806 = vadd.f32 %v321, %v805
      %v807 = vpop.f32.mrb[0].mxu0
      %808 = vmatprep.mubr.bf16.mxu0 %v505
      %809 = vmatmul.mubr.bf16.gmra.mrb[0].mxu0 %v504
      %v810 = vpop.f32.mrb[0].mxu0
      %v811 = vadd.f32 %v321, %v810
      %v812 = vpop.f32.mrb[0].mxu0
      %v813 = vpop.f32.mrb[0].mxu0
      %v814 = vadd.f32 %v321, %v813
      %v815 = vpop.f32.mrb[0].mxu0
      %816 = vmatprep.mubr.bf16.mxu0 %v508
      %817 = vmatmul.mubr.bf16.gmra.mrb[0].mxu0 %v507
      %v818 = vpop.f32.mrb[0].mxu0
      %v819 = vadd.f32 %v321, %v818
      %v820 = vpop.f32.mrb[0].mxu0
      %v821 = vpop.f32.mrb[0].mxu0
      %v822 = vadd.f32 %v321, %v821
      %v823 = vpop.f32.mrb[0].mxu0
      %824 = vmatprep.mubr.bf16.mxu0 %v511
      %825 = vmatmul.mubr.bf16.gmra.mrb[0].mxu0 %v510
      %v826 = vpop.f32.mrb[0].mxu0
      %v827 = vadd.f32 %v321, %v826
      %v828 = vpop.f32.mrb[0].mxu0
      %v829 = vpop.f32.mrb[0].mxu0
      %v830 = vadd.f32 %v321, %v829
      %v831 = vpop.f32.mrb[0].mxu0
      %832 = vmatprep.mubr.bf16.mxu0 %v514
      %833 = vmatmul.mubr.bf16.gmra.mrb[0].mxu0 %v513
      %v834 = vpop.f32.mrb[0].mxu0
      %v835 = vadd.f32 %v321, %v834
      %v836 = vpop.f32.mrb[0].mxu0
      %v837 = vpop.f32.mrb[0].mxu0
      %v838 = vadd.f32 %v321, %v837
      %v839 = vpop.f32.mrb[0].mxu0
      %840 = vmatprep.mubr.bf16.mxu0 %v517
      %841 = vmatmul.mubr.bf16.gmra.mrb[0].mxu0 %v516
      %v842 = vpop.f32.mrb[0].mxu0
      %v843 = vadd.f32 %v321, %v842
      %v844 = vpop.f32.mrb[0].mxu0
      %v845 = vpop.f32.mrb[0].mxu0
      %v846 = vadd.f32 %v321, %v845
      %v847 = vpop.f32.mrb[0].mxu0
      %848 = vmatprep.mubr.bf16.mxu0 %v520
      %849 = vmatmul.mubr.bf16.gmra.mrb[0].mxu0 %v519
      %v850 = vpop.f32.mrb[0].mxu0
      %v851 = vadd.f32 %v321, %v850
      %v852 = vpop.f32.mrb[0].mxu0
      %v853 = vpop.f32.mrb[0].mxu0
      %v854 = vadd.f32 %v321, %v853
      %v855 = vpop.f32.mrb[0].mxu0
      %856 = vmatprep.mubr.bf16.mxu0 %v523
      %857 = vmatmul.mubr.bf16.gmra.mrb[0].mxu0 %v522
      %v858 = vpop.f32.mrb[0].mxu0
      %v859 = vadd.f32 %v321, %v858
      %v860 = vpop.f32.mrb[0].mxu0
      %v861 = vpop.f32.mrb[0].mxu0
      %v862 = vadd.f32 %v321, %v861
      %v863 = vpop.f32.mrb[0].mxu0
      %864 = vmatprep.mubr.bf16.mxu0 %v526
      %865 = vmatmul.mubr.bf16.gmra.mrb[0].mxu0 %v525
      %v866 = vpop.f32.mrb[0].mxu0
      %v867 = vadd.f32 %v321, %v866
      %v868 = vpop.f32.mrb[0].mxu0
      %v869 = vpop.f32.mrb[0].mxu0
      %v870 = vadd.f32 %v321, %v869
      %v871 = vpop.f32.mrb[0].mxu0
      %872 = vmatprep.mubr.bf16.mxu0 %v529
      %873 = vmatmul.mubr.bf16.gmra.mrb[0].mxu0 %v528
      %v874 = vpop.f32.mrb[0].mxu0
      %v875 = vadd.f32 %v321, %v874
      %v876 = vpop.f32.mrb[0].mxu0
      %v877 = vpop.f32.mrb[0].mxu0
      %v878 = vadd.f32 %v321, %v877
      %v879 = vpop.f32.mrb[0].mxu0
      %880 = vdwg.mxu0
      %881 = vmatprep.subr.bf16.mxu0 0
      %882 = vmatpush1.bf16.msra.mxu0 %v651
      %883 = vmatprep.subr.bf16.mxu0 0
      %884 = vmatpush1.bf16.msra.mxu0 %v652
      %885 = vmatprep.subr.bf16.mxu0 0
      %886 = vmatpush1.bf16.msra.mxu0 0
      %887 = vmatprep.subr.bf16.mxu0 0
      %888 = vmatpush1.bf16.msra.mxu0 0
      %889 = vmatprep.subr.bf16.mxu0 0
      %890 = vmatpush1.bf16.msra.mxu0 0
      %891 = vmatprep.subr.bf16.mxu0 0
      %892 = vmatpush1.bf16.msra.mxu0 0
      %893 = vmatprep.subr.bf16.mxu0 0
      %894 = vmatpush1.bf16.msra.mxu0 0
      %895 = vmatprep.subr.bf16.mxu0 0
      %896 = vmatpush1.bf16.msra.mxu0 0
      %897 = vmatprep.subr.bf16.mxu0 0
      %898 = vmatpush1.bf16.msra.mxu0 0
      %899 = vmatprep.subr.bf16.mxu0 0
      %900 = vmatpush1.bf16.msra.mxu0 0
      %901 = vmatprep.subr.bf16.mxu0 0
      %902 = vmatpush1.bf16.msra.mxu0 0
      %903 = vmatprep.subr.bf16.mxu0 0
      %904 = vmatpush1.bf16.msra.mxu0 0
      %905 = vmatprep.subr.bf16.mxu0 0
      %906 = vmatpush1.bf16.msra.mxu0 0
      %907 = vmatprep.subr.bf16.mxu0 0
      %908 = vmatpush1.bf16.msra.mxu0 0
      %909 = vmatprep.subr.bf16.mxu0 0
      %910 = vmatpush1.bf16.msra.mxu0 0
      %911 = vmatprep.subr.bf16.mxu0 0
      %912 = vmatpush1.bf16.msra.mxu0 0
      %913 = vmatprep.mubr.bf16.mxu0 0
      %914 = vmatmul.mubr.bf16.gmra.mrb[0].mxu0 %v673
      %v915 = vpop.f32.mrb[0].mxu0
      %v916 = vadd.f32 %v755, %v915
      %v917 = vpop.f32.mrb[0].mxu0
      %v918 = vpop.f32.mrb[0].mxu0
      %v919 = vadd.f32 %v758, %v918
      %v920 = vpop.f32.mrb[0].mxu0
      %921 = vmatprep.mubr.bf16.mxu0 0
      %922 = vmatmul.mubr.bf16.gmra.mrb[0].mxu0 %v676
      %v923 = vpop.f32.mrb[0].mxu0
      %v924 = vadd.f32 %v763, %v923
      %v925 = vpop.f32.mrb[0].mxu0
      %v926 = vpop.f32.mrb[0].mxu0
      %v927 = vadd.f32 %v766, %v926
      %v928 = vpop.f32.mrb[0].mxu0
      %929 = vmatprep.mubr.bf16.mxu0 0
      %930 = vmatmul.mubr.bf16.gmra.mrb[0].mxu0 %v679
      %v931 = vpop.f32.mrb[0].mxu0
      %v932 = vadd.f32 %v771, %v931
      %v933 = vpop.f32.mrb[0].mxu0
      %v934 = vpop.f32.mrb[0].mxu0
      %v935 = vadd.f32 %v774, %v934
      %v936 = vpop.f32.mrb[0].mxu0
      %937 = vmatprep.mubr.bf16.mxu0 0
      %938 = vmatmul.mubr.bf16.gmra.mrb[0].mxu0 %v682
      %v939 = vpop.f32.mrb[0].mxu0
      %v940 = vadd.f32 %v779, %v939
      %v941 = vpop.f32.mrb[0].mxu0
      %v942 = vpop.f32.mrb[0].mxu0
      %v943 = vadd.f32 %v782, %v942
      %v944 = vpop.f32.mrb[0].mxu0
      %945 = vmatprep.mubr.bf16.mxu0 0
      %946 = vmatmul.mubr.bf16.gmra.mrb[0].mxu0 %v685
      %v947 = vpop.f32.mrb[0].mxu0
      %v948 = vadd.f32 %v787, %v947
      %v949 = vpop.f32.mrb[0].mxu0
      %v950 = vpop.f32.mrb[0].mxu0
      %v951 = vadd.f32 %v790, %v950
      %v952 = vpop.f32.mrb[0].mxu0
      %953 = vmatprep.mubr.bf16.mxu0 0
      %954 = vmatmul.mubr.bf16.gmra.mrb[0].mxu0 %v688
      %v955 = vpop.f32.mrb[0].mxu0
      %v956 = vadd.f32 %v795, %v955
      %v957 = vpop.f32.mrb[0].mxu0
      %v958 = vpop.f32.mrb[0].mxu0
      %v959 = vadd.f32 %v798, %v958
      %v960 = vpop.f32.mrb[0].mxu0
      %961 = vmatprep.mubr.bf16.mxu0 0
      %962 = vmatmul.mubr.bf16.gmra.mrb[0].mxu0 %v691
      %v963 = vpop.f32.mrb[0].mxu0
      %v964 = vadd.f32 %v803, %v963
      %v965 = vpop.f32.mrb[0].mxu0
      %v966 = vpop.f32.mrb[0].mxu0
      %v967 = vadd.f32 %v806, %v966
      %v968 = vpop.f32.mrb[0].mxu0
      %969 = vmatprep.mubr.bf16.mxu0 0
      %970 = vmatmul.mubr.bf16.gmra.mrb[0].mxu0 %v694
      %v971 = vpop.f32.mrb[0].mxu0
      %v972 = vadd.f32 %v811, %v971
      %v973 = vpop.f32.mrb[0].mxu0
      %v974 = vpop.f32.mrb[0].mxu0
      %v975 = vadd.f32 %v814, %v974
      %v976 = vpop.f32.mrb[0].mxu0
      %977 = vmatprep.mubr.bf16.mxu0 0
      %978 = vmatmul.mubr.bf16.gmra.mrb[0].mxu0 %v697
      %v979 = vpop.f32.mrb[0].mxu0
      %v980 = vadd.f32 %v819, %v979
      %v981 = vpop.f32.mrb[0].mxu0
      %v982 = vpop.f32.mrb[0].mxu0
      %v983 = vadd.f32 %v822, %v982
      %v984 = vpop.f32.mrb[0].mxu0
      %985 = vmatprep.mubr.bf16.mxu0 0
      %986 = vmatmul.mubr.bf16.gmra.mrb[0].mxu0 %v700
      %v987 = vpop.f32.mrb[0].mxu0
      %v988 = vadd.f32 %v827, %v987
      %v989 = vpop.f32.mrb[0].mxu0
      %v990 = vpop.f32.mrb[0].mxu0
      %v991 = vadd.f32 %v830, %v990
      %v992 = vpop.f32.mrb[0].mxu0
      %993 = vmatprep.mubr.bf16.mxu0 0
      %994 = vmatmul.mubr.bf16.gmra.mrb[0].mxu0 %v703
      %v995 = vpop.f32.mrb[0].mxu0
      %v996 = vadd.f32 %v835, %v995
      %v997 = vpop.f32.mrb[0].mxu0
      %v998 = vpop.f32.mrb[0].mxu0
      %v999 = vadd.f32 %v838, %v998
      %v1000 = vpop.f32.mrb[0].mxu0
      %1001 = vmatprep.mubr.bf16.mxu0 0
      %1002 = vmatmul.mubr.bf16.gmra.mrb[0].mxu0 %v706
      %v1003 = vpop.f32.mrb[0].mxu0
      %v1004 = vadd.f32 %v843, %v1003
      %v1005 = vpop.f32.mrb[0].mxu0
      %v1006 = vpop.f32.mrb[0].mxu0
      %v1007 = vadd.f32 %v846, %v1006
      %v1008 = vpop.f32.mrb[0].mxu0
      %1009 = vmatprep.mubr.bf16.mxu0 0
      %1010 = vmatmul.mubr.bf16.gmra.mrb[0].mxu0 %v709
      %v1011 = vpop.f32.mrb[0].mxu0
      %v1012 = vadd.f32 %v851, %v1011
      %v1013 = vpop.f32.mrb[0].mxu0
      %v1014 = vpop.f32.mrb[0].mxu0
      %v1015 = vadd.f32 %v854, %v1014
      %v1016 = vpop.f32.mrb[0].mxu0
      %1017 = vmatprep.mubr.bf16.mxu0 0
      %1018 = vmatmul.mubr.bf16.gmra.mrb[0].mxu0 %v712
      %v1019 = vpop.f32.mrb[0].mxu0
      %v1020 = vadd.f32 %v859, %v1019
      %v1021 = vpop.f32.mrb[0].mxu0
      %v1022 = vpop.f32.mrb[0].mxu0
      %v1023 = vadd.f32 %v862, %v1022
      %v1024 = vpop.f32.mrb[0].mxu0
      %1025 = vmatprep.mubr.bf16.mxu0 0
      %1026 = vmatmul.mubr.bf16.gmra.mrb[0].mxu0 %v715
      %v1027 = vpop.f32.mrb[0].mxu0
      %v1028 = vadd.f32 %v867, %v1027
      %v1029 = vpop.f32.mrb[0].mxu0
      %v1030 = vpop.f32.mrb[0].mxu0
      %v1031 = vadd.f32 %v870, %v1030
      %v1032 = vpop.f32.mrb[0].mxu0
      %1033 = vmatprep.mubr.bf16.mxu0 0
      %1034 = vmatmul.mubr.bf16.gmra.mrb[0].mxu0 %v718
      %v1035 = vpop.f32.mrb[0].mxu0
      %v1036 = vadd.f32 %v875, %v1035
      %v1037 = vpop.f32.mrb[0].mxu0
      %v1038 = vpop.f32.mrb[0].mxu0
      %v1039 = vadd.f32 %v878, %v1038
      %v1040 = vpop.f32.mrb[0].mxu0
      %1041 = vdwg.mxu0
      %vm1042 = vcmask 523264
      %v1043 = vsel %vm1042, %v916, 0.0
      %v1044 = vsel %vm1042, %v919, 0.0
      %v1045 = vadd.f32 %v1043, %v1044
      %v1046 = vsel %vm1042, %v924, 0.0
      %v1047 = vadd.f32 %v1045, %v1046
      %v1048 = vsel %vm1042, %v927, 0.0
      %v1049 = vadd.f32 %v1047, %v1048
      %v1050 = vsel %vm1042, %v932, 0.0
      %v1051 = vadd.f32 %v1049, %v1050
      %v1052 = vsel %vm1042, %v935, 0.0
      %v1053 = vadd.f32 %v1051, %v1052
      %v1054 = vsel %vm1042, %v940, 0.0
      %v1055 = vadd.f32 %v1053, %v1054
      %v1056 = vsel %vm1042, %v943, 0.0
      %v1057 = vadd.f32 %v1055, %v1056
      %v1058 = vsel %vm1042, %v948, 0.0
      %v1059 = vadd.f32 %v1057, %v1058
      %v1060 = vsel %vm1042, %v951, 0.0
      %v1061 = vadd.f32 %v1059, %v1060
      %v1062 = vsel %vm1042, %v956, 0.0
      %v1063 = vadd.f32 %v1061, %v1062
      %v1064 = vsel %vm1042, %v959, 0.0
      %v1065 = vadd.f32 %v1063, %v1064
      %v1066 = vsel %vm1042, %v964, 0.0
      %v1067 = vadd.f32 %v1065, %v1066
      %v1068 = vsel %vm1042, %v967, 0.0
      %v1069 = vadd.f32 %v1067, %v1068
      %v1070 = vsel %vm1042, %v972, 0.0
      %v1071 = vadd.f32 %v1069, %v1070
      %v1072 = vsel %vm1042, %v975, 0.0
      %v1073 = vadd.f32 %v1071, %v1072
      %v1074 = vsel %vm1042, %v980, 0.0
      %v1075 = vadd.f32 %v1073, %v1074
      %v1076 = vsel %vm1042, %v983, 0.0
      %v1077 = vadd.f32 %v1075, %v1076
      %v1078 = vsel %vm1042, %v988, 0.0
      %v1079 = vadd.f32 %v1077, %v1078
      %v1080 = vsel %vm1042, %v991, 0.0
      %v1081 = vadd.f32 %v1079, %v1080
      %v1082 = vsel %vm1042, %v996, 0.0
      %v1083 = vadd.f32 %v1081, %v1082
      %v1084 = vsel %vm1042, %v999, 0.0
      %v1085 = vadd.f32 %v1083, %v1084
      %v1086 = vsel %vm1042, %v1004, 0.0
      %v1087 = vadd.f32 %v1085, %v1086
      %v1088 = vsel %vm1042, %v1007, 0.0
      %v1089 = vadd.f32 %v1087, %v1088
      %v1090 = vsel %vm1042, %v1012, 0.0
      %v1091 = vadd.f32 %v1089, %v1090
      %v1092 = vsel %vm1042, %v1015, 0.0
      %v1093 = vadd.f32 %v1091, %v1092
      %v1094 = vsel %vm1042, %v1020, 0.0
      %v1095 = vadd.f32 %v1093, %v1094
      %v1096 = vsel %vm1042, %v1023, 0.0
      %v1097 = vadd.f32 %v1095, %v1096
      %v1098 = vsel %vm1042, %v1028, 0.0
      %v1099 = vadd.f32 %v1097, %v1098
      %v1100 = vsel %vm1042, %v1031, 0.0
      %v1101 = vadd.f32 %v1099, %v1100
      %v1102 = vsel %vm1042, %v1036, 0.0
      %v1103 = vadd.f32 %v1101, %v1102
      %v1104 = vsel %vm1042, %v1039, 0.0
      %v1105 = vadd.f32 %v1103, %v1104
      %v1106 = vrot.slane %v1105, 4
      %v1107 = vadd.f32 %v1105, %v1106
      %v1108 = vrot.slane %v1107, 2
      %v1109 = vadd.f32 %v1107, %v1108
      %v1110 = vrot.slane %v1109, 1
      %v1111 = vadd.f32 %v1109, %v1110
      %v1112 = vmul.f32 %v916, %v916
      %v1113 = vmul.f32 %v919, %v919
      %v1114 = vmul.f32 %v924, %v924
      %v1115 = vmul.f32 %v927, %v927
      %v1116 = vmul.f32 %v932, %v932
      %v1117 = vmul.f32 %v935, %v935
      %v1118 = vmul.f32 %v940, %v940
      %v1119 = vmul.f32 %v943, %v943
      %v1120 = vmul.f32 %v948, %v948
      %v1121 = vmul.f32 %v951, %v951
      %v1122 = vmul.f32 %v956, %v956
      %v1123 = vmul.f32 %v959, %v959
      %v1124 = vmul.f32 %v964, %v964
      %v1125 = vmul.f32 %v967, %v967
      %v1126 = vmul.f32 %v972, %v972
      %v1127 = vmul.f32 %v975, %v975
      %v1128 = vmul.f32 %v980, %v980
      %v1129 = vmul.f32 %v983, %v983
      %v1130 = vmul.f32 %v988, %v988
      %v1131 = vmul.f32 %v991, %v991
      %v1132 = vmul.f32 %v996, %v996
      %v1133 = vmul.f32 %v999, %v999
      %v1134 = vmul.f32 %v1004, %v1004
      %v1135 = vmul.f32 %v1007, %v1007
      %v1136 = vmul.f32 %v1012, %v1012
      %v1137 = vmul.f32 %v1015, %v1015
      %v1138 = vmul.f32 %v1020, %v1020
      %v1139 = vmul.f32 %v1023, %v1023
      %v1140 = vmul.f32 %v1028, %v1028
      %v1141 = vmul.f32 %v1031, %v1031
      %v1142 = vmul.f32 %v1036, %v1036
      %v1143 = vmul.f32 %v1039, %v1039
      %v1144 = vsel %vm1042, %v1112, 0.0
      %v1145 = vsel %vm1042, %v1113, 0.0
      %v1146 = vadd.f32 %v1144, %v1145
      %v1147 = vsel %vm1042, %v1114, 0.0
      %v1148 = vadd.f32 %v1146, %v1147
      %v1149 = vsel %vm1042, %v1115, 0.0
      %v1150 = vadd.f32 %v1148, %v1149
      %v1151 = vsel %vm1042, %v1116, 0.0
      %v1152 = vadd.f32 %v1150, %v1151
      %v1153 = vsel %vm1042, %v1117, 0.0
      %v1154 = vadd.f32 %v1152, %v1153
      %v1155 = vsel %vm1042, %v1118, 0.0
      %v1156 = vadd.f32 %v1154, %v1155
      %v1157 = vsel %vm1042, %v1119, 0.0
      %v1158 = vadd.f32 %v1156, %v1157
      %v1159 = vsel %vm1042, %v1120, 0.0
      %v1160 = vadd.f32 %v1158, %v1159
      %v1161 = vsel %vm1042, %v1121, 0.0
      %v1162 = vadd.f32 %v1160, %v1161
      %v1163 = vsel %vm1042, %v1122, 0.0
      %v1164 = vadd.f32 %v1162, %v1163
      %v1165 = vsel %vm1042, %v1123, 0.0
      %v1166 = vadd.f32 %v1164, %v1165
      %v1167 = vsel %vm1042, %v1124, 0.0
      %v1168 = vadd.f32 %v1166, %v1167
      %v1169 = vsel %vm1042, %v1125, 0.0
      %v1170 = vadd.f32 %v1168, %v1169
      %v1171 = vsel %vm1042, %v1126, 0.0
      %v1172 = vadd.f32 %v1170, %v1171
      %v1173 = vsel %vm1042, %v1127, 0.0
      %v1174 = vadd.f32 %v1172, %v1173
      %v1175 = vsel %vm1042, %v1128, 0.0
      %v1176 = vadd.f32 %v1174, %v1175
      %v1177 = vsel %vm1042, %v1129, 0.0
      %v1178 = vadd.f32 %v1176, %v1177
      %v1179 = vsel %vm1042, %v1130, 0.0
      %v1180 = vadd.f32 %v1178, %v1179
      %v1181 = vsel %vm1042, %v1131, 0.0
      %v1182 = vadd.f32 %v1180, %v1181
      %v1183 = vsel %vm1042, %v1132, 0.0
      %v1184 = vadd.f32 %v1182, %v1183
      %v1185 = vsel %vm1042, %v1133, 0.0
      %v1186 = vadd.f32 %v1184, %v1185
      %v1187 = vsel %vm1042, %v1134, 0.0
      %v1188 = vadd.f32 %v1186, %v1187
      %v1189 = vsel %vm1042, %v1135, 0.0
      %v1190 = vadd.f32 %v1188, %v1189
      %v1191 = vsel %vm1042, %v1136, 0.0
      %v1192 = vadd.f32 %v1190, %v1191
      %v1193 = vsel %vm1042, %v1137, 0.0
      %v1194 = vadd.f32 %v1192, %v1193
      %v1195 = vsel %vm1042, %v1138, 0.0
      %v1196 = vadd.f32 %v1194, %v1195
      %v1197 = vsel %vm1042, %v1139, 0.0
      %v1198 = vadd.f32 %v1196, %v1197
      %v1199 = vsel %vm1042, %v1140, 0.0
      %v1200 = vadd.f32 %v1198, %v1199
      %v1201 = vsel %vm1042, %v1141, 0.0
      %v1202 = vadd.f32 %v1200, %v1201
      %v1203 = vsel %vm1042, %v1142, 0.0
      %v1204 = vadd.f32 %v1202, %v1203
      %v1205 = vsel %vm1042, %v1143, 0.0
      %v1206 = vadd.f32 %v1204, %v1205
      %v1207 = vrot.slane %v1206, 4
      %v1208 = vadd.f32 %v1206, %v1207
      %v1209 = vrot.slane %v1208, 2
      %v1210 = vadd.f32 %v1208, %v1209
      %v1211 = vrot.slane %v1210, 1
      %v1212 = vadd.f32 %v1210, %v1211
      %vm1213 = vcmask 1040384
      %v1214 = vsel %vm1213, %v1111, %v1212
      %vm1215 = vcmask 517120
      %1216 = vst.msk [vmem:[%s214] sm:$0x3] %vm1215, %v1214
      %v1217 = vpack.c.bf16 %v919, %v916
      %v1218 = vpack.c.bf16 %v927, %v924
      %v1219 = vpack.c.bf16 %v935, %v932
      %v1220 = vpack.c.bf16 %v943, %v940
      %v1221 = vpack.c.bf16 %v951, %v948
      %v1222 = vpack.c.bf16 %v959, %v956
      %v1223 = vpack.c.bf16 %v967, %v964
      %v1224 = vpack.c.bf16 %v975, %v972
      %v1225 = vpack.c.bf16 %v983, %v980
      %v1226 = vpack.c.bf16 %v991, %v988
      %v1227 = vpack.c.bf16 %v999, %v996
      %v1228 = vpack.c.bf16 %v1007, %v1004
      %v1229 = vpack.c.bf16 %v1015, %v1012
      %v1230 = vpack.c.bf16 %v1023, %v1020
      %v1231 = vpack.c.bf16 %v1031, %v1028
      %v1232 = vpack.c.bf16 %v1039, %v1036
      %v1249 = vunpack.c.l.b16 %v1217
      %v1250 = vunpack.c.h.b16 %v1217
      %v1251 = vunpack.c.l.b16 %v1218
      %v1252 = vunpack.c.h.b16 %v1218
      %v1253 = vunpack.c.l.b16 %v1219
      %v1254 = vunpack.c.h.b16 %v1219
      %v1255 = vunpack.c.l.b16 %v1220
      %v1256 = vunpack.c.h.b16 %v1220
      %v1257 = vunpack.c.l.b16 %v1221
      %v1258 = vunpack.c.h.b16 %v1221
      %v1259 = vunpack.c.l.b16 %v1222
      %v1260 = vunpack.c.h.b16 %v1222
      %v1261 = vunpack.c.l.b16 %v1223
      %v1262 = vunpack.c.h.b16 %v1223
      %v1263 = vunpack.c.l.b16 %v1224
      %v1264 = vunpack.c.h.b16 %v1224
      %v1265 = vunpack.c.l.b16 %v1225
      %v1266 = vunpack.c.h.b16 %v1225
      %v1267 = vunpack.c.l.b16 %v1226
      %v1268 = vunpack.c.h.b16 %v1226
      %v1269 = vunpack.c.l.b16 %v1227
      %v1270 = vunpack.c.h.b16 %v1227
      %v1271 = vunpack.c.l.b16 %v1228
      %v1272 = vunpack.c.h.b16 %v1228
      %v1273 = vunpack.c.l.b16 %v1229
      %v1274 = vunpack.c.h.b16 %v1229
      %v1275 = vunpack.c.l.b16 %v1230
      %v1276 = vunpack.c.h.b16 %v1230
      %v1277 = vunpack.c.l.b16 %v1231
      %v1278 = vunpack.c.h.b16 %v1231
      %v1279 = vunpack.c.l.b16 %v1232
      %v1280 = vunpack.c.h.b16 %v1232
      %v1281 = vpack.c.b16 %v1249, %v1249
      %v1282 = vpack.c.b16 %v1250, %v1250
      %v1283 = vpack.c.b16 %v1251, %v1251
      %v1284 = vpack.c.b16 %v1252, %v1252
      %v1285 = vpack.c.b16 %v1253, %v1253
      %v1286 = vpack.c.b16 %v1254, %v1254
      %v1287 = vpack.c.b16 %v1255, %v1255
      %v1288 = vpack.c.b16 %v1256, %v1256
      %v1289 = vpack.c.b16 %v1257, %v1257
      %v1290 = vpack.c.b16 %v1258, %v1258
      %v1291 = vpack.c.b16 %v1259, %v1259
      %v1292 = vpack.c.b16 %v1260, %v1260
      %v1293 = vpack.c.b16 %v1261, %v1261
      %v1294 = vpack.c.b16 %v1262, %v1262
      %v1295 = vpack.c.b16 %v1263, %v1263
      %v1296 = vpack.c.b16 %v1264, %v1264
      %v1297 = vpack.c.b16 %v1265, %v1265
      %v1298 = vpack.c.b16 %v1266, %v1266
      %v1299 = vpack.c.b16 %v1267, %v1267
      %v1300 = vpack.c.b16 %v1268, %v1268
      %v1301 = vpack.c.b16 %v1269, %v1269
      %v1302 = vpack.c.b16 %v1270, %v1270
      %v1303 = vpack.c.b16 %v1271, %v1271
      %v1304 = vpack.c.b16 %v1272, %v1272
      %v1305 = vpack.c.b16 %v1273, %v1273
      %v1306 = vpack.c.b16 %v1274, %v1274
      %v1307 = vpack.c.b16 %v1275, %v1275
      %v1308 = vpack.c.b16 %v1276, %v1276
      %v1309 = vpack.c.b16 %v1277, %v1277
      %v1310 = vpack.c.b16 %v1278, %v1278
      %v1311 = vpack.c.b16 %v1279, %v1279
      %v1312 = vpack.c.b16 %v1280, %v1280
      %vm1345 = vcmask 519168
      %1346 = vst.msk [vmem:[%s209] sm:$0xf] %vm1345, %v1281
      %1347 = vst.msk [vmem:[%s209 + $0x4] sm:$0xf] %vm1345, %v1282
      %1348 = vst.msk [vmem:[%s209 + $0x8] sm:$0xf] %vm1345, %v1283
      %1349 = vst.msk [vmem:[%s209 + $0xc] sm:$0xf] %vm1345, %v1284
      %1350 = vst.msk [vmem:[%s209 + $0x10] sm:$0xf] %vm1345, %v1285
      %1351 = vst.msk [vmem:[%s209 + $0x14] sm:$0xf] %vm1345, %v1286
      %1352 = vst.msk [vmem:[%s209 + $0x18] sm:$0xf] %vm1345, %v1287
      %1353 = vst.msk [vmem:[%s209 + $0x1c] sm:$0xf] %vm1345, %v1288
      %1354 = vst.msk [vmem:[%s209 + $0x20] sm:$0xf] %vm1345, %v1289
      %1355 = vst.msk [vmem:[%s209 + $0x24] sm:$0xf] %vm1345, %v1290
      %1356 = vst.msk [vmem:[%s209 + $0x28] sm:$0xf] %vm1345, %v1291
      %1357 = vst.msk [vmem:[%s209 + $0x2c] sm:$0xf] %vm1345, %v1292
      %1358 = vst.msk [vmem:[%s209 + $0x30] sm:$0xf] %vm1345, %v1293
      %1359 = vst.msk [vmem:[%s209 + $0x34] sm:$0xf] %vm1345, %v1294
      %1360 = vst.msk [vmem:[%s209 + $0x38] sm:$0xf] %vm1345, %v1295
      %1361 = vst.msk [vmem:[%s209 + $0x3c] sm:$0xf] %vm1345, %v1296
      %1362 = vst.msk [vmem:[%s209 + $0x40] sm:$0xf] %vm1345, %v1297
      %1363 = vst.msk [vmem:[%s209 + $0x44] sm:$0xf] %vm1345, %v1298
      %1364 = vst.msk [vmem:[%s209 + $0x48] sm:$0xf] %vm1345, %v1299
      %1365 = vst.msk [vmem:[%s209 + $0x4c] sm:$0xf] %vm1345, %v1300
      %1366 = vst.msk [vmem:[%s209 + $0x50] sm:$0xf] %vm1345, %v1301
      %1367 = vst.msk [vmem:[%s209 + $0x54] sm:$0xf] %vm1345, %v1302
      %1368 = vst.msk [vmem:[%s209 + $0x58] sm:$0xf] %vm1345, %v1303
      %1369 = vst.msk [vmem:[%s209 + $0x5c] sm:$0xf] %vm1345, %v1304
      %1370 = vst.msk [vmem:[%s209 + $0x60] sm:$0xf] %vm1345, %v1305
      %1371 = vst.msk [vmem:[%s209 + $0x64] sm:$0xf] %vm1345, %v1306
      %1372 = vst.msk [vmem:[%s209 + $0x68] sm:$0xf] %vm1345, %v1307
      %1373 = vst.msk [vmem:[%s209 + $0x6c] sm:$0xf] %vm1345, %v1308
      %1374 = vst.msk [vmem:[%s209 + $0x70] sm:$0xf] %vm1345, %v1309
      %1375 = vst.msk [vmem:[%s209 + $0x74] sm:$0xf] %vm1345, %v1310
      %1376 = vst.msk [vmem:[%s209 + $0x78] sm:$0xf] %vm1345, %v1311
      %1377 = vst.msk [vmem:[%s209 + $0x7c] sm:$0xf] %vm1345, %v1312
      %s1378 = smul.u32 32, %s16
      %p1379 = scmp.lt.s32.totalorder %s1378, 63
      %s1380 = scalar_select %p1379, %s1378, 63
      %s1381 = smul.addr %s1380, 4
      %s1382 = scalar_lea.vmem %s3, %s1381
      %p1383 = scmp.lt.s32.totalorder %s16, 1
      %s1384 = scalar_select %p1383, %s16, 1
      %s1385 = smul.addr %s1384, 2
      %s1386 = scalar_lea.vmem %s4, %s1385
      // Predicated region
      $region33: #{stream_down_apply.8} parent=31 // pred_check
        %p1387 = pneg %p102
      $region34: #{stream_down_apply.8} parent=31 // pred_check_branch
        %1389 = sbr.rel (%p1387) target = $region36
      $region35: #{stream_down_apply.8} parent=31 // pred_region
        %s1390 = smul.u32 32, %s16
      $region36: #{stream_down_apply.8} parent=31 // pred_fallthru
        _
      // Predicated region
      $region37: #{stream_down_apply.8} parent=31 // pred_check
        %p1391 = pneg %p128
      $region38: #{stream_down_apply.8} parent=31 // pred_check_branch
        %1393 = sbr.rel (%p1391) target = $region40
      $region39: #{stream_down_apply.8} parent=31 // pred_region
        _
      $region40: #{stream_down_apply.8} parent=31 // pred_fallthru
        _
    $region32: #{stream_down_apply.8} parent=5 // pred_fallthru
      _
    %p1394 = scmp.le.s32.totalorder 2, %s11
    // Predicated region
    $region41: #{stream_down_apply.8} parent=5 // pred_check
      %p1395 = pneg %p1394
    $region42: #{stream_down_apply.8} parent=5 // pred_check_branch
      %1397 = sbr.rel (%p1395) target = $region44
    $region43: #{stream_down_apply.8} parent=5 // pred_region
      %s1398 = ssub.s32 %s11, 2
      // Predicated region
      $region45: #{stream_down_apply.8} parent=43 // pred_check
        %p1399 = pneg %p108
      $region46: #{stream_down_apply.8} parent=43 // pred_check_branch
        %1401 = sbr.rel (%p1399) target = $region48
      $region47: #{stream_down_apply.8} parent=43 // pred_region
        %s1402 = smul.u32 32, %s17
        %p1403 = scmp.lt.s32.totalorder %s1402, 63
        %s1404 = scalar_select %p1403, %s1402, 63
        %s1405 = smul.addr %s1404, 4
        %s1406 = scalar_lea.vmem %s3, %s1405
      $region48: #{stream_down_apply.8} parent=43 // pred_fallthru
        _
      // Predicated region
      $region49: #{stream_down_apply.8} parent=43 // pred_check
        %p1407 = pneg %p134
      $region50: #{stream_down_apply.8} parent=43 // pred_check_branch
        %1409 = sbr.rel (%p1407) target = $region52
      $region51: #{stream_down_apply.8} parent=43 // pred_region
        %p1410 = scmp.lt.s32.totalorder %s17, 1
        %s1411 = scalar_select %p1410, %s17, 1
        %s1412 = smul.addr %s1411, 2
        %s1413 = scalar_lea.vmem %s4, %s1412
      $region52: #{stream_down_apply.8} parent=43 // pred_fallthru
        _
    $region44: #{stream_down_apply.8} parent=5 // pred_fallthru
      _
  $region6: #{stream_down_apply.8} parent=0 // loop_footer
    %s15 = sadd.s32 1, %s11
  $region7: #{stream_down_apply.8} parent=0 // loop_footer_branch
    %10 = sbr.rel target = $region3
  $region8: #{stream_down_apply.8} parent=0 // loop_exit
    _

// kernel: tile.35
$region0: #{tile.35}
  #allocation0 [shape = 's32[1]{0}', space=sflag, size = 0x4, scoped, tag = 'scoped memory for tile.35']
  %s0 = inlined_call_operand.vmem [shape: f32[64], index: 0, kind: input, shape index: {}]
  %s1 = inlined_call_operand.vmem [shape: f32[2,64], index: 1, kind: output, shape index: {}]
  // Predicated region
  $region2: #{tile.35} parent=0 // pred_check
    _
  $region3: #{tile.35} parent=0 // pred_check_branch
    %3 = sbr.rel (0) target = $region5
  $region4: #{tile.35} parent=0 // pred_region
    _
  $region5: #{tile.35} parent=0 // pred_fallthru
    _
  %v4 = vld [vmem:[%s0] ss:$0 sm:$0xff]
  %5 = vst [vmem:[%s1] sm:$0x3] %v4

// kernel: tile.36
$region0: #{tile.36}
  %s0 = inlined_call_operand.vmem [shape: f32[2,64], index: 0, kind: input, shape index: {}]
  %s1 = inlined_call_operand.vmem [shape: f32[1,128], index: 1, kind: output, shape index: {}]
  $region1: #{tile.36} parent=0
    #allocation0 [shape = 'u8[4096]{0}', space=vmem, size = 0x1000, scoped, tag = 'scoped mem for output reshape']
    #allocation1 [shape = 'u8[4096]{0}', space=vmem, size = 0x1000, scoped, tag = 'scoped mem for input reshape']
    %s3 = sshllo.u32 0, 2
    %v4 = vld [vmem:[%s0] sm:%s3]
    %5 = vst [vmem:[#allocation1] sm:%s3] %v4
    %v6 = vld [vmem:[#allocation1] sm:$0x1]
    %vm7 = vcmask 523264
    %8 = vst.msk [vmem:[#allocation0] sm:$0x1] %vm7, %v6
    %s9 = scalar_lea.vmem [#allocation1], 1
    %v10 = vld [vmem:[%s9] sm:$0x1]
    %11 = vrot.lane.b32.xlu0 %v10, 64
    %v12 = vpop.permute.xlu0 %11
    %vm13 = vcmask 1048064
    %14 = vst.msk [vmem:[#allocation0] sm:$0x1] %vm13, %v12
    %s16 = sshllo.u32 0, 1
    %v18 = vld [vmem:[#allocation0] sm:%s16]
    %s19 = sshllo.u32 0, 1
    %20 = vst [vmem:[%s1] sm:%s19] %v18

// kernel: stream_down_apply.9
$region0: #{stream_down_apply.9}
  #allocation0 [shape = 'u32[]', space=smem, size = 0x4, offset = 0x4, fixed_abs, tag = 'smem constant byte address 0x4 - core index']
  #allocation1 [shape = 'u32[144,128]{1,0:T(1,128)}', space=vmem, size = 0x12000, scoped, tag = 'internal scratch']
  %s0 = inlined_call_operand.vmem [shape: bf16[256,128], index: 0, kind: input, shape index: {}]
  %s1 = inlined_call_operand.vmem [shape: f32[1,128], index: 1, kind: input, shape index: {}]
  %s2 = inlined_call_operand.vmem [shape: f32[1,128], index: 2, kind: input, shape index: {}]
  %s3 = inlined_call_operand.vmem [shape: bf16[256,128], index: 3, kind: output, shape index: {}]
  %s4 = sld [smem:[#allocation0]]
  $region45: #{stream_down_apply.9} parent=0
    _
  %s6 = ssub.s32 1, %s4
  %s7 = scalar_select 0, %s6, %s4
  loop: start=0, step=1, limit=4
  $region2: #{stream_down_apply.9} parent=0 // loop_pre_header
    _
  $region3: #{stream_down_apply.9} parent=0 // loop_header
    %s9 = sphi 0, %s13
    %p10 = scmp.ge.s32.totalorder %s9, 4
    %s19 = sphi 0, %s21
    %s22 = sphi 0, %s19
    %s23 = sphi 0, %s22
    %s39 = sphi 0, %s23
    %s43 = sphi 0, %s43
    %s45 = sphi 0, %s43
    %s46 = sphi 0, %s45
    %s60 = sphi 0, %s46
    %s64 = sphi 0, %s64
    %s66 = sphi 0, %s64
    %s67 = sphi 0, %s66
    %s81 = sphi 0, %s67
    %s87 = sphi 0, %s89
    %s90 = sphi 0, %s87
    %s91 = sphi 0, %s90
    %s107 = sphi 0, %s91
  $region4: #{stream_down_apply.9} parent=0 // loop_header_branch
    %12 = sbr.rel (%p10) target = $region8
  $region5: #{stream_down_apply.9} parent=0 // loop_body
    %s14 = ssub.s32 %s9, 1
    %s15 = ssub.s32 %s9, 2
    %s16 = sadd.s32 %s9, 1
    %s17 = ssub.s32 %s9, %s16
    %p18 = scmp.eq.s32.totalorder %s17, 0
    %s20 = sadd.s32 %s19, 1
    %s21 = scalar_select %p18, %s19, %s20
    %p24 = pneg %p18
    %p25 = scmp.eq.s32.totalorder %s9, 1
    %p26 = por %p24, %p25
    %p27 = scmp.ne.s32.totalorder %s19, %s22
    %p28 = scmp.eq.s32.totalorder %s9, 0
    %p29 = por %p27, %p28
    %p30 = scmp.ne.s32.totalorder %s19, %s22
    %p31 = scmp.eq.s32.totalorder %s14, 1
    %p32 = por %p30, %p31
    %p33 = scmp.ne.s32.totalorder %s22, %s23
    %p34 = scmp.eq.s32.totalorder %s14, 0
    %p35 = por %p33, %p34
    %p36 = scmp.ne.s32.totalorder %s22, %s23
    %p37 = scmp.eq.s32.totalorder %s15, 1
    %p38 = por %p36, %p37
    %p40 = scmp.ne.s32.totalorder %s23, %s39
    %p41 = scmp.eq.s32.totalorder %s15, 0
    %p42 = por %p40, %p41
    %s44 = sadd.s32 %s43, 1
    %p47 = scmp.eq.s32.totalorder %s9, 1
    %p48 = scmp.ne.s32.totalorder %s43, %s45
    %p49 = scmp.eq.s32.totalorder %s9, 0
    %p50 = por %p48, %p49
    %p51 = scmp.ne.s32.totalorder %s43, %s45
    %p52 = scmp.eq.s32.totalorder %s14, 1
    %p53 = por %p51, %p52
    %p54 = scmp.ne.s32.totalorder %s45, %s46
    %p55 = scmp.eq.s32.totalorder %s14, 0
    %p56 = por %p54, %p55
    %p57 = scmp.ne.s32.totalorder %s45, %s46
    %p58 = scmp.eq.s32.totalorder %s15, 1
    %p59 = por %p57, %p58
    %p61 = scmp.ne.s32.totalorder %s46, %s60
    %p62 = scmp.eq.s32.totalorder %s15, 0
    %p63 = por %p61, %p62
    %s65 = sadd.s32 %s64, 1
    %p68 = scmp.eq.s32.totalorder %s9, 1
    %p69 = scmp.ne.s32.totalorder %s64, %s66
    %p70 = scmp.eq.s32.totalorder %s9, 0
    %p71 = por %p69, %p70
    %p72 = scmp.ne.s32.totalorder %s64, %s66
    %p73 = scmp.eq.s32.totalorder %s14, 1
    %p74 = por %p72, %p73
    %p75 = scmp.ne.s32.totalorder %s66, %s67
    %p76 = scmp.eq.s32.totalorder %s14, 0
    %p77 = por %p75, %p76
    %p78 = scmp.ne.s32.totalorder %s66, %s67
    %p79 = scmp.eq.s32.totalorder %s15, 1
    %p80 = por %p78, %p79
    %p82 = scmp.ne.s32.totalorder %s67, %s81
    %p83 = scmp.eq.s32.totalorder %s15, 0
    %p84 = por %p82, %p83
    %s85 = ssub.s32 %s9, %s16
    %p86 = scmp.eq.s32.totalorder %s85, 0
    %s88 = sadd.s32 %s87, 1
    %s89 = scalar_select %p86, %s87, %s88
    %p92 = pneg %p86
    %p93 = scmp.eq.s32.totalorder %s9, 1
    %p94 = por %p92, %p93
    %p95 = scmp.ne.s32.totalorder %s87, %s90
    %p96 = scmp.eq.s32.totalorder %s9, 0
    %p97 = por %p95, %p96
    %p98 = scmp.ne.s32.totalorder %s87, %s90
    %p99 = scmp.eq.s32.totalorder %s14, 1
    %p100 = por %p98, %p99
    %p101 = scmp.ne.s32.totalorder %s90, %s91
    %p102 = scmp.eq.s32.totalorder %s14, 0
    %p103 = por %p101, %p102
    %p104 = scmp.ne.s32.totalorder %s90, %s91
    %p105 = scmp.eq.s32.totalorder %s15, 1
    %p106 = por %p104, %p105
    %p108 = scmp.ne.s32.totalorder %s91, %s107
    %p109 = scmp.eq.s32.totalorder %s15, 0
    %p110 = por %p108, %p109
    %p111 = scmp.le.s32.totalorder 1, %s9
    %p112 = scmp.lt.s32.totalorder %s9, 3
    %p113 = pnand %p111, %p112
    %p114 = pneg %p113
    // Predicated region
    $region9: #{stream_down_apply.9} parent=5 // pred_check
      _
    $region10: #{stream_down_apply.9} parent=5 // pred_check_branch
      %116 = sbr.rel (%p113) target = $region12
    $region11: #{stream_down_apply.9} parent=5 // pred_region
      %s117 = ssub.s32 %s9, 1
      // Predicated region
      $region13: #{stream_down_apply.9} parent=11 // pred_check
        %p118 = pneg %p56
      $region14: #{stream_down_apply.9} parent=11 // pred_check_branch
        %120 = sbr.rel (%p118) target = $region16
      $region15: #{stream_down_apply.9} parent=11 // pred_region
        _
      $region16: #{stream_down_apply.9} parent=11 // pred_fallthru
        _
      // Predicated region
      $region17: #{stream_down_apply.9} parent=11 // pred_check
        %p121 = pneg %p77
      $region18: #{stream_down_apply.9} parent=11 // pred_check_branch
        %123 = sbr.rel (%p121) target = $region20
      $region19: #{stream_down_apply.9} parent=11 // pred_region
        _
      $region20: #{stream_down_apply.9} parent=11 // pred_fallthru
        _
    $region12: #{stream_down_apply.9} parent=5 // pred_fallthru
      _
    %p124 = scmp.lt.s32.totalorder %s9, 2
    // Predicated region
    $region21: #{stream_down_apply.9} parent=5 // pred_check
      %p125 = pneg %p124
    $region22: #{stream_down_apply.9} parent=5 // pred_check_branch
      %127 = sbr.rel (%p125) target = $region24
    $region23: #{stream_down_apply.9} parent=5 // pred_region
      // Predicated region
      $region25: #{stream_down_apply.9} parent=23 // pred_check
        %p128 = pneg %p29
      $region26: #{stream_down_apply.9} parent=23 // pred_check_branch
        %130 = sbr.rel (%p128) target = $region28
      $region27: #{stream_down_apply.9} parent=23 // pred_region
        %s131 = smul.u32 16, %s9
        %p132 = scmp.lt.s32.totalorder %s131, 31
        %s133 = scalar_select %p132, %s131, 31
        %s134 = smul.addr %s133, 4
        %s135 = scalar_lea.vmem %s0, %s134
        %s136 = smul.u32 16, %s9
      $region28: #{stream_down_apply.9} parent=23 // pred_fallthru
        _
    $region24: #{stream_down_apply.9} parent=5 // pred_fallthru
      _
    %p137 = scmp.le.s32.totalorder 1, %s9
    %p138 = scmp.lt.s32.totalorder %s9, 3
    %p139 = pnand %p137, %p138
    %p140 = pneg %p139
    // Predicated region
    $region29: #{stream_down_apply.9} parent=5 // pred_check
      _
    $region30: #{stream_down_apply.9} parent=5 // pred_check_branch
      %142 = sbr.rel (%p139) target = $region32
    $region31: #{stream_down_apply.9} parent=5 // pred_region
      %s143 = ssub.s32 %s9, 1
      %s144 = smul.u32 16, %s14
      %p145 = scmp.lt.s32.totalorder %s144, 31
      %s146 = scalar_select %p145, %s144, 31
      %s147 = smul.addr %s146, 4
      %s148 = scalar_lea.vmem %s0, %s147
      %p149 = pneg %p35
      %p150 = pneg %p32
      %p151 = pneg %p56
      %p152 = pneg %p53
      %p153 = pneg %p77
      %p154 = pneg %p74
      %p155 = pneg %p103
      %p156 = pneg %p100
      %s157 = smul.u32 16, %s14
      %p158 = scmp.lt.s32.totalorder %s157, 31
      %s159 = scalar_select %p158, %s157, 31
      %s160 = smul.addr %s159, 4
      %s161 = scalar_lea.vmem %s3, %s160
      %s162 = smul.u32 16, %s14
      %p163 = scmp.lt.s32.totalorder %s162, 31
      %s164 = scalar_select %p163, %s162, 31
      %s165 = smul.addr %s164, 4
      %s166 = scalar_lea.vmem %s0, %s165
      %s167 = smul.u32 16, %s14
      %s168 = smul.u32 16, %s14
      %p169 = scmp.lt.s32.totalorder %s168, 31
      %s170 = scalar_select %p169, %s168, 31
      %s171 = smul.addr %s170, 4
      %s172 = scalar_lea.vmem %s3, %s171
      %s173 = smul.u32 16, %s14
      %v174 = vld [vmem:[%s166] sm:$0xf]
      %v175 = vld [vmem:[%s166 + $0x4] sm:$0xf]
      %v176 = vld [vmem:[%s166 + $0x8] sm:$0xf]
      %v177 = vld [vmem:[%s166 + $0xc] sm:$0xf]
      %v178 = vld [vmem:[%s166 + $0x10] sm:$0xf]
      %v179 = vld [vmem:[%s166 + $0x14] sm:$0xf]
      %v180 = vld [vmem:[%s166 + $0x18] sm:$0xf]
      %v181 = vld [vmem:[%s166 + $0x1c] sm:$0xf]
      %v182 = vld [vmem:[%s166 + $0x20] sm:$0xf]
      %v183 = vld [vmem:[%s166 + $0x24] sm:$0xf]
      %v184 = vld [vmem:[%s166 + $0x28] sm:$0xf]
      %v185 = vld [vmem:[%s166 + $0x2c] sm:$0xf]
      %v186 = vld [vmem:[%s166 + $0x30] sm:$0xf]
      %v187 = vld [vmem:[%s166 + $0x34] sm:$0xf]
      %v188 = vld [vmem:[%s166 + $0x38] sm:$0xf]
      %v189 = vld [vmem:[%s166 + $0x3c] sm:$0xf]
      %v190 = vunpack.c.l.bf16 %v174
      %v191 = vunpack.c.l.bf16 %v175
      %v192 = vunpack.c.l.bf16 %v176
      %v193 = vunpack.c.l.bf16 %v177
      %v194 = vunpack.c.l.bf16 %v178
      %v195 = vunpack.c.l.bf16 %v179
      %v196 = vunpack.c.l.bf16 %v180
      %v197 = vunpack.c.l.bf16 %v181
      %v198 = vunpack.c.l.bf16 %v182
      %v199 = vunpack.c.l.bf16 %v183
      %v200 = vunpack.c.l.bf16 %v184
      %v201 = vunpack.c.l.bf16 %v185
      %v202 = vunpack.c.l.bf16 %v186
      %v203 = vunpack.c.l.bf16 %v187
      %v204 = vunpack.c.l.bf16 %v188
      %v205 = vunpack.c.l.bf16 %v189
      %v206 = vld [vmem:[%s1] sm:$0x1]
      %v208 = vlaneseq
      %v209 = vshrl.u32 %v208, 7
      %v210 = vsub.s32 0, %v209
      %v211 = vrot.slane %v206, %v210
      %v213 = vmul.f32 %v190, %v211
      %v214 = vmul.f32 %v191, %v211
      %v215 = vmul.f32 %v192, %v211
      %v216 = vmul.f32 %v193, %v211
      %v217 = vmul.f32 %v194, %v211
      %v218 = vmul.f32 %v195, %v211
      %v219 = vmul.f32 %v196, %v211
      %v220 = vmul.f32 %v197, %v211
      %v221 = vmul.f32 %v198, %v211
      %v222 = vmul.f32 %v199, %v211
      %v223 = vmul.f32 %v200, %v211
      %v224 = vmul.f32 %v201, %v211
      %v225 = vmul.f32 %v202, %v211
      %v226 = vmul.f32 %v203, %v211
      %v227 = vmul.f32 %v204, %v211
      %v228 = vmul.f32 %v205, %v211
      %v229 = vld [vmem:[%s2] sm:$0x1]
      %v231 = vlaneseq
      %v232 = vshrl.u32 %v231, 7
      %v233 = vsub.s32 0, %v232
      %v234 = vrot.slane %v229, %v233
      %v236 = vadd.f32 %v213, %v234
      %v237 = vadd.f32 %v214, %v234
      %v238 = vadd.f32 %v215, %v234
      %v239 = vadd.f32 %v216, %v234
      %v240 = vadd.f32 %v217, %v234
      %v241 = vadd.f32 %v218, %v234
      %v242 = vadd.f32 %v219, %v234
      %v243 = vadd.f32 %v220, %v234
      %v244 = vadd.f32 %v221, %v234
      %v245 = vadd.f32 %v222, %v234
      %v246 = vadd.f32 %v223, %v234
      %v247 = vadd.f32 %v224, %v234
      %v248 = vadd.f32 %v225, %v234
      %v249 = vadd.f32 %v226, %v234
      %v250 = vadd.f32 %v227, %v234
      %v251 = vadd.f32 %v228, %v234
      %v252 = vmax.f32 %v236, 0.0
      %v253 = vmax.f32 %v237, 0.0
      %v254 = vmax.f32 %v238, 0.0
      %v255 = vmax.f32 %v239, 0.0
      %v256 = vmax.f32 %v240, 0.0
      %v257 = vmax.f32 %v241, 0.0
      %v258 = vmax.f32 %v242, 0.0
      %v259 = vmax.f32 %v243, 0.0
      %v260 = vmax.f32 %v244, 0.0
      %v261 = vmax.f32 %v245, 0.0
      %v262 = vmax.f32 %v246, 0.0
      %v263 = vmax.f32 %v247, 0.0
      %v264 = vmax.f32 %v248, 0.0
      %v265 = vmax.f32 %v249, 0.0
      %v266 = vmax.f32 %v250, 0.0
      %v267 = vmax.f32 %v251, 0.0
      %v268 = vpack.c.bf16 %v253, %v252
      %v269 = vpack.c.bf16 %v255, %v254
      %v270 = vpack.c.bf16 %v257, %v256
      %v271 = vpack.c.bf16 %v259, %v258
      %v272 = vpack.c.bf16 %v261, %v260
      %v273 = vpack.c.bf16 %v263, %v262
      %v274 = vpack.c.bf16 %v265, %v264
      %v275 = vpack.c.bf16 %v267, %v266
      %v284 = vunpack.c.l.b16 %v268
      %v285 = vunpack.c.h.b16 %v268
      %v286 = vunpack.c.l.b16 %v269
      %v287 = vunpack.c.h.b16 %v269
      %v288 = vunpack.c.l.b16 %v270
      %v289 = vunpack.c.h.b16 %v270
      %v290 = vunpack.c.l.b16 %v271
      %v291 = vunpack.c.h.b16 %v271
      %v292 = vunpack.c.l.b16 %v272
      %v293 = vunpack.c.h.b16 %v272
      %v294 = vunpack.c.l.b16 %v273
      %v295 = vunpack.c.h.b16 %v273
      %v296 = vunpack.c.l.b16 %v274
      %v297 = vunpack.c.h.b16 %v274
      %v298 = vunpack.c.l.b16 %v275
      %v299 = vunpack.c.h.b16 %v275
      %v300 = vpack.c.b16 %v284, %v284
      %v301 = vpack.c.b16 %v285, %v285
      %v302 = vpack.c.b16 %v286, %v286
      %v303 = vpack.c.b16 %v287, %v287
      %v304 = vpack.c.b16 %v288, %v288
      %v305 = vpack.c.b16 %v289, %v289
      %v306 = vpack.c.b16 %v290, %v290
      %v307 = vpack.c.b16 %v291, %v291
      %v308 = vpack.c.b16 %v292, %v292
      %v309 = vpack.c.b16 %v293, %v293
      %v310 = vpack.c.b16 %v294, %v294
      %v311 = vpack.c.b16 %v295, %v295
      %v312 = vpack.c.b16 %v296, %v296
      %v313 = vpack.c.b16 %v297, %v297
      %v314 = vpack.c.b16 %v298, %v298
      %v315 = vpack.c.b16 %v299, %v299
      %332 = vst [vmem:[%s172] sm:$0xf] %v300
      %333 = vst [vmem:[%s172 + $0x4] sm:$0xf] %v301
      %334 = vst [vmem:[%s172 + $0x8] sm:$0xf] %v302
      %335 = vst [vmem:[%s172 + $0xc] sm:$0xf] %v303
      %336 = vst [vmem:[%s172 + $0x10] sm:$0xf] %v304
      %337 = vst [vmem:[%s172 + $0x14] sm:$0xf] %v305
      %338 = vst [vmem:[%s172 + $0x18] sm:$0xf] %v306
      %339 = vst [vmem:[%s172 + $0x1c] sm:$0xf] %v307
      %340 = vst [vmem:[%s172 + $0x20] sm:$0xf] %v308
      %341 = vst [vmem:[%s172 + $0x24] sm:$0xf] %v309
      %342 = vst [vmem:[%s172 + $0x28] sm:$0xf] %v310
      %343 = vst [vmem:[%s172 + $0x2c] sm:$0xf] %v311
      %344 = vst [vmem:[%s172 + $0x30] sm:$0xf] %v312
      %345 = vst [vmem:[%s172 + $0x34] sm:$0xf] %v313
      %346 = vst [vmem:[%s172 + $0x38] sm:$0xf] %v314
      %347 = vst [vmem:[%s172 + $0x3c] sm:$0xf] %v315
      %s348 = smul.u32 16, %s14
      %p349 = scmp.lt.s32.totalorder %s348, 31
      %s350 = scalar_select %p349, %s348, 31
      %s351 = smul.addr %s350, 4
      %s352 = scalar_lea.vmem %s3, %s351
      // Predicated region
      $region33: #{stream_down_apply.9} parent=31 // pred_check
        %p353 = pneg %p100
      $region34: #{stream_down_apply.9} parent=31 // pred_check_branch
        %355 = sbr.rel (%p353) target = $region36
      $region35: #{stream_down_apply.9} parent=31 // pred_region
        %s356 = smul.u32 16, %s14
      $region36: #{stream_down_apply.9} parent=31 // pred_fallthru
        _
    $region32: #{stream_down_apply.9} parent=5 // pred_fallthru
      _
    %p357 = scmp.le.s32.totalorder 2, %s9
    // Predicated region
    $region37: #{stream_down_apply.9} parent=5 // pred_check
      %p358 = pneg %p357
    $region38: #{stream_down_apply.9} parent=5 // pred_check_branch
      %360 = sbr.rel (%p358) target = $region40
    $region39: #{stream_down_apply.9} parent=5 // pred_region
      %s361 = ssub.s32 %s9, 2
      // Predicated region
      $region41: #{stream_down_apply.9} parent=39 // pred_check
        %p362 = pneg %p106
      $region42: #{stream_down_apply.9} parent=39 // pred_check_branch
        %364 = sbr.rel (%p362) target = $region44
      $region43: #{stream_down_apply.9} parent=39 // pred_region
        %s365 = smul.u32 16, %s15
        %p366 = scmp.lt.s32.totalorder %s365, 31
        %s367 = scalar_select %p366, %s365, 31
        %s368 = smul.addr %s367, 4
        %s369 = scalar_lea.vmem %s3, %s368
      $region44: #{stream_down_apply.9} parent=39 // pred_fallthru
        _
    $region40: #{stream_down_apply.9} parent=5 // pred_fallthru
      _
  $region6: #{stream_down_apply.9} parent=0 // loop_footer
    %s13 = sadd.s32 1, %s9
  $region7: #{stream_down_apply.9} parent=0 // loop_footer_branch
    %8 = sbr.rel target = $region3
  $region8: #{stream_down_apply.9} parent=0 // loop_exit
    _

// kernel: stream_down_apply.10
$region0: #{stream_down_apply.10}
  #allocation0 [shape = 'u32[]', space=smem, size = 0x4, offset = 0x4, fixed_abs, tag = 'smem constant byte address 0x4 - core index']
  #allocation1 [shape = 'u32[144,128]{1,0:T(1,128)}', space=vmem, size = 0x12000, scoped, tag = 'internal scratch']
  %s0 = inlined_call_operand.vmem [shape: bf16[128,576], index: 0, kind: input, shape index: {}]
  %s1 = inlined_call_operand.vmem [shape: bf16[576,128], index: 1, kind: input, shape index: {}]
  %s2 = inlined_call_operand.vmem [shape: f32[1,128], index: 2, kind: input, shape index: {}]
  %s3 = inlined_call_operand.vmem [shape: bf16[128,128], index: 3, kind: output, shape index: {0}]
  %s4 = inlined_call_operand.vmem [shape: f32[2,2,128], index: 4, kind: output, shape index: {1}]
  %5 = xla_tuple %s3, %s4
  %s6 = sld [smem:[#allocation0]]
  $region53: #{stream_down_apply.10} parent=0
    _
  %s8 = ssub.s32 1, %s6
  %s9 = scalar_select 0, %s8, %s6
  loop: start=0, step=1, limit=4
  $region2: #{stream_down_apply.10} parent=0 // loop_pre_header
    _
  $region3: #{stream_down_apply.10} parent=0 // loop_header
    %s11 = sphi 0, %s15
    %p12 = scmp.ge.s32.totalorder %s11, 4
    %s21 = sphi 0, %s23
    %s24 = sphi 0, %s21
    %s25 = sphi 0, %s24
    %s41 = sphi 0, %s25
    %s45 = sphi 0, %s45
    %s47 = sphi 0, %s45
    %s48 = sphi 0, %s47
    %s62 = sphi 0, %s48
    %s66 = sphi 0, %s66
    %s68 = sphi 0, %s66
    %s69 = sphi 0, %s68
    %s83 = sphi 0, %s69
    %s89 = sphi 0, %s91
    %s92 = sphi 0, %s89
    %s93 = sphi 0, %s92
    %s109 = sphi 0, %s93
    %s115 = sphi 0, %s117
    %s118 = sphi 0, %s115
    %s119 = sphi 0, %s118
    %s135 = sphi 0, %s119
  $region4: #{stream_down_apply.10} parent=0 // loop_header_branch
    %14 = sbr.rel (%p12) target = $region8
  $region5: #{stream_down_apply.10} parent=0 // loop_body
    %s16 = ssub.s32 %s11, 1
    %s17 = ssub.s32 %s11, 2
    %s18 = sadd.s32 %s11, 1
    %s19 = ssub.s32 %s11, %s18
    %p20 = scmp.eq.s32.totalorder %s19, 0
    %s22 = sadd.s32 %s21, 1
    %s23 = scalar_select %p20, %s21, %s22
    %p26 = pneg %p20
    %p27 = scmp.eq.s32.totalorder %s11, 1
    %p28 = por %p26, %p27
    %p29 = scmp.ne.s32.totalorder %s21, %s24
    %p30 = scmp.eq.s32.totalorder %s11, 0
    %p31 = por %p29, %p30
    %p32 = scmp.ne.s32.totalorder %s21, %s24
    %p33 = scmp.eq.s32.totalorder %s16, 1
    %p34 = por %p32, %p33
    %p35 = scmp.ne.s32.totalorder %s24, %s25
    %p36 = scmp.eq.s32.totalorder %s16, 0
    %p37 = por %p35, %p36
    %p38 = scmp.ne.s32.totalorder %s24, %s25
    %p39 = scmp.eq.s32.totalorder %s17, 1
    %p40 = por %p38, %p39
    %p42 = scmp.ne.s32.totalorder %s25, %s41
    %p43 = scmp.eq.s32.totalorder %s17, 0
    %p44 = por %p42, %p43
    %s46 = sadd.s32 %s45, 1
    %p49 = scmp.eq.s32.totalorder %s11, 1
    %p50 = scmp.ne.s32.totalorder %s45, %s47
    %p51 = scmp.eq.s32.totalorder %s11, 0
    %p52 = por %p50, %p51
    %p53 = scmp.ne.s32.totalorder %s45, %s47
    %p54 = scmp.eq.s32.totalorder %s16, 1
    %p55 = por %p53, %p54
    %p56 = scmp.ne.s32.totalorder %s47, %s48
    %p57 = scmp.eq.s32.totalorder %s16, 0
    %p58 = por %p56, %p57
    %p59 = scmp.ne.s32.totalorder %s47, %s48
    %p60 = scmp.eq.s32.totalorder %s17, 1
    %p61 = por %p59, %p60
    %p63 = scmp.ne.s32.totalorder %s48, %s62
    %p64 = scmp.eq.s32.totalorder %s17, 0
    %p65 = por %p63, %p64
    %s67 = sadd.s32 %s66, 1
    %p70 = scmp.eq.s32.totalorder %s11, 1
    %p71 = scmp.ne.s32.totalorder %s66, %s68
    %p72 = scmp.eq.s32.totalorder %s11, 0
    %p73 = por %p71, %p72
    %p74 = scmp.ne.s32.totalorder %s66, %s68
    %p75 = scmp.eq.s32.totalorder %s16, 1
    %p76 = por %p74, %p75
    %p77 = scmp.ne.s32.totalorder %s68, %s69
    %p78 = scmp.eq.s32.totalorder %s16, 0
    %p79 = por %p77, %p78
    %p80 = scmp.ne.s32.totalorder %s68, %s69
    %p81 = scmp.eq.s32.totalorder %s17, 1
    %p82 = por %p80, %p81
    %p84 = scmp.ne.s32.totalorder %s69, %s83
    %p85 = scmp.eq.s32.totalorder %s17, 0
    %p86 = por %p84, %p85
    %s87 = ssub.s32 %s11, %s18
    %p88 = scmp.eq.s32.totalorder %s87, 0
    %s90 = sadd.s32 %s89, 1
    %s91 = scalar_select %p88, %s89, %s90
    %p94 = pneg %p88
    %p95 = scmp.eq.s32.totalorder %s11, 1
    %p96 = por %p94, %p95
    %p97 = scmp.ne.s32.totalorder %s89, %s92
    %p98 = scmp.eq.s32.totalorder %s11, 0
    %p99 = por %p97, %p98
    %p100 = scmp.ne.s32.totalorder %s89, %s92
    %p101 = scmp.eq.s32.totalorder %s16, 1
    %p102 = por %p100, %p101
    %p103 = scmp.ne.s32.totalorder %s92, %s93
    %p104 = scmp.eq.s32.totalorder %s16, 0
    %p105 = por %p103, %p104
    %p106 = scmp.ne.s32.totalorder %s92, %s93
    %p107 = scmp.eq.s32.totalorder %s17, 1
    %p108 = por %p106, %p107
    %p110 = scmp.ne.s32.totalorder %s93, %s109
    %p111 = scmp.eq.s32.totalorder %s17, 0
    %p112 = por %p110, %p111
    %s113 = ssub.s32 %s11, %s18
    %p114 = scmp.eq.s32.totalorder %s113, 0
    %s116 = sadd.s32 %s115, 1
    %s117 = scalar_select %p114, %s115, %s116
    %p120 = pneg %p114
    %p121 = scmp.eq.s32.totalorder %s11, 1
    %p122 = por %p120, %p121
    %p123 = scmp.ne.s32.totalorder %s115, %s118
    %p124 = scmp.eq.s32.totalorder %s11, 0
    %p125 = por %p123, %p124
    %p126 = scmp.ne.s32.totalorder %s115, %s118
    %p127 = scmp.eq.s32.totalorder %s16, 1
    %p128 = por %p126, %p127
    %p129 = scmp.ne.s32.totalorder %s118, %s119
    %p130 = scmp.eq.s32.totalorder %s16, 0
    %p131 = por %p129, %p130
    %p132 = scmp.ne.s32.totalorder %s118, %s119
    %p133 = scmp.eq.s32.totalorder %s17, 1
    %p134 = por %p132, %p133
    %p136 = scmp.ne.s32.totalorder %s119, %s135
    %p137 = scmp.eq.s32.totalorder %s17, 0
    %p138 = por %p136, %p137
    %p139 = scmp.le.s32.totalorder 1, %s11
    %p140 = scmp.lt.s32.totalorder %s11, 3
    %p141 = pnand %p139, %p140
    %p142 = pneg %p141
    // Predicated region
    $region9: #{stream_down_apply.10} parent=5 // pred_check
      _
    $region10: #{stream_down_apply.10} parent=5 // pred_check_branch
      %144 = sbr.rel (%p141) target = $region12
    $region11: #{stream_down_apply.10} parent=5 // pred_region
      %s145 = ssub.s32 %s11, 1
      // Predicated region
      $region13: #{stream_down_apply.10} parent=11 // pred_check
        %p146 = pneg %p58
      $region14: #{stream_down_apply.10} parent=11 // pred_check_branch
        %148 = sbr.rel (%p146) target = $region16
      $region15: #{stream_down_apply.10} parent=11 // pred_region
        _
      $region16: #{stream_down_apply.10} parent=11 // pred_fallthru
        _
      // Predicated region
      $region17: #{stream_down_apply.10} parent=11 // pred_check
        %p149 = pneg %p79
      $region18: #{stream_down_apply.10} parent=11 // pred_check_branch
        %151 = sbr.rel (%p149) target = $region20
      $region19: #{stream_down_apply.10} parent=11 // pred_region
        _
      $region20: #{stream_down_apply.10} parent=11 // pred_fallthru
        _
    $region12: #{stream_down_apply.10} parent=5 // pred_fallthru
      _
    %p152 = scmp.lt.s32.totalorder %s11, 2
    // Predicated region
    $region21: #{stream_down_apply.10} parent=5 // pred_check
      %p153 = pneg %p152
    $region22: #{stream_down_apply.10} parent=5 // pred_check_branch
      %155 = sbr.rel (%p153) target = $region24
    $region23: #{stream_down_apply.10} parent=5 // pred_region
      // Predicated region
      $region25: #{stream_down_apply.10} parent=23 // pred_check
        %p156 = pneg %p31
      $region26: #{stream_down_apply.10} parent=23 // pred_check_branch
        %158 = sbr.rel (%p156) target = $region28
      $region27: #{stream_down_apply.10} parent=23 // pred_region
        %s159 = smul.u32 8, %s11
        %p160 = scmp.lt.s32.totalorder %s159, 15
        %s161 = scalar_select %p160, %s159, 15
        %s162 = smul.addr %s161, 5
        %s163 = smul.addr %s162, 4
        %s164 = scalar_lea.vmem %s0, %s163
        %s165 = smul.u32 8, %s11
      $region28: #{stream_down_apply.10} parent=23 // pred_fallthru
        _
    $region24: #{stream_down_apply.10} parent=5 // pred_fallthru
      _
    %p166 = scmp.le.s32.totalorder 1, %s11
    %p167 = scmp.lt.s32.totalorder %s11, 3
    %p168 = pnand %p166, %p167
    %p169 = pneg %p168
    // Predicated region
    $region29: #{stream_down_apply.10} parent=5 // pred_check
      _
    $region30: #{stream_down_apply.10} parent=5 // pred_check_branch
      %171 = sbr.rel (%p168) target = $region32
    $region31: #{stream_down_apply.10} parent=5 // pred_region
      %s172 = ssub.s32 %s11, 1
      %s173 = smul.u32 8, %s16
      %p174 = scmp.lt.s32.totalorder %s173, 15
      %s175 = scalar_select %p174, %s173, 15
      %s176 = smul.addr %s175, 5
      %s177 = smul.addr %s176, 4
      %s178 = scalar_lea.vmem %s0, %s177
      %p179 = pneg %p37
      %p180 = pneg %p34
      %p181 = pneg %p58
      %p182 = pneg %p55
      %p183 = pneg %p79
      %p184 = pneg %p76
      %p185 = pneg %p105
      %p186 = pneg %p102
      %s187 = smul.u32 8, %s16
      %p188 = scmp.lt.s32.totalorder %s187, 15
      %s189 = scalar_select %p188, %s187, 15
      %s190 = smul.addr %s189, 4
      %s191 = scalar_lea.vmem %s3, %s190
      %p192 = pneg %p131
      %p193 = pneg %p128
      %p194 = scmp.lt.s32.totalorder %s16, 1
      %s195 = scalar_select %p194, %s16, 1
      %s196 = smul.addr %s195, 2
      %s197 = scalar_lea.vmem %s4, %s196
      %s198 = smul.u32 8, %s16
      %p199 = scmp.lt.s32.totalorder %s198, 15
      %s200 = scalar_select %p199, %s198, 15
      %s201 = smul.addr %s200, 5
      %s202 = smul.addr %s201, 4
      %s203 = scalar_lea.vmem %s0, %s202
      %s204 = smul.u32 8, %s16
      %s205 = smul.u32 8, %s16
      %p206 = scmp.lt.s32.totalorder %s205, 15
      %s207 = scalar_select %p206, %s205, 15
      %s208 = smul.addr %s207, 4
      %s209 = scalar_lea.vmem %s3, %s208
      %s210 = smul.u32 8, %s16
      %p211 = scmp.lt.s32.totalorder %s16, 1
      %s212 = scalar_select %p211, %s16, 1
      %s213 = smul.addr %s212, 2
      %s214 = scalar_lea.vmem %s4, %s213
      %v216 = vld [vmem:[%s203] sm:$0xff]
      %v217 = vld [vmem:[%s203 + $0x8] sm:$0xff]
      %v218 = vld [vmem:[%s203 + $0x10] sm:$0xf]
      %v219 = vld [vmem:[%s203 + $0x14] sm:$0xff]
      %v220 = vld [vmem:[%s203 + $0x1c] sm:$0xff]
      %v221 = vld [vmem:[%s203 + $0x24] sm:$0xf]
      %v222 = vld [vmem:[%s203 + $0x28] sm:$0xff]
      %v223 = vld [vmem:[%s203 + $0x30] sm:$0xff]
      %v224 = vld [vmem:[%s203 + $0x38] sm:$0xf]
      %v225 = vld [vmem:[%s203 + $0x3c] sm:$0xff]
      %v226 = vld [vmem:[%s203 + $0x44] sm:$0xff]
      %v227 = vld [vmem:[%s203 + $0x4c] sm:$0xf]
      %v228 = vld [vmem:[%s203 + $0x50] sm:$0xff]
      %v229 = vld [vmem:[%s203 + $0x58] sm:$0xff]
      %v230 = vld [vmem:[%s203 + $0x60] sm:$0xf]
      %v231 = vld [vmem:[%s203 + $0x64] sm:$0xff]
      %v232 = vld [vmem:[%s203 + $0x6c] sm:$0xff]
      %v233 = vld [vmem:[%s203 + $0x74] sm:$0xf]
      %v234 = vld [vmem:[%s203 + $0x78] sm:$0xff]
      %v235 = vld [vmem:[%s203 + $0x80] sm:$0xff]
      %v236 = vld [vmem:[%s203 + $0x88] sm:$0xf]
      %v237 = vld [vmem:[%s203 + $0x8c] sm:$0xff]
      %v238 = vld [vmem:[%s203 + $0x94] sm:$0xff]
      %v239 = vld [vmem:[%s203 + $0x9c] sm:$0xf]
      %v240 = vld [vmem:[%s1] sm:$0xf]
      %v241 = vld [vmem:[%s1 + $0x4] sm:$0xf]
      %v242 = vld [vmem:[%s1 + $0x8] sm:$0xf]
      %v243 = vld [vmem:[%s1 + $0xc] sm:$0xf]
      %v244 = vld [vmem:[%s1 + $0x10] sm:$0xf]
      %v245 = vld [vmem:[%s1 + $0x14] sm:$0xf]
      %v246 = vld [vmem:[%s1 + $0x18] sm:$0xf]
      %v247 = vld [vmem:[%s1 + $0x1c] sm:$0xf]
      %v248 = vld [vmem:[%s1 + $0x20] sm:$0xf]
      %v249 = vld [vmem:[%s1 + $0x24] sm:$0xf]
      %v250 = vld [vmem:[%s1 + $0x28] sm:$0xf]
      %v251 = vld [vmem:[%s1 + $0x2c] sm:$0xf]
      %v252 = vld [vmem:[%s1 + $0x30] sm:$0xf]
      %v253 = vld [vmem:[%s1 + $0x34] sm:$0xf]
      %v254 = vld [vmem:[%s1 + $0x38] sm:$0xf]
      %v255 = vld [vmem:[%s1 + $0x3c] sm:$0xf]
      %v256 = vld [vmem:[%s1 + $0x40] sm:$0xf]
      %v257 = vld [vmem:[%s1 + $0x44] sm:$0xf]
      %v258 = vld [vmem:[%s1 + $0x48] sm:$0xf]
      %v259 = vld [vmem:[%s1 + $0x4c] sm:$0xf]
      %v260 = vld [vmem:[%s1 + $0x50] sm:$0xf]
      %v261 = vld [vmem:[%s1 + $0x54] sm:$0xf]
      %v262 = vld [vmem:[%s1 + $0x58] sm:$0xf]
      %v263 = vld [vmem:[%s1 + $0x5c] sm:$0xf]
      %v264 = vld [vmem:[%s1 + $0x60] sm:$0xf]
      %v265 = vld [vmem:[%s1 + $0x64] sm:$0xf]
      %v266 = vld [vmem:[%s1 + $0x68] sm:$0xf]
      %v267 = vld [vmem:[%s1 + $0x6c] sm:$0xf]
      %v268 = vld [vmem:[%s1 + $0x70] sm:$0xf]
      %v269 = vld [vmem:[%s1 + $0x74] sm:$0xf]
      %v270 = vld [vmem:[%s1 + $0x78] sm:$0xf]
      %v271 = vld [vmem:[%s1 + $0x7c] sm:$0xf]
      %v272 = vld [vmem:[%s1 + $0x80] sm:$0xf]
      %v273 = vld [vmem:[%s1 + $0x84] sm:$0xf]
      %v274 = vld [vmem:[%s1 + $0x88] sm:$0xf]
      %v275 = vld [vmem:[%s1 + $0x8c] sm:$0xf]
      %v276 = vld [vmem:[%s1 + $0x90] sm:$0xf]
      %v277 = vld [vmem:[%s1 + $0x94] sm:$0xf]
      %v278 = vld [vmem:[%s1 + $0x98] sm:$0xf]
      %v279 = vld [vmem:[%s1 + $0x9c] sm:$0xf]
      %v280 = vld [vmem:[%s1 + $0xa0] sm:$0xf]
      %v281 = vld [vmem:[%s1 + $0xa4] sm:$0xf]
      %v282 = vld [vmem:[%s1 + $0xa8] sm:$0xf]
      %v283 = vld [vmem:[%s1 + $0xac] sm:$0xf]
      %v284 = vld [vmem:[%s1 + $0xb0] sm:$0xf]
      %v285 = vld [vmem:[%s1 + $0xb4] sm:$0xf]
      %v286 = vld [vmem:[%s1 + $0xb8] sm:$0xf]
      %v287 = vld [vmem:[%s1 + $0xbc] sm:$0xf]
      %v288 = vld [vmem:[%s1 + $0xc0] sm:$0xf]
      %v289 = vld [vmem:[%s1 + $0xc4] sm:$0xf]
      %v290 = vld [vmem:[%s1 + $0xc8] sm:$0xf]
      %v291 = vld [vmem:[%s1 + $0xcc] sm:$0xf]
      %v292 = vld [vmem:[%s1 + $0xd0] sm:$0xf]
      %v293 = vld [vmem:[%s1 + $0xd4] sm:$0xf]
      %v294 = vld [vmem:[%s1 + $0xd8] sm:$0xf]
      %v295 = vld [vmem:[%s1 + $0xdc] sm:$0xf]
      %v296 = vld [vmem:[%s1 + $0xe0] sm:$0xf]
      %v297 = vld [vmem:[%s1 + $0xe4] sm:$0xf]
      %v298 = vld [vmem:[%s1 + $0xe8] sm:$0xf]
      %v299 = vld [vmem:[%s1 + $0xec] sm:$0xf]
      %v300 = vld [vmem:[%s1 + $0xf0] sm:$0xf]
      %v301 = vld [vmem:[%s1 + $0xf4] sm:$0xf]
      %v302 = vld [vmem:[%s1 + $0xf8] sm:$0xf]
      %v303 = vld [vmem:[%s1 + $0xfc] sm:$0xf]
      %v304 = vld [vmem:[%s1 + $0x100] sm:$0xf]
      %v305 = vld [vmem:[%s1 + $0x104] sm:$0xf]
      %v306 = vld [vmem:[%s1 + $0x108] sm:$0xf]
      %v307 = vld [vmem:[%s1 + $0x10c] sm:$0xf]
      %v308 = vld [vmem:[%s1 + $0x110] sm:$0xf]
      %v309 = vld [vmem:[%s1 + $0x114] sm:$0xf]
      %v310 = vld [vmem:[%s1 + $0x118] sm:$0xf]
      %v311 = vld [vmem:[%s1 + $0x11c] sm:$0xf]
      %v312 = vld [vmem:[%s2] sm:$0x1]
      %v314 = vlaneseq
      %v315 = vshrl.u32 %v314, 7
      %v316 = vsub.s32 0, %v315
      %v317 = vrot.slane %v312, %v316
      %v343 = vunpack.c.l.b16 %v216
      %v344 = vunpack.c.h.b16 %v216
      %v345 = vunpack.c.l.b16 %v217
      %v346 = vunpack.c.h.b16 %v217
      %v347 = vunpack.c.l.b16 %v218
      %v348 = vunpack.c.l.b16 %v219
      %v349 = vunpack.c.h.b16 %v219
      %v350 = vunpack.c.l.b16 %v220
      %v351 = vunpack.c.h.b16 %v220
      %v352 = vunpack.c.l.b16 %v221
      %v353 = vunpack.c.l.b16 %v222
      %v354 = vunpack.c.h.b16 %v222
      %v355 = vunpack.c.l.b16 %v223
      %v356 = vunpack.c.h.b16 %v223
      %v357 = vunpack.c.l.b16 %v224
      %v358 = vunpack.c.l.b16 %v225
      %v359 = vunpack.c.h.b16 %v225
      %v360 = vunpack.c.l.b16 %v226
      %v361 = vunpack.c.h.b16 %v226
      %v362 = vunpack.c.l.b16 %v227
      %v363 = vunpack.c.l.b16 %v228
      %v364 = vunpack.c.h.b16 %v228
      %v365 = vunpack.c.l.b16 %v229
      %v366 = vunpack.c.h.b16 %v229
      %v367 = vunpack.c.l.b16 %v230
      %v368 = vunpack.c.l.b16 %v231
      %v369 = vunpack.c.h.b16 %v231
      %v370 = vunpack.c.l.b16 %v232
      %v371 = vunpack.c.h.b16 %v232
      %v372 = vunpack.c.l.b16 %v233
      %v373 = vunpack.c.l.b16 %v234
      %v374 = vunpack.c.h.b16 %v234
      %v375 = vunpack.c.l.b16 %v235
      %v376 = vunpack.c.h.b16 %v235
      %v377 = vunpack.c.l.b16 %v236
      %v378 = vunpack.c.l.b16 %v237
      %v379 = vunpack.c.h.b16 %v237
      %v380 = vunpack.c.l.b16 %v238
      %v381 = vunpack.c.h.b16 %v238
      %v382 = vunpack.c.l.b16 %v239
      %v383 = vpack.c.b16 %v348, %v343
      %v384 = vpack.c.b16 %v349, %v344
      %v385 = vpack.c.b16 %v350, %v345
      %v386 = vpack.c.b16 %v351, %v346
      %v387 = vpack.c.b16 %v352, %v347
      %v388 = vpack.c.b16 %v358, %v353
      %v389 = vpack.c.b16 %v359, %v354
      %v390 = vpack.c.b16 %v360, %v355
      %v391 = vpack.c.b16 %v361, %v356
      %v392 = vpack.c.b16 %v362, %v357
      %v393 = vpack.c.b16 %v368, %v363
      %v394 = vpack.c.b16 %v369, %v364
      %v395 = vpack.c.b16 %v370, %v365
      %v396 = vpack.c.b16 %v371, %v366
      %v397 = vpack.c.b16 %v372, %v367
      %v398 = vpack.c.b16 %v378, %v373
      %v399 = vpack.c.b16 %v379, %v374
      %v400 = vpack.c.b16 %v380, %v375
      %v401 = vpack.c.b16 %v381, %v376
      %v402 = vpack.c.b16 %v382, %v377
      %v491 = vunpack.c.l.b16 %v240
      %v492 = vunpack.c.l.b16 %v241
      %v493 = vunpack.c.l.b16 %v242
      %v494 = vunpack.c.l.b16 %v243
      %v495 = vunpack.c.l.b16 %v244
      %v496 = vunpack.c.l.b16 %v245
      %v497 = vunpack.c.l.b16 %v246
      %v498 = vunpack.c.l.b16 %v247
      %v499 = vunpack.c.l.b16 %v248
      %v500 = vunpack.c.l.b16 %v249
      %v501 = vunpack.c.l.b16 %v250
      %v502 = vunpack.c.l.b16 %v251
      %v503 = vunpack.c.l.b16 %v252
      %v504 = vunpack.c.l.b16 %v253
      %v505 = vunpack.c.l.b16 %v254
      %v506 = vunpack.c.l.b16 %v255
      %v507 = vunpack.c.l.b16 %v256
      %v508 = vunpack.c.l.b16 %v257
      %v509 = vunpack.c.l.b16 %v258
      %v510 = vunpack.c.l.b16 %v259
      %v511 = vunpack.c.l.b16 %v260
      %v512 = vunpack.c.l.b16 %v261
      %v513 = vunpack.c.l.b16 %v262
      %v514 = vunpack.c.l.b16 %v263
      %v515 = vunpack.c.l.b16 %v264
      %v516 = vunpack.c.l.b16 %v265
      %v517 = vunpack.c.l.b16 %v266
      %v518 = vunpack.c.l.b16 %v267
      %v519 = vunpack.c.l.b16 %v268
      %v520 = vunpack.c.l.b16 %v269
      %v521 = vunpack.c.l.b16 %v270
      %v522 = vunpack.c.l.b16 %v271
      %v523 = vunpack.c.l.b16 %v272
      %v524 = vunpack.c.l.b16 %v273
      %v525 = vunpack.c.l.b16 %v274
      %v526 = vunpack.c.l.b16 %v275
      %v527 = vunpack.c.l.b16 %v276
      %v528 = vunpack.c.l.b16 %v277
      %v529 = vunpack.c.l.b16 %v278
      %v530 = vunpack.c.l.b16 %v279
      %v531 = vunpack.c.l.b16 %v280
      %v532 = vunpack.c.l.b16 %v281
      %v533 = vunpack.c.l.b16 %v282
      %v534 = vunpack.c.l.b16 %v283
      %v535 = vunpack.c.l.b16 %v284
      %v536 = vunpack.c.l.b16 %v285
      %v537 = vunpack.c.l.b16 %v286
      %v538 = vunpack.c.l.b16 %v287
      %v539 = vunpack.c.l.b16 %v288
      %v540 = vunpack.c.l.b16 %v289
      %v541 = vunpack.c.l.b16 %v290
      %v542 = vunpack.c.l.b16 %v291
      %v543 = vunpack.c.l.b16 %v292
      %v544 = vunpack.c.l.b16 %v293
      %v545 = vunpack.c.l.b16 %v294
      %v546 = vunpack.c.l.b16 %v295
      %v547 = vunpack.c.l.b16 %v296
      %v548 = vunpack.c.l.b16 %v297
      %v549 = vunpack.c.l.b16 %v298
      %v550 = vunpack.c.l.b16 %v299
      %v551 = vunpack.c.l.b16 %v300
      %v552 = vunpack.c.l.b16 %v301
      %v553 = vunpack.c.l.b16 %v302
      %v554 = vunpack.c.l.b16 %v303
      %v555 = vunpack.c.l.b16 %v304
      %v556 = vunpack.c.l.b16 %v305
      %v557 = vunpack.c.l.b16 %v306
      %v558 = vunpack.c.l.b16 %v307
      %v559 = vunpack.c.l.b16 %v308
      %v560 = vunpack.c.l.b16 %v309
      %v561 = vunpack.c.l.b16 %v310
      %v562 = vunpack.c.l.b16 %v311
      %v563 = vpack.c.b16 %v492, %v491
      %v564 = vpack.c.b16 %v494, %v493
      %v565 = vpack.c.b16 %v496, %v495
      %v566 = vpack.c.b16 %v498, %v497
      %v567 = vpack.c.b16 %v500, %v499
      %v568 = vpack.c.b16 %v502, %v501
      %v569 = vpack.c.b16 %v504, %v503
      %v570 = vpack.c.b16 %v506, %v505
      %v571 = vpack.c.b16 %v508, %v507
      %v572 = vpack.c.b16 %v510, %v509
      %v573 = vpack.c.b16 %v512, %v511
      %v574 = vpack.c.b16 %v514, %v513
      %v575 = vpack.c.b16 %v516, %v515
      %v576 = vpack.c.b16 %v518, %v517
      %v577 = vpack.c.b16 %v520, %v519
      %v578 = vpack.c.b16 %v522, %v521
      %v579 = vpack.c.b16 %v524, %v523
      %v580 = vpack.c.b16 %v526, %v525
      %v581 = vpack.c.b16 %v528, %v527
      %v582 = vpack.c.b16 %v530, %v529
      %v583 = vpack.c.b16 %v532, %v531
      %v584 = vpack.c.b16 %v534, %v533
      %v585 = vpack.c.b16 %v536, %v535
      %v586 = vpack.c.b16 %v538, %v537
      %v587 = vpack.c.b16 %v540, %v539
      %v588 = vpack.c.b16 %v542, %v541
      %v589 = vpack.c.b16 %v544, %v543
      %v590 = vpack.c.b16 %v546, %v545
      %v591 = vpack.c.b16 %v548, %v547
      %v592 = vpack.c.b16 %v550, %v549
      %v593 = vpack.c.b16 %v552, %v551
      %v594 = vpack.c.b16 %v554, %v553
      %v595 = vpack.c.b16 %v556, %v555
      %v596 = vpack.c.b16 %v558, %v557
      %v597 = vpack.c.b16 %v560, %v559
      %v598 = vpack.c.b16 %v562, %v561
      %vm635 = vcmask 523264
      %v637 = vsel %vm635, %v387, 0
      %v640 = vsel %vm635, %v392, 0
      %v643 = vsel %vm635, %v397, 0
      %v646 = vsel %vm635, %v402, 0
      %648 = vmatprep.subr.bf16.mxu0 0
      %649 = vmatpush1.bf16.msra.mxu0 %v563
      %650 = vmatprep.subr.bf16.mxu0 0
      %651 = vmatpush1.bf16.msra.mxu0 %v564
      %652 = vmatprep.subr.bf16.mxu0 0
      %653 = vmatpush1.bf16.msra.mxu0 %v565
      %654 = vmatprep.subr.bf16.mxu0 0
      %655 = vmatpush1.bf16.msra.mxu0 %v566
      %656 = vmatprep.subr.bf16.mxu0 0
      %657 = vmatpush1.bf16.msra.mxu0 %v567
      %658 = vmatprep.subr.bf16.mxu0 0
      %659 = vmatpush1.bf16.msra.mxu0 %v568
      %660 = vmatprep.subr.bf16.mxu0 0
      %661 = vmatpush1.bf16.msra.mxu0 %v569
      %662 = vmatprep.subr.bf16.mxu0 0
      %663 = vmatpush1.bf16.msra.mxu0 %v570
      %664 = vmatprep.subr.bf16.mxu0 0
      %665 = vmatpush1.bf16.msra.mxu0 %v571
      %666 = vmatprep.subr.bf16.mxu0 0
      %667 = vmatpush1.bf16.msra.mxu0 %v572
      %668 = vmatprep.subr.bf16.mxu0 0
      %669 = vmatpush1.bf16.msra.mxu0 %v573
      %670 = vmatprep.subr.bf16.mxu0 0
      %671 = vmatpush1.bf16.msra.mxu0 %v574
      %672 = vmatprep.subr.bf16.mxu0 0
      %673 = vmatpush1.bf16.msra.mxu0 %v575
      %674 = vmatprep.subr.bf16.mxu0 0
      %675 = vmatpush1.bf16.msra.mxu0 %v576
      %676 = vmatprep.subr.bf16.mxu0 0
      %677 = vmatpush1.bf16.msra.mxu0 %v577
      %678 = vmatprep.subr.bf16.mxu0 0
      %679 = vmatpush1.bf16.msra.mxu0 %v578
      %680 = vmatprep.mubr.bf16.mxu0 %v384
      %681 = vmatmul.mubr.bf16.gmra.mrb[0].mxu0 %v383
      %v682 = vpop.f32.mrb[0].mxu0
      %v683 = vadd.f32 %v317, %v682
      %v684 = vpop.f32.mrb[0].mxu0
      %v685 = vpop.f32.mrb[0].mxu0
      %v686 = vadd.f32 %v317, %v685
      %v687 = vpop.f32.mrb[0].mxu0
      %688 = vmatprep.mubr.bf16.mxu0 %v389
      %689 = vmatmul.mubr.bf16.gmra.mrb[0].mxu0 %v388
      %v690 = vpop.f32.mrb[0].mxu0
      %v691 = vadd.f32 %v317, %v690
      %v692 = vpop.f32.mrb[0].mxu0
      %v693 = vpop.f32.mrb[0].mxu0
      %v694 = vadd.f32 %v317, %v693
      %v695 = vpop.f32.mrb[0].mxu0
      %696 = vmatprep.mubr.bf16.mxu0 %v394
      %697 = vmatmul.mubr.bf16.gmra.mrb[0].mxu0 %v393
      %v698 = vpop.f32.mrb[0].mxu0
      %v699 = vadd.f32 %v317, %v698
      %v700 = vpop.f32.mrb[0].mxu0
      %v701 = vpop.f32.mrb[0].mxu0
      %v702 = vadd.f32 %v317, %v701
      %v703 = vpop.f32.mrb[0].mxu0
      %704 = vmatprep.mubr.bf16.mxu0 %v399
      %705 = vmatmul.mubr.bf16.gmra.mrb[0].mxu0 %v398
      %v706 = vpop.f32.mrb[0].mxu0
      %v707 = vadd.f32 %v317, %v706
      %v708 = vpop.f32.mrb[0].mxu0
      %v709 = vpop.f32.mrb[0].mxu0
      %v710 = vadd.f32 %v317, %v709
      %v711 = vpop.f32.mrb[0].mxu0
      %712 = vdwg.mxu0
      %713 = vmatprep.subr.bf16.mxu0 0
      %714 = vmatpush1.bf16.msra.mxu0 %v579
      %715 = vmatprep.subr.bf16.mxu0 0
      %716 = vmatpush1.bf16.msra.mxu0 %v580
      %717 = vmatprep.subr.bf16.mxu0 0
      %718 = vmatpush1.bf16.msra.mxu0 %v581
      %719 = vmatprep.subr.bf16.mxu0 0
      %720 = vmatpush1.bf16.msra.mxu0 %v582
      %721 = vmatprep.subr.bf16.mxu0 0
      %722 = vmatpush1.bf16.msra.mxu0 %v583
      %723 = vmatprep.subr.bf16.mxu0 0
      %724 = vmatpush1.bf16.msra.mxu0 %v584
      %725 = vmatprep.subr.bf16.mxu0 0
      %726 = vmatpush1.bf16.msra.mxu0 %v585
      %727 = vmatprep.subr.bf16.mxu0 0
      %728 = vmatpush1.bf16.msra.mxu0 %v586
      %729 = vmatprep.subr.bf16.mxu0 0
      %730 = vmatpush1.bf16.msra.mxu0 %v587
      %731 = vmatprep.subr.bf16.mxu0 0
      %732 = vmatpush1.bf16.msra.mxu0 %v588
      %733 = vmatprep.subr.bf16.mxu0 0
      %734 = vmatpush1.bf16.msra.mxu0 %v589
      %735 = vmatprep.subr.bf16.mxu0 0
      %736 = vmatpush1.bf16.msra.mxu0 %v590
      %737 = vmatprep.subr.bf16.mxu0 0
      %738 = vmatpush1.bf16.msra.mxu0 %v591
      %739 = vmatprep.subr.bf16.mxu0 0
      %740 = vmatpush1.bf16.msra.mxu0 %v592
      %741 = vmatprep.subr.bf16.mxu0 0
      %742 = vmatpush1.bf16.msra.mxu0 %v593
      %743 = vmatprep.subr.bf16.mxu0 0
      %744 = vmatpush1.bf16.msra.mxu0 %v594
      %745 = vmatprep.mubr.bf16.mxu0 %v386
      %746 = vmatmul.mubr.bf16.gmra.mrb[0].mxu0 %v385
      %v747 = vpop.f32.mrb[0].mxu0
      %v748 = vadd.f32 %v683, %v747
      %v749 = vpop.f32.mrb[0].mxu0
      %v750 = vpop.f32.mrb[0].mxu0
      %v751 = vadd.f32 %v686, %v750
      %v752 = vpop.f32.mrb[0].mxu0
      %753 = vmatprep.mubr.bf16.mxu0 %v391
      %754 = vmatmul.mubr.bf16.gmra.mrb[0].mxu0 %v390
      %v755 = vpop.f32.mrb[0].mxu0
      %v756 = vadd.f32 %v691, %v755
      %v757 = vpop.f32.mrb[0].mxu0
      %v758 = vpop.f32.mrb[0].mxu0
      %v759 = vadd.f32 %v694, %v758
      %v760 = vpop.f32.mrb[0].mxu0
      %761 = vmatprep.mubr.bf16.mxu0 %v396
      %762 = vmatmul.mubr.bf16.gmra.mrb[0].mxu0 %v395
      %v763 = vpop.f32.mrb[0].mxu0
      %v764 = vadd.f32 %v699, %v763
      %v765 = vpop.f32.mrb[0].mxu0
      %v766 = vpop.f32.mrb[0].mxu0
      %v767 = vadd.f32 %v702, %v766
      %v768 = vpop.f32.mrb[0].mxu0
      %769 = vmatprep.mubr.bf16.mxu0 %v401
      %770 = vmatmul.mubr.bf16.gmra.mrb[0].mxu0 %v400
      %v771 = vpop.f32.mrb[0].mxu0
      %v772 = vadd.f32 %v707, %v771
      %v773 = vpop.f32.mrb[0].mxu0
      %v774 = vpop.f32.mrb[0].mxu0
      %v775 = vadd.f32 %v710, %v774
      %v776 = vpop.f32.mrb[0].mxu0
      %777 = vdwg.mxu0
      %778 = vmatprep.subr.bf16.mxu0 0
      %779 = vmatpush1.bf16.msra.mxu0 %v595
      %780 = vmatprep.subr.bf16.mxu0 0
      %781 = vmatpush1.bf16.msra.mxu0 %v596
      %782 = vmatprep.subr.bf16.mxu0 0
      %783 = vmatpush1.bf16.msra.mxu0 %v597
      %784 = vmatprep.subr.bf16.mxu0 0
      %785 = vmatpush1.bf16.msra.mxu0 %v598
      %786 = vmatprep.subr.bf16.mxu0 0
      %787 = vmatpush1.bf16.msra.mxu0 0
      %788 = vmatprep.subr.bf16.mxu0 0
      %789 = vmatpush1.bf16.msra.mxu0 0
      %790 = vmatprep.subr.bf16.mxu0 0
      %791 = vmatpush1.bf16.msra.mxu0 0
      %792 = vmatprep.subr.bf16.mxu0 0
      %793 = vmatpush1.bf16.msra.mxu0 0
      %794 = vmatprep.subr.bf16.mxu0 0
      %795 = vmatpush1.bf16.msra.mxu0 0
      %796 = vmatprep.subr.bf16.mxu0 0
      %797 = vmatpush1.bf16.msra.mxu0 0
      %798 = vmatprep.subr.bf16.mxu0 0
      %799 = vmatpush1.bf16.msra.mxu0 0
      %800 = vmatprep.subr.bf16.mxu0 0
      %801 = vmatpush1.bf16.msra.mxu0 0
      %802 = vmatprep.subr.bf16.mxu0 0
      %803 = vmatpush1.bf16.msra.mxu0 0
      %804 = vmatprep.subr.bf16.mxu0 0
      %805 = vmatpush1.bf16.msra.mxu0 0
      %806 = vmatprep.subr.bf16.mxu0 0
      %807 = vmatpush1.bf16.msra.mxu0 0
      %808 = vmatprep.subr.bf16.mxu0 0
      %809 = vmatpush1.bf16.msra.mxu0 0
      %810 = vmatprep.mubr.bf16.mxu0 0
      %811 = vmatmul.mubr.bf16.gmra.mrb[0].mxu0 %v637
      %v812 = vpop.f32.mrb[0].mxu0
      %v813 = vadd.f32 %v748, %v812
      %v814 = vpop.f32.mrb[0].mxu0
      %v815 = vpop.f32.mrb[0].mxu0
      %v816 = vadd.f32 %v751, %v815
      %v817 = vpop.f32.mrb[0].mxu0
      %818 = vmatprep.mubr.bf16.mxu0 0
      %819 = vmatmul.mubr.bf16.gmra.mrb[0].mxu0 %v640
      %v820 = vpop.f32.mrb[0].mxu0
      %v821 = vadd.f32 %v756, %v820
      %v822 = vpop.f32.mrb[0].mxu0
      %v823 = vpop.f32.mrb[0].mxu0
      %v824 = vadd.f32 %v759, %v823
      %v825 = vpop.f32.mrb[0].mxu0
      %826 = vmatprep.mubr.bf16.mxu0 0
      %827 = vmatmul.mubr.bf16.gmra.mrb[0].mxu0 %v643
      %v828 = vpop.f32.mrb[0].mxu0
      %v829 = vadd.f32 %v764, %v828
      %v830 = vpop.f32.mrb[0].mxu0
      %v831 = vpop.f32.mrb[0].mxu0
      %v832 = vadd.f32 %v767, %v831
      %v833 = vpop.f32.mrb[0].mxu0
      %834 = vmatprep.mubr.bf16.mxu0 0
      %835 = vmatmul.mubr.bf16.gmra.mrb[0].mxu0 %v646
      %v836 = vpop.f32.mrb[0].mxu0
      %v837 = vadd.f32 %v772, %v836
      %v838 = vpop.f32.mrb[0].mxu0
      %v839 = vpop.f32.mrb[0].mxu0
      %v840 = vadd.f32 %v775, %v839
      %v841 = vpop.f32.mrb[0].mxu0
      %842 = vdwg.mxu0
      %v843 = vadd.f32 %v813, %v816
      %v844 = vadd.f32 %v843, %v821
      %v845 = vadd.f32 %v844, %v824
      %v846 = vadd.f32 %v845, %v829
      %v847 = vadd.f32 %v846, %v832
      %v848 = vadd.f32 %v847, %v837
      %v849 = vadd.f32 %v848, %v840
      %v850 = vrot.slane %v849, 4
      %v851 = vadd.f32 %v849, %v850
      %v852 = vrot.slane %v851, 2
      %v853 = vadd.f32 %v851, %v852
      %v854 = vrot.slane %v853, 1
      %v855 = vadd.f32 %v853, %v854
      %v856 = vmul.f32 %v813, %v813
      %v857 = vmul.f32 %v816, %v816
      %v858 = vmul.f32 %v821, %v821
      %v859 = vmul.f32 %v824, %v824
      %v860 = vmul.f32 %v829, %v829
      %v861 = vmul.f32 %v832, %v832
      %v862 = vmul.f32 %v837, %v837
      %v863 = vmul.f32 %v840, %v840
      %v864 = vadd.f32 %v856, %v857
      %v865 = vadd.f32 %v864, %v858
      %v866 = vadd.f32 %v865, %v859
      %v867 = vadd.f32 %v866, %v860
      %v868 = vadd.f32 %v867, %v861
      %v869 = vadd.f32 %v868, %v862
      %v870 = vadd.f32 %v869, %v863
      %v871 = vrot.slane %v870, 4
      %v872 = vadd.f32 %v870, %v871
      %v873 = vrot.slane %v872, 2
      %v874 = vadd.f32 %v872, %v873
      %v875 = vrot.slane %v874, 1
      %v876 = vadd.f32 %v874, %v875
      %vm877 = vcmask 1040384
      %v878 = vsel %vm877, %v855, %v876
      %879 = vst [vmem:[%s214] sm:$0x3] %v878
      %v880 = vpack.c.bf16 %v816, %v813
      %v881 = vpack.c.bf16 %v824, %v821
      %v882 = vpack.c.bf16 %v832, %v829
      %v883 = vpack.c.bf16 %v840, %v837
      %v888 = vunpack.c.l.b16 %v880
      %v889 = vunpack.c.h.b16 %v880
      %v890 = vunpack.c.l.b16 %v881
      %v891 = vunpack.c.h.b16 %v881
      %v892 = vunpack.c.l.b16 %v882
      %v893 = vunpack.c.h.b16 %v882
      %v894 = vunpack.c.l.b16 %v883
      %v895 = vunpack.c.h.b16 %v883
      %v896 = vpack.c.b16 %v888, %v888
      %v897 = vpack.c.b16 %v889, %v889
      %v898 = vpack.c.b16 %v890, %v890
      %v899 = vpack.c.b16 %v891, %v891
      %v900 = vpack.c.b16 %v892, %v892
      %v901 = vpack.c.b16 %v893, %v893
      %v902 = vpack.c.b16 %v894, %v894
      %v903 = vpack.c.b16 %v895, %v895
      %912 = vst [vmem:[%s209] sm:$0xf] %v896
      %913 = vst [vmem:[%s209 + $0x4] sm:$0xf] %v897
      %914 = vst [vmem:[%s209 + $0x8] sm:$0xf] %v898
      %915 = vst [vmem:[%s209 + $0xc] sm:$0xf] %v899
      %916 = vst [vmem:[%s209 + $0x10] sm:$0xf] %v900
      %917 = vst [vmem:[%s209 + $0x14] sm:$0xf] %v901
      %918 = vst [vmem:[%s209 + $0x18] sm:$0xf] %v902
      %919 = vst [vmem:[%s209 + $0x1c] sm:$0xf] %v903
      %s920 = smul.u32 8, %s16
      %p921 = scmp.lt.s32.totalorder %s920, 15
      %s922 = scalar_select %p921, %s920, 15
      %s923 = smul.addr %s922, 4
      %s924 = scalar_lea.vmem %s3, %s923
      %p925 = scmp.lt.s32.totalorder %s16, 1
      %s926 = scalar_select %p925, %s16, 1
      %s927 = smul.addr %s926, 2
      %s928 = scalar_lea.vmem %s4, %s927
      // Predicated region
      $region33: #{stream_down_apply.10} parent=31 // pred_check
        %p929 = pneg %p102
      $region34: #{stream_down_apply.10} parent=31 // pred_check_branch
        %931 = sbr.rel (%p929) target = $region36
      $region35: #{stream_down_apply.10} parent=31 // pred_region
        %s932 = smul.u32 8, %s16
      $region36: #{stream_down_apply.10} parent=31 // pred_fallthru
        _
      // Predicated region
      $region37: #{stream_down_apply.10} parent=31 // pred_check
        %p933 = pneg %p128
      $region38: #{stream_down_apply.10} parent=31 // pred_check_branch
        %935 = sbr.rel (%p933) target = $region40
      $region39: #{stream_down_apply.10} parent=31 // pred_region
        _
      $region40: #{stream_down_apply.10} parent=31 // pred_fallthru
        _
    $region32: #{stream_down_apply.10} parent=5 // pred_fallthru
      _
    %p936 = scmp.le.s32.totalorder 2, %s11
    // Predicated region
    $region41: #{stream_down_apply.10} parent=5 // pred_check
      %p937 = pneg %p936
    $region42: #{stream_down_apply.10} parent=5 // pred_check_branch
      %939 = sbr.rel (%p937) target = $region44
    $region43: #{stream_down_apply.10} parent=5 // pred_region
      %s940 = ssub.s32 %s11, 2
      // Predicated region
      $region45: #{stream_down_apply.10} parent=43 // pred_check
        %p941 = pneg %p108
      $region46: #{stream_down_apply.10} parent=43 // pred_check_branch
        %943 = sbr.rel (%p941) target = $region48
      $region47: #{stream_down_apply.10} parent=43 // pred_region
        %s944 = smul.u32 8, %s17
        %p945 = scmp.lt.s32.totalorder %s944, 15
        %s946 = scalar_select %p945, %s944, 15
        %s947 = smul.addr %s946, 4
        %s948 = scalar_lea.vmem %s3, %s947
      $region48: #{stream_down_apply.10} parent=43 // pred_fallthru
        _
      // Predicated region
      $region49: #{stream_down_apply.10} parent=43 // pred_check
        %p949 = pneg %p134
      $region50: #{stream_down_apply.10} parent=43 // pred_check_branch
        %951 = sbr.rel (%p949) target = $region52
      $region51: #{stream_down_apply.10} parent=43 // pred_region
        %p952 = scmp.lt.s32.totalorder %s17, 1
        %s953 = scalar_select %p952, %s17, 1
        %s954 = smul.addr %s953, 2
        %s955 = scalar_lea.vmem %s4, %s954
      $region52: #{stream_down_apply.10} parent=43 // pred_fallthru
        _
    $region44: #{stream_down_apply.10} parent=5 // pred_fallthru
      _
  $region6: #{stream_down_apply.10} parent=0 // loop_footer
    %s15 = sadd.s32 1, %s11
  $region7: #{stream_down_apply.10} parent=0 // loop_footer_branch
    %10 = sbr.rel target = $region3
  $region8: #{stream_down_apply.10} parent=0 // loop_exit
    _

// kernel: stream_down_apply.11
$region0: #{stream_down_apply.11}
  #allocation0 [shape = 'u32[]', space=smem, size = 0x4, offset = 0x4, fixed_abs, tag = 'smem constant byte address 0x4 - core index']
  #allocation1 [shape = 'u32[144,128]{1,0:T(1,128)}', space=vmem, size = 0x12000, scoped, tag = 'internal scratch']
  %s0 = inlined_call_operand.vmem [shape: bf16[128,128], index: 0, kind: input, shape index: {}]
  %s1 = inlined_call_operand.vmem [shape: f32[1,128], index: 1, kind: input, shape index: {}]
  %s2 = inlined_call_operand.vmem [shape: f32[1,128], index: 2, kind: input, shape index: {}]
  %s3 = inlined_call_operand.hbm [shape: bf16[128,128], index: 3, kind: output, shape index: {}]
  %s4 = sld [smem:[#allocation0]]
  $region45: #{stream_down_apply.11} parent=0
    _
  %s6 = ssub.s32 1, %s4
  %s7 = scalar_select 0, %s6, %s4
  $region1: #{stream_down_apply.11} parent=0
    #allocation2 [shape = 'u8[32768]{0}', space=vmem, size = 0x8000, scoped, tag = 'output window, operand 0']
    #allocation3 [shape = 's32[2]{0}', space=sflag, size = 0x8, scoped, tag = 'scoped memory for stream_down_apply.11']
    %8 = vsyncpa [#allocation3], 0
    %s9 = scalar_lea.sflag [#allocation3], 1
    %10 = vsyncpa %s9, 0
    loop: start=0, step=1, limit=4
    $region2: #{stream_down_apply.11} parent=1 // loop_pre_header
      _
    $region3: #{stream_down_apply.11} parent=1 // loop_header
      %s12 = sphi 0, %s16
      %p13 = scmp.ge.s32.totalorder %s12, 4
      %s22 = sphi 0, %s24
      %s25 = sphi 0, %s22
      %s26 = sphi 0, %s25
      %s42 = sphi 0, %s26
      %s46 = sphi 0, %s46
      %s48 = sphi 0, %s46
      %s49 = sphi 0, %s48
      %s63 = sphi 0, %s49
      %s67 = sphi 0, %s67
      %s69 = sphi 0, %s67
      %s70 = sphi 0, %s69
      %s84 = sphi 0, %s70
      %s90 = sphi 0, %s92
      %s93 = sphi 0, %s90
      %s94 = sphi 0, %s93
      %s110 = sphi 0, %s94
    $region4: #{stream_down_apply.11} parent=1 // loop_header_branch
      %15 = sbr.rel (%p13) target = $region8
    $region5: #{stream_down_apply.11} parent=1 // loop_body
      %s17 = ssub.s32 %s12, 1
      %s18 = ssub.s32 %s12, 2
      %s19 = sadd.s32 %s12, 1
      %s20 = ssub.s32 %s12, %s19
      %p21 = scmp.eq.s32.totalorder %s20, 0
      %s23 = sadd.s32 %s22, 1
      %s24 = scalar_select %p21, %s22, %s23
      %p27 = pneg %p21
      %p28 = scmp.eq.s32.totalorder %s12, 1
      %p29 = por %p27, %p28
      %p30 = scmp.ne.s32.totalorder %s22, %s25
      %p31 = scmp.eq.s32.totalorder %s12, 0
      %p32 = por %p30, %p31
      %p33 = scmp.ne.s32.totalorder %s22, %s25
      %p34 = scmp.eq.s32.totalorder %s17, 1
      %p35 = por %p33, %p34
      %p36 = scmp.ne.s32.totalorder %s25, %s26
      %p37 = scmp.eq.s32.totalorder %s17, 0
      %p38 = por %p36, %p37
      %p39 = scmp.ne.s32.totalorder %s25, %s26
      %p40 = scmp.eq.s32.totalorder %s18, 1
      %p41 = por %p39, %p40
      %p43 = scmp.ne.s32.totalorder %s26, %s42
      %p44 = scmp.eq.s32.totalorder %s18, 0
      %p45 = por %p43, %p44
      %s47 = sadd.s32 %s46, 1
      %p50 = scmp.eq.s32.totalorder %s12, 1
      %p51 = scmp.ne.s32.totalorder %s46, %s48
      %p52 = scmp.eq.s32.totalorder %s12, 0
      %p53 = por %p51, %p52
      %p54 = scmp.ne.s32.totalorder %s46, %s48
      %p55 = scmp.eq.s32.totalorder %s17, 1
      %p56 = por %p54, %p55
      %p57 = scmp.ne.s32.totalorder %s48, %s49
      %p58 = scmp.eq.s32.totalorder %s17, 0
      %p59 = por %p57, %p58
      %p60 = scmp.ne.s32.totalorder %s48, %s49
      %p61 = scmp.eq.s32.totalorder %s18, 1
      %p62 = por %p60, %p61
      %p64 = scmp.ne.s32.totalorder %s49, %s63
      %p65 = scmp.eq.s32.totalorder %s18, 0
      %p66 = por %p64, %p65
      %s68 = sadd.s32 %s67, 1
      %p71 = scmp.eq.s32.totalorder %s12, 1
      %p72 = scmp.ne.s32.totalorder %s67, %s69
      %p73 = scmp.eq.s32.totalorder %s12, 0
      %p74 = por %p72, %p73
      %p75 = scmp.ne.s32.totalorder %s67, %s69
      %p76 = scmp.eq.s32.totalorder %s17, 1
      %p77 = por %p75, %p76
      %p78 = scmp.ne.s32.totalorder %s69, %s70
      %p79 = scmp.eq.s32.totalorder %s17, 0
      %p80 = por %p78, %p79
      %p81 = scmp.ne.s32.totalorder %s69, %s70
      %p82 = scmp.eq.s32.totalorder %s18, 1
      %p83 = por %p81, %p82
      %p85 = scmp.ne.s32.totalorder %s70, %s84
      %p86 = scmp.eq.s32.totalorder %s18, 0
      %p87 = por %p85, %p86
      %s88 = ssub.s32 %s12, %s19
      %p89 = scmp.eq.s32.totalorder %s88, 0
      %s91 = sadd.s32 %s90, 1
      %s92 = scalar_select %p89, %s90, %s91
      %p95 = pneg %p89
      %p96 = scmp.eq.s32.totalorder %s12, 1
      %p97 = por %p95, %p96
      %p98 = scmp.ne.s32.totalorder %s90, %s93
      %p99 = scmp.eq.s32.totalorder %s12, 0
      %p100 = por %p98, %p99
      %p101 = scmp.ne.s32.totalorder %s90, %s93
      %p102 = scmp.eq.s32.totalorder %s17, 1
      %p103 = por %p101, %p102
      %p104 = scmp.ne.s32.totalorder %s93, %s94
      %p105 = scmp.eq.s32.totalorder %s17, 0
      %p106 = por %p104, %p105
      %p107 = scmp.ne.s32.totalorder %s93, %s94
      %p108 = scmp.eq.s32.totalorder %s18, 1
      %p109 = por %p107, %p108
      %p111 = scmp.ne.s32.totalorder %s94, %s110
      %p112 = scmp.eq.s32.totalorder %s18, 0
      %p113 = por %p111, %p112
      %p114 = scmp.le.s32.totalorder 1, %s12
      %p115 = scmp.lt.s32.totalorder %s12, 3
      %p116 = pnand %p114, %p115
      %p117 = pneg %p116
      // Predicated region
      $region9: #{stream_down_apply.11} parent=5 // pred_check
        _
      $region10: #{stream_down_apply.11} parent=5 // pred_check_branch
        %119 = sbr.rel (%p116) target = $region12
      $region11: #{stream_down_apply.11} parent=5 // pred_region
        %s120 = ssub.s32 %s12, 1
        // Predicated region
        $region13: #{stream_down_apply.11} parent=11 // pred_check
          %p121 = pneg %p59
        $region14: #{stream_down_apply.11} parent=11 // pred_check_branch
          %123 = sbr.rel (%p121) target = $region16
        $region15: #{stream_down_apply.11} parent=11 // pred_region
          _
        $region16: #{stream_down_apply.11} parent=11 // pred_fallthru
          _
        // Predicated region
        $region17: #{stream_down_apply.11} parent=11 // pred_check
          %p124 = pneg %p80
        $region18: #{stream_down_apply.11} parent=11 // pred_check_branch
          %126 = sbr.rel (%p124) target = $region20
        $region19: #{stream_down_apply.11} parent=11 // pred_region
          _
        $region20: #{stream_down_apply.11} parent=11 // pred_fallthru
          _
      $region12: #{stream_down_apply.11} parent=5 // pred_fallthru
        _
      %p127 = scmp.lt.s32.totalorder %s12, 2
      // Predicated region
      $region21: #{stream_down_apply.11} parent=5 // pred_check
        %p128 = pneg %p127
      $region22: #{stream_down_apply.11} parent=5 // pred_check_branch
        %130 = sbr.rel (%p128) target = $region24
      $region23: #{stream_down_apply.11} parent=5 // pred_region
        // Predicated region
        $region25: #{stream_down_apply.11} parent=23 // pred_check
          %p131 = pneg %p32
        $region26: #{stream_down_apply.11} parent=23 // pred_check_branch
          %133 = sbr.rel (%p131) target = $region28
        $region27: #{stream_down_apply.11} parent=23 // pred_region
          %s134 = smul.u32 8, %s12
          %p135 = scmp.lt.s32.totalorder %s134, 15
          %s136 = scalar_select %p135, %s134, 15
          %s137 = smul.addr %s136, 4
          %s138 = scalar_lea.vmem %s0, %s137
          %s139 = smul.u32 8, %s12
        $region28: #{stream_down_apply.11} parent=23 // pred_fallthru
          _
      $region24: #{stream_down_apply.11} parent=5 // pred_fallthru
        _
      %p140 = scmp.le.s32.totalorder 1, %s12
      %p141 = scmp.lt.s32.totalorder %s12, 3
      %p142 = pnand %p140, %p141
      %p143 = pneg %p142
      // Predicated region
      $region29: #{stream_down_apply.11} parent=5 // pred_check
        _
      $region30: #{stream_down_apply.11} parent=5 // pred_check_branch
        %145 = sbr.rel (%p142) target = $region32
      $region31: #{stream_down_apply.11} parent=5 // pred_region
        %s146 = ssub.s32 %s12, 1
        %s147 = smul.u32 8, %s17
        %p148 = scmp.lt.s32.totalorder %s147, 15
        %s149 = scalar_select %p148, %s147, 15
        %s150 = smul.addr %s149, 4
        %s151 = scalar_lea.vmem %s0, %s150
        %p152 = pneg %p38
        %p153 = pneg %p35
        %p154 = pneg %p59
        %p155 = pneg %p56
        %p156 = pneg %p80
        %p157 = pneg %p77
        %p158 = pneg %p106
        %p159 = pneg %p103
        %s160 = sand.u32 %s93, 1
        %s161 = scalar_lea.sflag [#allocation3], %s160
        %s162 = sand.u32 %s93, 1
        %s163 = smul.addr %s162, 32
        %s164 = scalar_lea.vmem [#allocation2], %s163
        %s165 = smul.u32 8, %s17
        %p166 = scmp.lt.s32.totalorder %s165, 15
        %s167 = scalar_select %p166, %s165, 15
        %s168 = smul.addr %s167, 4
        %s169 = scalar_lea.vmem %s0, %s168
        %s170 = smul.u32 8, %s17
        %s171 = smul.u32 8, %s17
        %v172 = vld [vmem:[%s169] sm:$0xf]
        %v173 = vld [vmem:[%s169 + $0x4] sm:$0xf]
        %v174 = vld [vmem:[%s169 + $0x8] sm:$0xf]
        %v175 = vld [vmem:[%s169 + $0xc] sm:$0xf]
        %v176 = vld [vmem:[%s169 + $0x10] sm:$0xf]
        %v177 = vld [vmem:[%s169 + $0x14] sm:$0xf]
        %v178 = vld [vmem:[%s169 + $0x18] sm:$0xf]
        %v179 = vld [vmem:[%s169 + $0x1c] sm:$0xf]
        %v180 = vunpack.c.l.bf16 %v172
        %v181 = vunpack.c.l.bf16 %v173
        %v182 = vunpack.c.l.bf16 %v174
        %v183 = vunpack.c.l.bf16 %v175
        %v184 = vunpack.c.l.bf16 %v176
        %v185 = vunpack.c.l.bf16 %v177
        %v186 = vunpack.c.l.bf16 %v178
        %v187 = vunpack.c.l.bf16 %v179
        %v188 = vld [vmem:[%s1] sm:$0x1]
        %v190 = vlaneseq
        %v191 = vshrl.u32 %v190, 7
        %v192 = vsub.s32 0, %v191
        %v193 = vrot.slane %v188, %v192
        %v195 = vmul.f32 %v180, %v193
        %v196 = vmul.f32 %v181, %v193
        %v197 = vmul.f32 %v182, %v193
        %v198 = vmul.f32 %v183, %v193
        %v199 = vmul.f32 %v184, %v193
        %v200 = vmul.f32 %v185, %v193
        %v201 = vmul.f32 %v186, %v193
        %v202 = vmul.f32 %v187, %v193
        %v203 = vld [vmem:[%s2] sm:$0x1]
        %v205 = vlaneseq
        %v206 = vshrl.u32 %v205, 7
        %v207 = vsub.s32 0, %v206
        %v208 = vrot.slane %v203, %v207
        %v210 = vadd.f32 %v195, %v208
        %v211 = vadd.f32 %v196, %v208
        %v212 = vadd.f32 %v197, %v208
        %v213 = vadd.f32 %v198, %v208
        %v214 = vadd.f32 %v199, %v208
        %v215 = vadd.f32 %v200, %v208
        %v216 = vadd.f32 %v201, %v208
        %v217 = vadd.f32 %v202, %v208
        %v218 = vmax.f32 %v210, 0.0
        %v219 = vmax.f32 %v211, 0.0
        %v220 = vmax.f32 %v212, 0.0
        %v221 = vmax.f32 %v213, 0.0
        %v222 = vmax.f32 %v214, 0.0
        %v223 = vmax.f32 %v215, 0.0
        %v224 = vmax.f32 %v216, 0.0
        %v225 = vmax.f32 %v217, 0.0
        %v226 = vpack.c.bf16 %v219, %v218
        %v227 = vpack.c.bf16 %v221, %v220
        %v228 = vpack.c.bf16 %v223, %v222
        %v229 = vpack.c.bf16 %v225, %v224
        %v234 = vunpack.c.l.b16 %v226
        %v235 = vunpack.c.h.b16 %v226
        %v236 = vunpack.c.l.b16 %v227
        %v237 = vunpack.c.h.b16 %v227
        %v238 = vunpack.c.l.b16 %v228
        %v239 = vunpack.c.h.b16 %v228
        %v240 = vunpack.c.l.b16 %v229
        %v241 = vunpack.c.h.b16 %v229
        %v242 = vpack.c.b16 %v234, %v234
        %v243 = vpack.c.b16 %v235, %v235
        %v244 = vpack.c.b16 %v236, %v236
        %v245 = vpack.c.b16 %v237, %v237
        %v246 = vpack.c.b16 %v238, %v238
        %v247 = vpack.c.b16 %v239, %v239
        %v248 = vpack.c.b16 %v240, %v240
        %v249 = vpack.c.b16 %v241, %v241
        %258 = vst [vmem:[%s164] sm:$0xf] %v242
        %259 = vst [vmem:[%s164 + $0x4] sm:$0xf] %v243
        %260 = vst [vmem:[%s164 + $0x8] sm:$0xf] %v244
        %261 = vst [vmem:[%s164 + $0xc] sm:$0xf] %v245
        %262 = vst [vmem:[%s164 + $0x10] sm:$0xf] %v246
        %263 = vst [vmem:[%s164 + $0x14] sm:$0xf] %v247
        %264 = vst [vmem:[%s164 + $0x18] sm:$0xf] %v248
        %265 = vst [vmem:[%s164 + $0x1c] sm:$0xf] %v249
        %s266 = sand.u32 %s93, 1
        %s267 = scalar_lea.sflag [#allocation3], %s266
        %s268 = sand.u32 %s93, 1
        %s269 = smul.addr %s268, 32
        %s270 = scalar_lea.vmem [#allocation2], %s269
        // Predicated region
        $region33: #{stream_down_apply.11} parent=31 // pred_check
          %p271 = pneg %p103
        $region34: #{stream_down_apply.11} parent=31 // pred_check_branch
          %273 = sbr.rel (%p271) target = $region36
        $region35: #{stream_down_apply.11} parent=31 // pred_region
          %s274 = smul.u32 8, %s17
          %s276 = ssub.s32 512, 512
          %277 = vsyncadd %s267, %s276
          %s278 = smul.addr %s274, 64
          %s279 = scalar_lea.hbm %s3, %s278
          %s280 = sshll.u32 %s270, 4
          %s281 = int_to_ptr.vmem [resolvable:$true] %s280
          %286 = dma.vmem_to_hbm [thread:$0]  %s281, 512, %s279, %s267, 64, 64, 4
        $region36: #{stream_down_apply.11} parent=31 // pred_fallthru
          _
      $region32: #{stream_down_apply.11} parent=5 // pred_fallthru
        _
      %p287 = scmp.le.s32.totalorder 2, %s12
      // Predicated region
      $region37: #{stream_down_apply.11} parent=5 // pred_check
        %p288 = pneg %p287
      $region38: #{stream_down_apply.11} parent=5 // pred_check_branch
        %290 = sbr.rel (%p288) target = $region40
      $region39: #{stream_down_apply.11} parent=5 // pred_region
        %s291 = ssub.s32 %s12, 2
        // Predicated region
        $region41: #{stream_down_apply.11} parent=39 // pred_check
          %p292 = pneg %p109
        $region42: #{stream_down_apply.11} parent=39 // pred_check_branch
          %294 = sbr.rel (%p292) target = $region44
        $region43: #{stream_down_apply.11} parent=39 // pred_region
          %s295 = sand.u32 %s94, 1
          %s296 = scalar_lea.sflag [#allocation3], %s295
          %s297 = sand.u32 %s94, 1
          %s298 = smul.addr %s297, 32
          %s299 = scalar_lea.vmem [#allocation2], %s298
          %300 = dma.done %s296, 512
        $region44: #{stream_down_apply.11} parent=39 // pred_fallthru
          _
      $region40: #{stream_down_apply.11} parent=5 // pred_fallthru
        _
    $region6: #{stream_down_apply.11} parent=1 // loop_footer
      %s16 = sadd.s32 1, %s12
    $region7: #{stream_down_apply.11} parent=1 // loop_footer_branch
      %11 = sbr.rel target = $region3
    $region8: #{stream_down_apply.11} parent=1 // loop_exit
      _
    %301 = vsyncpa [#allocation3], 1
    %s302 = scalar_lea.sflag [#allocation3], 1
    %303 = vsyncpa %s302, 1

</llo_original>
